<compile_context>
chip_gen: v7x
topology: tpu7x:2x2x1
jax: 0.10.0
libtpu: 0.0.40
codegen_flags: <defaults>
</compile_context>

<pallas_src>
import functools

import jax
import jax.numpy as jnp
from jax.experimental import pallas as pl
from jax.experimental.pallas import tpu as pltpu


# ----------------------------------------------------------------------------
# Kernel A: conv1+bn1+relu -> conv2(3x3)+bn2+relu -> conv3+bn3, + channel sums
# ----------------------------------------------------------------------------
def _conv_stack_kernel(
    x_top_ref, x_cur_ref, x_bot_ref,
    w1_ref, b1_ref, w2_ref, b2_ref, w3_ref, b3_ref,
    out3_ref, pooled_ref,
    out1_ref,                      # VMEM scratch: (th+2, width+2, p) bf16
    *, th, width, p, c4):
    i = pl.program_id(1)
    last = pl.num_programs(1) - 1

    # --- conv1 (1x1) + bn1 + relu on the row tile plus a 1-row halo each side
    x_full = jnp.concatenate(
        [x_top_ref[0], x_cur_ref[0], x_bot_ref[0]], axis=0)          # (th+2,W,C4) bf16
    a1 = jnp.dot(x_full.reshape((th + 2) * width, c4), w1_ref[...],
                 preferred_element_type=jnp.float32)
    o1 = jnp.maximum(a1 + b1_ref[...], 0.0).reshape(th + 2, width, p)

    # out1 scratch holds conv2's zero padding explicitly: column 0 / width+1
    # are the zero pad in W; halo rows are zeroed at the image boundary.
    top_keep = (i > 0).astype(jnp.float32)
    bot_keep = (i < last).astype(jnp.float32)
    out1_ref[...] = jnp.zeros_like(out1_ref)
    out1_ref[0:1, 1:width + 1, :] = (o1[0:1] * top_keep).astype(out1_ref.dtype)
    out1_ref[1:th + 1, 1:width + 1, :] = o1[1:th + 1].astype(out1_ref.dtype)
    out1_ref[th + 1:th + 2, 1:width + 1, :] = (
        o1[th + 1:th + 2] * bot_keep).astype(out1_ref.dtype)

    # --- conv2 (3x3, pad=1) + bn2 + relu as 9 shifted matmuls over padded out1
    acc2 = jnp.zeros((th * width, p), jnp.float32)
    for dy in range(3):
        for dx in range(3):
            patch = out1_ref[dy:dy + th, dx:dx + width, :].reshape(th * width, p)
            acc2 = acc2 + jnp.dot(patch, w2_ref[dy * 3 + dx],
                                  preferred_element_type=jnp.float32)
    o2 = jnp.maximum(acc2 + b2_ref[...], 0.0).astype(jnp.bfloat16)

    # --- conv3 (1x1) + bn3 (no relu)
    o3 = jnp.dot(o2, w3_ref[...], preferred_element_type=jnp.float32) + b3_ref[...]
    out3_ref[...] = o3.reshape(1, th, width, c4).astype(out3_ref.dtype)

    # --- accumulate channel sums for ECA's global average pool (f32)
    @pl.when(i == 0)
    def _():
        pooled_ref[...] = jnp.zeros_like(pooled_ref)
    pooled_ref[0] += jnp.sum(o3, axis=0, keepdims=True)


def _conv_stack(x_bf16, params, *, th):
    N, H, W, C4 = x_bf16.shape
    P = params["w1"].shape[1]
    n_row = H // th
    kernel = functools.partial(_conv_stack_kernel, th=th, width=W, p=P, c4=C4)
    flops = int(2 * N * H * W * (C4 * P + 9 * P * P + P * C4))
    bytes_acc = int(N * H * W * C4 * (2 + 2) + N * C4 * 4
                    + (C4 * P + 9 * P * P + P * C4) * 2 + (2 * P + C4) * 4)
    return pl.pallas_call(
        kernel,
        out_shape=(
            jax.ShapeDtypeStruct((N, H, W, C4), jnp.bfloat16),   # conv3+bn3 output
            jax.ShapeDtypeStruct((N, 1, C4), jnp.float32),       # channel sums
        ),
        grid=(N, n_row),
        in_specs=[
            # top halo row (clamped; zeroed in-kernel when i == 0)
            pl.BlockSpec((1, 1, W, C4),
                         lambda n, i: (n, jnp.maximum(i * th - 1, 0), 0, 0)),
            # current row tile
            pl.BlockSpec((1, th, W, C4), lambda n, i: (n, i, 0, 0)),
            # bottom halo row (clamped; zeroed in-kernel when i == last)
            pl.BlockSpec((1, 1, W, C4),
                         lambda n, i: (n, jnp.minimum((i + 1) * th, H - 1), 0, 0)),
            pl.BlockSpec((C4, P), lambda n, i: (0, 0)),          # w1 (scale folded)
            pl.BlockSpec((1, P), lambda n, i: (0, 0)),           # b1
            pl.BlockSpec((9, P, P), lambda n, i: (0, 0, 0)),     # w2 (scale folded)
            pl.BlockSpec((1, P), lambda n, i: (0, 0)),           # b2
            pl.BlockSpec((P, C4), lambda n, i: (0, 0)),          # w3 (scale folded)
            pl.BlockSpec((1, C4), lambda n, i: (0, 0)),          # b3
        ],
        out_specs=(
            pl.BlockSpec((1, th, W, C4), lambda n, i: (n, i, 0, 0)),
            pl.BlockSpec((1, 1, C4), lambda n, i: (n, 0, 0)),    # resident over rows
        ),
        scratch_shapes=[pltpu.VMEM((th + 2, W + 2, P), jnp.bfloat16)],
        compiler_params=pltpu.CompilerParams(
            dimension_semantics=("parallel", "arbitrary")),
        cost_estimate=pl.CostEstimate(flops=flops, transcendentals=0,
                                      bytes_accessed=bytes_acc),
    )(x_bf16, x_bf16, x_bf16,
      params["w1"], params["b1"], params["w2"], params["b2"],
      params["w3"], params["b3"])


# ----------------------------------------------------------------------------
# Kernel B: ECA (banded CxC matmul + sigmoid) gate + residual add + final ReLU
# ----------------------------------------------------------------------------
def _eca_residual_kernel(o3_ref, res_ref, pooled_ref, ecam_ref, o_ref, *, inv_hw):
    pooled = pooled_ref[0] * inv_hw                       # (1, C4) global avg pool
    att = jax.nn.sigmoid(jnp.dot(pooled, ecam_ref[...],
                                 preferred_element_type=jnp.float32))   # (1, C4)
    y = o3_ref[...].astype(jnp.float32) * att + res_ref[...]
    o_ref[...] = jnp.maximum(y, 0.0)


def _eca_residual(out3_bf16, x_f32, pooled_sum, eca_mat, *, tb):
    N, H, W, C4 = out3_bf16.shape
    n_row = H // tb
    kernel = functools.partial(_eca_residual_kernel, inv_hw=1.0 / float(H * W))
    return pl.pallas_call(
        kernel,
        out_shape=jax.ShapeDtypeStruct((N, H, W, C4), jnp.float32),
        grid=(N, n_row),
        in_specs=[
            pl.BlockSpec((1, tb, W, C4), lambda n, j: (n, j, 0, 0)),   # conv3+bn3
            pl.BlockSpec((1, tb, W, C4), lambda n, j: (n, j, 0, 0)),   # residual x
            pl.BlockSpec((1, 1, C4), lambda n, j: (n, 0, 0)),          # channel sums
            pl.BlockSpec((C4, C4), lambda n, j: (0, 0)),               # banded ECA mat
        ],
        out_specs=pl.BlockSpec((1, tb, W, C4), lambda n, j: (n, j, 0, 0)),
        compiler_params=pltpu.CompilerParams(
            dimension_semantics=("parallel", "parallel")),
        cost_estimate=pl.CostEstimate(
            flops=int(3 * N * H * W * C4 + 2 * N * C4 * C4),
            transcendentals=int(N * C4),
            bytes_accessed=int(N * H * W * C4 * (2 + 4 + 4) + C4 * C4 * 4)),
    )(out3_bf16, x_f32, pooled_sum, eca_mat)


# ----------------------------------------------------------------------------
# Parameter init (deterministic, synthetic) — shapes follow Bottleneck.__init__
# BN scales are folded into the conv weights; ECA's k=3 channel conv is folded
# into an equivalent banded (C4, C4) matrix.
# ----------------------------------------------------------------------------
def init_params(key, inplanes, planes, k_size=3):
    ks = jax.random.split(key, 8)
    eps = 1e-5
    C4 = 4 * planes
    # PyTorch conv layouts: conv1 (P,Cin,1,1), conv2 (P,P,3,3), conv3 (4P,P,1,1),
    # eca conv1d (1,1,k).
    w1 = jax.random.normal(ks[0], (planes, inplanes, 1, 1), jnp.float32) * 0.1
    w2 = jax.random.normal(ks[1], (planes, planes, 3, 3), jnp.float32) * 0.1
    w3 = jax.random.normal(ks[2], (4 * planes, planes, 1, 1), jnp.float32) * 0.1
    eca_w = jax.random.normal(ks[3], (1, 1, k_size), jnp.float32) * 0.5

    def bn(k, c):
        gamma = 1.0 + 0.1 * jax.random.normal(k, (c,), jnp.float32)
        beta = 0.1 * jax.random.normal(jax.random.fold_in(k, 1), (c,), jnp.float32)
        running_mean = jnp.zeros((c,), jnp.float32)
        running_var = jnp.ones((c,), jnp.float32)
        scale = gamma / jnp.sqrt(running_var + eps)
        bias = beta - running_mean * scale
        return scale, bias

    s1, b1 = bn(ks[4], planes)
    s2, b2 = bn(ks[5], planes)
    s3, b3 = bn(ks[6], C4)

    # Fold BN scale into the conv weights along the output-channel axis.
    w1m = (jnp.transpose(w1[:, :, 0, 0]) * s1[None, :]).astype(jnp.bfloat16)     # (Cin, P)
    w2_hwio = jnp.transpose(w2, (2, 3, 1, 0))                                    # (3,3,Cin,Cout)
    w2m = (w2_hwio * s2[None, None, None, :]).reshape(9, planes, planes).astype(jnp.bfloat16)
    w3m = (jnp.transpose(w3[:, :, 0, 0]) * s3[None, :]).astype(jnp.bfloat16)     # (P, 4P)

    # ECA k-tap channel conv as banded matrix: att = pooled @ eca_mat
    wk = eca_w[0, 0]
    pad = (k_size - 1) // 2
    eca_mat = sum(wk[j] * jnp.eye(C4, k=pad - j) for j in range(k_size))
    eca_mat = eca_mat.astype(jnp.float32)

    return {
        "w1": w1m, "b1": b1.reshape(1, planes).astype(jnp.float32),
        "w2": w2m, "b2": b2.reshape(1, planes).astype(jnp.float32),
        "w3": w3m, "b3": b3.reshape(1, C4).astype(jnp.float32),
        "eca_mat": eca_mat,
    }


def _pick_row_tile(h, cap):
    t = max(1, min(h, cap))
    while h % t:
        t -= 1
    return t


# ----------------------------------------------------------------------------
# Bottleneck forward (two fused Pallas kernels)
# ----------------------------------------------------------------------------
def bottleneck_forward(x_nhwc, params, *, row_tile_a=8, row_tile_b=16):
    N, H, W, C4 = x_nhwc.shape
    P = params["w1"].shape[1]
    assert C4 == 4 * P, "downsample=None requires inplanes == 4*planes"
    th = _pick_row_tile(H, row_tile_a)
    tb = _pick_row_tile(H, row_tile_b)
    out3, pooled_sum = _conv_stack(x_nhwc.astype(jnp.bfloat16), params, th=th)
    return _eca_residual(out3, x_nhwc, pooled_sum, params["eca_mat"], tb=tb)


# ----------------------------------------------------------------------------
# Pure-JAX reference (same folded parameters, f32 everywhere)
# ----------------------------------------------------------------------------
def _reference_forward(x, params):
    N, H, W, C4 = x.shape
    P = params["w1"].shape[1]
    w1 = params["w1"].astype(jnp.float32)
    w2 = params["w2"].astype(jnp.float32)
    w3 = params["w3"].astype(jnp.float32)
    o1 = jnp.maximum(jnp.einsum("nhwc,cp->nhwp", x, w1) + params["b1"], 0.0)
    o1p = jnp.pad(o1, ((0, 0), (1, 1), (1, 1), (0, 0)))
    acc = jnp.zeros((N, H, W, P), jnp.float32)
    for dy in range(3):
        for dx in range(3):
            acc = acc + jnp.einsum("nhwc,cp->nhwp",
                                   o1p[:, dy:dy + H, dx:dx + W, :], w2[dy * 3 + dx])
    o2 = jnp.maximum(acc + params["b2"], 0.0)
    o3 = jnp.einsum("nhwc,cp->nhwp", o2, w3) + params["b3"]
    pooled = jnp.mean(o3, axis=(1, 2))                        # (N, C4)
    att = jax.nn.sigmoid(pooled @ params["eca_mat"])          # (N, C4)
    return jnp.maximum(o3 * att[:, None, None, :] + x, 0.0)


if __name__ == "__main__":
    N, H, W = 2, 16, 16
    planes = 4
    inplanes = 4 * planes   # identity residual path (downsample=None)

    key = jax.random.PRNGKey(0)
    kx, kp = jax.random.split(key)
    x_nhwc = jax.random.normal(kx, (N, H, W, inplanes), jnp.float32)
    params = init_params(kp, inplanes, planes, k_size=3)

    out = bottleneck_forward(x_nhwc, params)
    out = jax.block_until_ready(out)

    ref = _reference_forward(x_nhwc, params)
    assert out.shape == (N, H, W, 4 * planes)
    assert bool(jnp.all(out >= 0.0))                      # final ReLU
    max_err = float(jnp.max(jnp.abs(out - ref)))
    assert bool(jnp.allclose(out, ref, atol=5e-2, rtol=5e-2)), max_err
    print("KERNEL_OK")
</pallas_src>

<mosaic_0001>
module attributes {stable_mosaic.version = 11 : i64} {
  func.func @_conv_stack_kernel(%arg0: i32, %arg1: i32, %arg2: memref<1x1x16x16xbf16, #tpu.memory_space<vmem>>, %arg3: memref<1x8x16x16xbf16, #tpu.memory_space<vmem>>, %arg4: memref<1x1x16x16xbf16, #tpu.memory_space<vmem>>, %arg5: memref<16x4xbf16, #tpu.memory_space<vmem>>, %arg6: memref<1x4xf32, #tpu.memory_space<vmem>>, %arg7: memref<9x4x4xbf16, #tpu.memory_space<vmem>>, %arg8: memref<1x4xf32, #tpu.memory_space<vmem>>, %arg9: memref<4x16xbf16, #tpu.memory_space<vmem>>, %arg10: memref<1x16xf32, #tpu.memory_space<vmem>>, %arg11: memref<1x8x16x16xbf16, #tpu.memory_space<vmem>>, %arg12: memref<1x1x16xf32, #tpu.memory_space<vmem>>, %arg13: memref<10x18x4xbf16, #tpu.memory_space<vmem>>) attributes {dimension_semantics = [#tpu.dimension_semantics<parallel>, #tpu.dimension_semantics<arbitrary>], iteration_bounds = array<i64: 2, 2>, scalar_prefetch = 0 : i64, scratch_operands = 1 : i64, tpu.core_type = #tpu.core_type<tc>, window_params = [{transform_indices = @transform_0, window_bounds = array<i64: 1, 1, 16, 16>}, {transform_indices = @transform_1, window_bounds = array<i64: 1, 8, 16, 16>}, {transform_indices = @transform_2, window_bounds = array<i64: 1, 1, 16, 16>}, {pipeline_mode = #tpu.pipeline_mode<synchronous>, transform_indices = @transform_3, window_bounds = array<i64: 16, 4>}, {pipeline_mode = #tpu.pipeline_mode<synchronous>, transform_indices = @transform_4, window_bounds = array<i64: 1, 4>}, {pipeline_mode = #tpu.pipeline_mode<synchronous>, transform_indices = @transform_5, window_bounds = array<i64: 9, 4, 4>}, {pipeline_mode = #tpu.pipeline_mode<synchronous>, transform_indices = @transform_6, window_bounds = array<i64: 1, 4>}, {pipeline_mode = #tpu.pipeline_mode<synchronous>, transform_indices = @transform_7, window_bounds = array<i64: 4, 16>}, {pipeline_mode = #tpu.pipeline_mode<synchronous>, transform_indices = @transform_8, window_bounds = array<i64: 1, 16>}, {transform_indices = @transform_9, window_bounds = array<i64: 1, 8, 16, 16>}, {transform_indices = @transform_10, window_bounds = array<i64: 1, 1, 16>}]} {
    %c0 = arith.constant 0 : index
    %c0_0 = arith.constant 0 : index
    %c0_1 = arith.constant 0 : index
    %c0_2 = arith.constant 0 : index
    %0 = vector.load %arg2[%c0, %c0_0, %c0_1, %c0_2] : memref<1x1x16x16xbf16, #tpu.memory_space<vmem>>, vector<1x1x16x16xbf16>
    %1 = vector.shape_cast %0 : vector<1x1x16x16xbf16> to vector<1x16x16xbf16>
    %c0_3 = arith.constant 0 : index
    %c0_4 = arith.constant 0 : index
    %c0_5 = arith.constant 0 : index
    %c0_6 = arith.constant 0 : index
    %2 = vector.load %arg3[%c0_3, %c0_4, %c0_5, %c0_6] : memref<1x8x16x16xbf16, #tpu.memory_space<vmem>>, vector<1x8x16x16xbf16>
    %3 = vector.shape_cast %2 : vector<1x8x16x16xbf16> to vector<8x16x16xbf16>
    %c0_7 = arith.constant 0 : index
    %c0_8 = arith.constant 0 : index
    %c0_9 = arith.constant 0 : index
    %c0_10 = arith.constant 0 : index
    %4 = vector.load %arg4[%c0_7, %c0_8, %c0_9, %c0_10] : memref<1x1x16x16xbf16, #tpu.memory_space<vmem>>, vector<1x1x16x16xbf16>
    %5 = vector.shape_cast %4 : vector<1x1x16x16xbf16> to vector<1x16x16xbf16>
    %6 = tpu.concatenate %1, %3, %5 in 0 : vector<1x16x16xbf16>, vector<8x16x16xbf16>, vector<1x16x16xbf16> -> vector<10x16x16xbf16>
    %7 = vector.shape_cast %6 : vector<10x16x16xbf16> to vector<160x16xbf16>
    %c0_11 = arith.constant 0 : index
    %c0_12 = arith.constant 0 : index
    %8 = vector.load %arg5[%c0_11, %c0_12] : memref<16x4xbf16, #tpu.memory_space<vmem>>, vector<16x4xbf16>
    %cst = arith.constant dense<0.000000e+00> : vector<160x4xf32>
    %9 = tpu.matmul %7, %8, %cst {dimension_numbers = #tpu.dot_dimension_numbers<[1], [0], [0], [1], [0, 0, 1, 1], [], []>} : vector<160x16xbf16>, vector<16x4xbf16>, vector<160x4xf32> -> vector<160x4xf32>
    %c0_13 = arith.constant 0 : index
    %c0_14 = arith.constant 0 : index
    %10 = vector.load %arg6[%c0_13, %c0_14] : memref<1x4xf32, #tpu.memory_space<vmem>>, vector<1x4xf32>
    %11 = vector.broadcast %10 : vector<1x4xf32> to vector<160x4xf32>
    %12 = arith.addf %9, %11 : vector<160x4xf32>
    %cst_15 = arith.constant 0.000000e+00 : f32
    %13 = vector.broadcast %cst_15 : f32 to vector<160x4xf32>
    %14 = arith.maximumf %12, %13 : vector<160x4xf32>
    %15 = vector.shape_cast %14 : vector<160x4xf32> to vector<10x16x4xf32>
    %c0_i32 = arith.constant 0 : i32
    %16 = arith.cmpi sgt, %arg1, %c0_i32 : i32
    %17 = arith.extui %16 : i1 to i32
    %18 = arith.sitofp %17 : i32 to f32
    %c1_i32 = arith.constant 1 : i32
    %19 = arith.cmpi slt, %arg1, %c1_i32 : i32
    %20 = arith.extui %19 : i1 to i32
    %21 = arith.sitofp %20 : i32 to f32
    %cst_16 = arith.constant 0.000000e+00 : bf16
    %22 = vector.broadcast %cst_16 : bf16 to vector<10x18x4xbf16>
    %c0_17 = arith.constant 0 : index
    %c0_18 = arith.constant 0 : index
    %c0_19 = arith.constant 0 : index
    %23 = vector.load %arg13[%c0_17, %c0_18, %c0_19] : memref<10x18x4xbf16, #tpu.memory_space<vmem>>, vector<10x18x4xbf16>
    tpu.vector_store %arg13[%c0_17, %c0_18, %c0_19], %22 {strides = array<i32>} : memref<10x18x4xbf16, #tpu.memory_space<vmem>>, vector<10x18x4xbf16>,
    %24 = vector.extract_strided_slice %15 {offsets = [0, 0, 0], sizes = [1, 16, 4], strides = [1, 1, 1]} : vector<10x16x4xf32> to vector<1x16x4xf32>
    %25 = vector.broadcast %18 : f32 to vector<1x16x4xf32>
    %26 = arith.mulf %24, %25 : vector<1x16x4xf32>
    %27 = arith.truncf %26 : vector<1x16x4xf32> to vector<1x16x4xbf16>
    %c0_20 = arith.constant 0 : index
    %c1 = arith.constant 1 : index
    %c0_21 = arith.constant 0 : index
    %28 = vector.load %arg13[%c0_20, %c1, %c0_21] : memref<10x18x4xbf16, #tpu.memory_space<vmem>>, vector<1x16x4xbf16>
    tpu.vector_store %arg13[%c0_20, %c1, %c0_21], %27 {strides = array<i32>} : memref<10x18x4xbf16, #tpu.memory_space<vmem>>, vector<1x16x4xbf16>,
    %29 = vector.extract_strided_slice %15 {offsets = [1, 0, 0], sizes = [8, 16, 4], strides = [1, 1, 1]} : vector<10x16x4xf32> to vector<8x16x4xf32>
    %30 = arith.truncf %29 : vector<8x16x4xf32> to vector<8x16x4xbf16>
    %c1_22 = arith.constant 1 : index
    %c1_23 = arith.constant 1 : index
    %c0_24 = arith.constant 0 : index
    %31 = vector.load %arg13[%c1_22, %c1_23, %c0_24] : memref<10x18x4xbf16, #tpu.memory_space<vmem>>, vector<8x16x4xbf16>
    tpu.vector_store %arg13[%c1_22, %c1_23, %c0_24], %30 {strides = array<i32>} : memref<10x18x4xbf16, #tpu.memory_space<vmem>>, vector<8x16x4xbf16>,
    %32 = vector.extract_strided_slice %15 {offsets = [9, 0, 0], sizes = [1, 16, 4], strides = [1, 1, 1]} : vector<10x16x4xf32> to vector<1x16x4xf32>
    %33 = vector.broadcast %21 : f32 to vector<1x16x4xf32>
    %34 = arith.mulf %32, %33 : vector<1x16x4xf32>
    %35 = arith.truncf %34 : vector<1x16x4xf32> to vector<1x16x4xbf16>
    %c9 = arith.constant 9 : index
    %c1_25 = arith.constant 1 : index
    %c0_26 = arith.constant 0 : index
    %36 = vector.load %arg13[%c9, %c1_25, %c0_26] : memref<10x18x4xbf16, #tpu.memory_space<vmem>>, vector<1x16x4xbf16>
    tpu.vector_store %arg13[%c9, %c1_25, %c0_26], %35 {strides = array<i32>} : memref<10x18x4xbf16, #tpu.memory_space<vmem>>, vector<1x16x4xbf16>,
    %cst_27 = arith.constant 0.000000e+00 : f32
    %37 = vector.broadcast %cst_27 : f32 to vector<128x4xf32>
    %c0_28 = arith.constant 0 : index
    %c0_29 = arith.constant 0 : index
    %c0_30 = arith.constant 0 : index
    %38 = vector.load %arg13[%c0_28, %c0_29, %c0_30] : memref<10x18x4xbf16, #tpu.memory_space<vmem>>, vector<8x16x4xbf16>
    %39 = vector.shape_cast %38 : vector<8x16x4xbf16> to vector<128x4xbf16>
    %c0_31 = arith.constant 0 : index
    %c0_32 = arith.constant 0 : index
    %c0_33 = arith.constant 0 : index
    %40 = vector.load %arg7[%c0_31, %c0_32, %c0_33] : memref<9x4x4xbf16, #tpu.memory_space<vmem>>, vector<1x4x4xbf16>
    %41 = vector.shape_cast %40 : vector<1x4x4xbf16> to vector<4x4xbf16>
    %cst_34 = arith.constant dense<0.000000e+00> : vector<128x4xf32>
    %42 = tpu.matmul %39, %41, %cst_34 {dimension_numbers = #tpu.dot_dimension_numbers<[1], [0], [0], [1], [0, 0, 1, 1], [], []>} : vector<128x4xbf16>, vector<4x4xbf16>, vector<128x4xf32> -> vector<128x4xf32>
    %43 = arith.addf %37, %42 : vector<128x4xf32>
    %c0_35 = arith.constant 0 : index
    %c1_36 = arith.constant 1 : index
    %c0_37 = arith.constant 0 : index
    %44 = vector.load %arg13[%c0_35, %c1_36, %c0_37] : memref<10x18x4xbf16, #tpu.memory_space<vmem>>, vector<8x16x4xbf16>
    %45 = vector.shape_cast %44 : vector<8x16x4xbf16> to vector<128x4xbf16>
    %c1_38 = arith.constant 1 : index
    %c0_39 = arith.constant 0 : index
    %c0_40 = arith.constant 0 : index
    %46 = vector.load %arg7[%c1_38, %c0_39, %c0_40] : memref<9x4x4xbf16, #tpu.memory_space<vmem>>, vector<1x4x4xbf16>
    %47 = vector.shape_cast %46 : vector<1x4x4xbf16> to vector<4x4xbf16>
    %cst_41 = arith.constant dense<0.000000e+00> : vector<128x4xf32>
    %48 = tpu.matmul %45, %47, %cst_41 {dimension_numbers = #tpu.dot_dimension_numbers<[1], [0], [0], [1], [0, 0, 1, 1], [], []>} : vector<128x4xbf16>, vector<4x4xbf16>, vector<128x4xf32> -> vector<128x4xf32>
    %49 = arith.addf %43, %48 : vector<128x4xf32>
    %c0_42 = arith.constant 0 : index
    %c2 = arith.constant 2 : index
    %c0_43 = arith.constant 0 : index
    %50 = vector.load %arg13[%c0_42, %c2, %c0_43] : memref<10x18x4xbf16, #tpu.memory_space<vmem>>, vector<8x16x4xbf16>
    %51 = vector.shape_cast %50 : vector<8x16x4xbf16> to vector<128x4xbf16>
    %c2_44 = arith.constant 2 : index
    %c0_45 = arith.constant 0 : index
    %c0_46 = arith.constant 0 : index
    %52 = vector.load %arg7[%c2_44, %c0_45, %c0_46] : memref<9x4x4xbf16, #tpu.memory_space<vmem>>, vector<1x4x4xbf16>
    %53 = vector.shape_cast %52 : vector<1x4x4xbf16> to vector<4x4xbf16>
    %cst_47 = arith.constant dense<0.000000e+00> : vector<128x4xf32>
    %54 = tpu.matmul %51, %53, %cst_47 {dimension_numbers = #tpu.dot_dimension_numbers<[1], [0], [0], [1], [0, 0, 1, 1], [], []>} : vector<128x4xbf16>, vector<4x4xbf16>, vector<128x4xf32> -> vector<128x4xf32>
    %55 = arith.addf %49, %54 : vector<128x4xf32>
    %c1_48 = arith.constant 1 : index
    %c0_49 = arith.constant 0 : index
    %c0_50 = arith.constant 0 : index
    %56 = vector.load %arg13[%c1_48, %c0_49, %c0_50] : memref<10x18x4xbf16, #tpu.memory_space<vmem>>, vector<8x16x4xbf16>
    %57 = vector.shape_cast %56 : vector<8x16x4xbf16> to vector<128x4xbf16>
    %c3 = arith.constant 3 : index
    %c0_51 = arith.constant 0 : index
    %c0_52 = arith.constant 0 : index
    %58 = vector.load %arg7[%c3, %c0_51, %c0_52] : memref<9x4x4xbf16, #tpu.memory_space<vmem>>, vector<1x4x4xbf16>
    %59 = vector.shape_cast %58 : vector<1x4x4xbf16> to vector<4x4xbf16>
    %cst_53 = arith.constant dense<0.000000e+00> : vector<128x4xf32>
    %60 = tpu.matmul %57, %59, %cst_53 {dimension_numbers = #tpu.dot_dimension_numbers<[1], [0], [0], [1], [0, 0, 1, 1], [], []>} : vector<128x4xbf16>, vector<4x4xbf16>, vector<128x4xf32> -> vector<128x4xf32>
    %61 = arith.addf %55, %60 : vector<128x4xf32>
    %c1_54 = arith.constant 1 : index
    %c1_55 = arith.constant 1 : index
    %c0_56 = arith.constant 0 : index
    %62 = vector.load %arg13[%c1_54, %c1_55, %c0_56] : memref<10x18x4xbf16, #tpu.memory_space<vmem>>, vector<8x16x4xbf16>
    %63 = vector.shape_cast %62 : vector<8x16x4xbf16> to vector<128x4xbf16>
    %c4 = arith.constant 4 : index
    %c0_57 = arith.constant 0 : index
    %c0_58 = arith.constant 0 : index
    %64 = vector.load %arg7[%c4, %c0_57, %c0_58] : memref<9x4x4xbf16, #tpu.memory_space<vmem>>, vector<1x4x4xbf16>
    %65 = vector.shape_cast %64 : vector<1x4x4xbf16> to vector<4x4xbf16>
    %cst_59 = arith.constant dense<0.000000e+00> : vector<128x4xf32>
    %66 = tpu.matmul %63, %65, %cst_59 {dimension_numbers = #tpu.dot_dimension_numbers<[1], [0], [0], [1], [0, 0, 1, 1], [], []>} : vector<128x4xbf16>, vector<4x4xbf16>, vector<128x4xf32> -> vector<128x4xf32>
    %67 = arith.addf %61, %66 : vector<128x4xf32>
    %c1_60 = arith.constant 1 : index
    %c2_61 = arith.constant 2 : index
    %c0_62 = arith.constant 0 : index
    %68 = vector.load %arg13[%c1_60, %c2_61, %c0_62] : memref<10x18x4xbf16, #tpu.memory_space<vmem>>, vector<8x16x4xbf16>
    %69 = vector.shape_cast %68 : vector<8x16x4xbf16> to vector<128x4xbf16>
    %c5 = arith.constant 5 : index
    %c0_63 = arith.constant 0 : index
    %c0_64 = arith.constant 0 : index
    %70 = vector.load %arg7[%c5, %c0_63, %c0_64] : memref<9x4x4xbf16, #tpu.memory_space<vmem>>, vector<1x4x4xbf16>
    %71 = vector.shape_cast %70 : vector<1x4x4xbf16> to vector<4x4xbf16>
    %cst_65 = arith.constant dense<0.000000e+00> : vector<128x4xf32>
    %72 = tpu.matmul %69, %71, %cst_65 {dimension_numbers = #tpu.dot_dimension_numbers<[1], [0], [0], [1], [0, 0, 1, 1], [], []>} : vector<128x4xbf16>, vector<4x4xbf16>, vector<128x4xf32> -> vector<128x4xf32>
    %73 = arith.addf %67, %72 : vector<128x4xf32>
    %c2_66 = arith.constant 2 : index
    %c0_67 = arith.constant 0 : index
    %c0_68 = arith.constant 0 : index
    %74 = vector.load %arg13[%c2_66, %c0_67, %c0_68] : memref<10x18x4xbf16, #tpu.memory_space<vmem>>, vector<8x16x4xbf16>
    %75 = vector.shape_cast %74 : vector<8x16x4xbf16> to vector<128x4xbf16>
    %c6 = arith.constant 6 : index
    %c0_69 = arith.constant 0 : index
    %c0_70 = arith.constant 0 : index
    %76 = vector.load %arg7[%c6, %c0_69, %c0_70] : memref<9x4x4xbf16, #tpu.memory_space<vmem>>, vector<1x4x4xbf16>
    %77 = vector.shape_cast %76 : vector<1x4x4xbf16> to vector<4x4xbf16>
    %cst_71 = arith.constant dense<0.000000e+00> : vector<128x4xf32>
    %78 = tpu.matmul %75, %77, %cst_71 {dimension_numbers = #tpu.dot_dimension_numbers<[1], [0], [0], [1], [0, 0, 1, 1], [], []>} : vector<128x4xbf16>, vector<4x4xbf16>, vector<128x4xf32> -> vector<128x4xf32>
    %79 = arith.addf %73, %78 : vector<128x4xf32>
    %c2_72 = arith.constant 2 : index
    %c1_73 = arith.constant 1 : index
    %c0_74 = arith.constant 0 : index
    %80 = vector.load %arg13[%c2_72, %c1_73, %c0_74] : memref<10x18x4xbf16, #tpu.memory_space<vmem>>, vector<8x16x4xbf16>
    %81 = vector.shape_cast %80 : vector<8x16x4xbf16> to vector<128x4xbf16>
    %c7 = arith.constant 7 : index
    %c0_75 = arith.constant 0 : index
    %c0_76 = arith.constant 0 : index
    %82 = vector.load %arg7[%c7, %c0_75, %c0_76] : memref<9x4x4xbf16, #tpu.memory_space<vmem>>, vector<1x4x4xbf16>
    %83 = vector.shape_cast %82 : vector<1x4x4xbf16> to vector<4x4xbf16>
    %cst_77 = arith.constant dense<0.000000e+00> : vector<128x4xf32>
    %84 = tpu.matmul %81, %83, %cst_77 {dimension_numbers = #tpu.dot_dimension_numbers<[1], [0], [0], [1], [0, 0, 1, 1], [], []>} : vector<128x4xbf16>, vector<4x4xbf16>, vector<128x4xf32> -> vector<128x4xf32>
    %85 = arith.addf %79, %84 : vector<128x4xf32>
    %c2_78 = arith.constant 2 : index
    %c2_79 = arith.constant 2 : index
    %c0_80 = arith.constant 0 : index
    %86 = vector.load %arg13[%c2_78, %c2_79, %c0_80] : memref<10x18x4xbf16, #tpu.memory_space<vmem>>, vector<8x16x4xbf16>
    %87 = vector.shape_cast %86 : vector<8x16x4xbf16> to vector<128x4xbf16>
    %c8 = arith.constant 8 : index
    %c0_81 = arith.constant 0 : index
    %c0_82 = arith.constant 0 : index
    %88 = vector.load %arg7[%c8, %c0_81, %c0_82] : memref<9x4x4xbf16, #tpu.memory_space<vmem>>, vector<1x4x4xbf16>
    %89 = vector.shape_cast %88 : vector<1x4x4xbf16> to vector<4x4xbf16>
    %cst_83 = arith.constant dense<0.000000e+00> : vector<128x4xf32>
    %90 = tpu.matmul %87, %89, %cst_83 {dimension_numbers = #tpu.dot_dimension_numbers<[1], [0], [0], [1], [0, 0, 1, 1], [], []>} : vector<128x4xbf16>, vector<4x4xbf16>, vector<128x4xf32> -> vector<128x4xf32>
    %91 = arith.addf %85, %90 : vector<128x4xf32>
    %c0_84 = arith.constant 0 : index
    %c0_85 = arith.constant 0 : index
    %92 = vector.load %arg8[%c0_84, %c0_85] : memref<1x4xf32, #tpu.memory_space<vmem>>, vector<1x4xf32>
    %93 = vector.broadcast %92 : vector<1x4xf32> to vector<128x4xf32>
    %94 = arith.addf %91, %93 : vector<128x4xf32>
    %cst_86 = arith.constant 0.000000e+00 : f32
    %95 = vector.broadcast %cst_86 : f32 to vector<128x4xf32>
    %96 = arith.maximumf %94, %95 : vector<128x4xf32>
    %97 = arith.truncf %96 : vector<128x4xf32> to vector<128x4xbf16>
    %c0_87 = arith.constant 0 : index
    %c0_88 = arith.constant 0 : index
    %98 = vector.load %arg9[%c0_87, %c0_88] : memref<4x16xbf16, #tpu.memory_space<vmem>>, vector<4x16xbf16>
    %cst_89 = arith.constant dense<0.000000e+00> : vector<128x16xf32>
    %99 = tpu.matmul %97, %98, %cst_89 {dimension_numbers = #tpu.dot_dimension_numbers<[1], [0], [0], [1], [0, 0, 1, 1], [], []>} : vector<128x4xbf16>, vector<4x16xbf16>, vector<128x16xf32> -> vector<128x16xf32>
    %c0_90 = arith.constant 0 : index
    %c0_91 = arith.constant 0 : index
    %100 = vector.load %arg10[%c0_90, %c0_91] : memref<1x16xf32, #tpu.memory_space<vmem>>, vector<1x16xf32>
    %101 = vector.broadcast %100 : vector<1x16xf32> to vector<128x16xf32>
    %102 = arith.addf %99, %101 : vector<128x16xf32>
    %103 = vector.shape_cast %102 : vector<128x16xf32> to vector<1x8x16x16xf32>
    %104 = arith.truncf %103 : vector<1x8x16x16xf32> to vector<1x8x16x16xbf16>
    %c0_92 = arith.constant 0 : index
    %c0_93 = arith.constant 0 : index
    %c0_94 = arith.constant 0 : index
    %c0_95 = arith.constant 0 : index
    %105 = vector.load %arg11[%c0_92, %c0_93, %c0_94, %c0_95] : memref<1x8x16x16xbf16, #tpu.memory_space<vmem>>, vector<1x8x16x16xbf16>
    tpu.vector_store %arg11[%c0_92, %c0_93, %c0_94, %c0_95], %104 {strides = array<i32>} : memref<1x8x16x16xbf16, #tpu.memory_space<vmem>>, vector<1x8x16x16xbf16>,
    %c0_i32_96 = arith.constant 0 : i32
    %106 = arith.cmpi eq, %arg1, %c0_i32_96 : i32
    %107 = arith.extui %106 : i1 to i32
    %c0_i32_97 = arith.constant 0 : i32
    %108 = arith.cmpi ne, %107, %c0_i32_97 : i32
    scf.if %108 {
      %cst_105 = arith.constant 0.000000e+00 : f32
      %117 = vector.broadcast %cst_105 : f32 to vector<1x1x16xf32>
      %c0_106 = arith.constant 0 : index
      %c0_107 = arith.constant 0 : index
      %c0_108 = arith.constant 0 : index
      %118 = vector.load %arg12[%c0_106, %c0_107, %c0_108] : memref<1x1x16xf32, #tpu.memory_space<vmem>>, vector<1x1x16xf32>
      tpu.vector_store %arg12[%c0_106, %c0_107, %c0_108], %117 {strides = array<i32>} : memref<1x1x16xf32, #tpu.memory_space<vmem>>, vector<1x1x16xf32>,
    } else {
    }
    %c0_98 = arith.constant 0 : index
    %c0_99 = arith.constant 0 : index
    %c0_100 = arith.constant 0 : index
    %109 = vector.load %arg12[%c0_98, %c0_99, %c0_100] : memref<1x1x16xf32, #tpu.memory_space<vmem>>, vector<1x1x16xf32>
    %110 = vector.shape_cast %109 : vector<1x1x16xf32> to vector<1x16xf32>
    %cst_101 = arith.constant dense<0.000000e+00> : vector<16xf32>
    %111 = vector.multi_reduction <add>, %102, %cst_101 [0] : vector<128x16xf32> to vector<16xf32>
    %112 = vector.shape_cast %111 : vector<16xf32> to vector<1x16xf32>
    %113 = arith.addf %110, %112 : vector<1x16xf32>
    %c0_102 = arith.constant 0 : index
    %c0_103 = arith.constant 0 : index
    %c0_104 = arith.constant 0 : index
    %114 = vector.load %arg12[%c0_102, %c0_103, %c0_104] : memref<1x1x16xf32, #tpu.memory_space<vmem>>, vector<1x1x16xf32>
    %115 = vector.shape_cast %114 : vector<1x1x16xf32> to vector<1x16xf32>
    %116 = vector.shape_cast %113 : vector<1x16xf32> to vector<1x1x16xf32>
    tpu.vector_store %arg12[%c0_102, %c0_103, %c0_104], %116 {strides = array<i32>} : memref<1x1x16xf32, #tpu.memory_space<vmem>>, vector<1x1x16xf32>,
    return
  }
  func.func @transform_0(%arg0: i32, %arg1: i32) -> (i32, i32, i32, i32) {
    %c8_i32 = arith.constant 8 : i32
    %0 = arith.muli %arg1, %c8_i32 : i32
    %c1_i32 = arith.constant 1 : i32
    %1 = arith.subi %0, %c1_i32 : i32
    %c0_i32 = arith.constant 0 : i32
    %2 = arith.maxsi %1, %c0_i32 : i32
    %c0_i32_0 = arith.constant 0 : i32
    %c0_i32_1 = arith.constant 0 : i32
    %c0_i32_2 = arith.constant 0 : i32
    return %arg0, %2, %c0_i32_0, %c0_i32_1 : i32, i32, i32, i32
  }
  func.func @transform_1(%arg0: i32, %arg1: i32) -> (i32, i32, i32, i32) {
    %c0_i32 = arith.constant 0 : i32
    %c0_i32_0 = arith.constant 0 : i32
    %c0_i32_1 = arith.constant 0 : i32
    return %arg0, %arg1, %c0_i32, %c0_i32_0 : i32, i32, i32, i32
  }
  func.func @transform_2(%arg0: i32, %arg1: i32) -> (i32, i32, i32, i32) {
    %c1_i32 = arith.constant 1 : i32
    %0 = arith.addi %arg1, %c1_i32 : i32
    %c8_i32 = arith.constant 8 : i32
    %1 = arith.muli %0, %c8_i32 : i32
    %c15_i32 = arith.constant 15 : i32
    %2 = arith.minsi %1, %c15_i32 : i32
    %c0_i32 = arith.constant 0 : i32
    %c0_i32_0 = arith.constant 0 : i32
    %c0_i32_1 = arith.constant 0 : i32
    return %arg0, %2, %c0_i32, %c0_i32_0 : i32, i32, i32, i32
  }
  func.func @transform_3(%arg0: i32, %arg1: i32) -> (i32, i32) {
    %c0_i32 = arith.constant 0 : i32
    %c0_i32_0 = arith.constant 0 : i32
    %c0_i32_1 = arith.constant 0 : i32
    return %c0_i32, %c0_i32_0 : i32, i32
  }
  func.func @transform_4(%arg0: i32, %arg1: i32) -> (i32, i32) {
    %c0_i32 = arith.constant 0 : i32
    %c0_i32_0 = arith.constant 0 : i32
    %c0_i32_1 = arith.constant 0 : i32
    return %c0_i32, %c0_i32_0 : i32, i32
  }
  func.func @transform_5(%arg0: i32, %arg1: i32) -> (i32, i32, i32) {
    %c0_i32 = arith.constant 0 : i32
    %c0_i32_0 = arith.constant 0 : i32
    %c0_i32_1 = arith.constant 0 : i32
    %c0_i32_2 = arith.constant 0 : i32
    return %c0_i32, %c0_i32_0, %c0_i32_1 : i32, i32, i32
  }
  func.func @transform_6(%arg0: i32, %arg1: i32) -> (i32, i32) {
    %c0_i32 = arith.constant 0 : i32
    %c0_i32_0 = arith.constant 0 : i32
    %c0_i32_1 = arith.constant 0 : i32
    return %c0_i32, %c0_i32_0 : i32, i32
  }
  func.func @transform_7(%arg0: i32, %arg1: i32) -> (i32, i32) {
    %c0_i32 = arith.constant 0 : i32
    %c0_i32_0 = arith.constant 0 : i32
    %c0_i32_1 = arith.constant 0 : i32
    return %c0_i32, %c0_i32_0 : i32, i32
  }
  func.func @transform_8(%arg0: i32, %arg1: i32) -> (i32, i32) {
    %c0_i32 = arith.constant 0 : i32
    %c0_i32_0 = arith.constant 0 : i32
    %c0_i32_1 = arith.constant 0 : i32
    return %c0_i32, %c0_i32_0 : i32, i32
  }
  func.func @transform_9(%arg0: i32, %arg1: i32) -> (i32, i32, i32, i32) {
    %c0_i32 = arith.constant 0 : i32
    %c0_i32_0 = arith.constant 0 : i32
    %c0_i32_1 = arith.constant 0 : i32
    return %arg0, %arg1, %c0_i32, %c0_i32_0 : i32, i32, i32, i32
  }
  func.func @transform_10(%arg0: i32, %arg1: i32) -> (i32, i32, i32) {
    %c0_i32 = arith.constant 0 : i32
    %c0_i32_0 = arith.constant 0 : i32
    %c0_i32_1 = arith.constant 0 : i32
    return %arg0, %c0_i32, %c0_i32_0 : i32, i32, i32
  }
}

</mosaic_0001>

<llo_original>
// kernel: tpu_custom_call.1
$region0: #{tpu_custom_call.1}
  #allocation0 [shape = 'u32[]', space=smem, size = 0x4, offset = 0x4, fixed_abs, tag = 'smem constant byte address 0x4 - core index']
  #allocation1 [shape = 'u32[144,128]{1,0:T(1,128)}', space=vmem, size = 0x12000, scoped, tag = 'internal scratch']
  #allocation2 [shape = 'bf16[10,18,4]{2,1,0:T(8,128)(2,1)}', space=vmem, size = 0xf000, scoped, tag = 'scratch operand']
  %s0 = inlined_call_operand.hbm [shape: bf16[2,16,16,16], index: 0, kind: input, shape index: {}]
  %s1 = inlined_call_operand.hbm [shape: bf16[2,16,16,16], index: 1, kind: input, shape index: {}]
  %s2 = inlined_call_operand.hbm [shape: bf16[2,16,16,16], index: 2, kind: input, shape index: {}]
  %s3 = inlined_call_operand.vmem [shape: bf16[16,4], index: 3, kind: input, shape index: {}]
  %s4 = inlined_call_operand.vmem [shape: f32[1,4], index: 4, kind: input, shape index: {}]
  %s5 = inlined_call_operand.vmem [shape: bf16[9,4,4], index: 5, kind: input, shape index: {}]
  %s6 = inlined_call_operand.vmem [shape: f32[1,4], index: 6, kind: input, shape index: {}]
  %s7 = inlined_call_operand.vmem [shape: bf16[4,16], index: 7, kind: input, shape index: {}]
  %s8 = inlined_call_operand.vmem [shape: f32[1,16], index: 8, kind: input, shape index: {}]
  %s9 = inlined_call_operand.hbm [shape: bf16[2,16,16,16], index: 9, kind: output, shape index: {0}]
  %s10 = inlined_call_operand.hbm [shape: f32[2,1,16], index: 10, kind: output, shape index: {1}]
  %11 = xla_tuple %s9, %s10
  %s12 = sld [smem:[#allocation0]]
  $region93: #{tpu_custom_call.1} parent=0
    _
  %s14 = ssub.s32 1, %s12
  %s15 = scalar_select 0, %s14, %s12
  $region1: #{tpu_custom_call.1} parent=0
    #allocation3 [shape = 'u8[8192]{0}', space=vmem, size = 0x2000, scoped, tag = 'input window, operand 0']
    #allocation4 [shape = 's32[2]{0}', space=sflag, size = 0x8, scoped, tag = 'scoped memory for tpu_custom_call.1']
    #allocation5 [shape = 's32[2]{0}', space=sflag, size = 0x8, scoped, tag = 'scoped memory for tpu_custom_call.1']
    #allocation6 [shape = 'u8[65536]{0}', space=vmem, size = 0x10000, scoped, tag = 'input window, operand 1']
    #allocation7 [shape = 's32[2]{0}', space=sflag, size = 0x8, scoped, tag = 'scoped memory for tpu_custom_call.1']
    #allocation8 [shape = 'u8[8192]{0}', space=vmem, size = 0x2000, scoped, tag = 'input window, operand 2']
    #allocation9 [shape = 'u8[65536]{0}', space=vmem, size = 0x10000, scoped, tag = 'output window, operand 0']
    #allocation10 [shape = 'u8[1024]{0}', space=vmem, size = 0x400, scoped, tag = 'output window, operand 1']
    #allocation11 [shape = 's32[2]{0}', space=sflag, size = 0x8, scoped, tag = 'scoped memory for tpu_custom_call.1']
    %16 = vsyncpa [#allocation4], 0
    %s17 = scalar_lea.sflag [#allocation4], 1
    %18 = vsyncpa %s17, 0
    %19 = vsyncpa [#allocation7], 0
    %s20 = scalar_lea.sflag [#allocation7], 1
    %21 = vsyncpa %s20, 0
    %22 = vsyncpa [#allocation5], 0
    %s23 = scalar_lea.sflag [#allocation5], 1
    %24 = vsyncpa %s23, 0
    %25 = vsyncpa [#allocation11], 0
    %s26 = scalar_lea.sflag [#allocation11], 1
    %27 = vsyncpa %s26, 0
    loop: start=0, step=1, limit=6
    $region2: #{tpu_custom_call.1} parent=1 // loop_pre_header
      _
    $region3: #{tpu_custom_call.1} parent=1 // loop_header
      %s29 = sphi 0, %s33
      %p30 = scmp.ge.s32.totalorder %s29, 6
      %s36 = sphi 0, %s48
      %s37 = sphi 0, %s44
      %s38 = sphi 0, %s36
      %s39 = sphi 0, %s37
      %s40 = sphi 0, %s38
      %s41 = sphi 0, %s39
      %s61 = sphi 0, %s63
      %s64 = sphi 0, %s61
      %s65 = sphi 0, %s64
      %s81 = sphi 0, %s65
      %s89 = sphi 0, %s91
      %s92 = sphi 0, %s89
      %s93 = sphi 0, %s92
      %s109 = sphi 0, %s93
      %s125 = sphi 0, %s127
      %s128 = sphi 0, %s125
      %s129 = sphi 0, %s128
      %s145 = sphi 0, %s129
      %s149 = sphi 0, %s149
      %s151 = sphi 0, %s149
      %s152 = sphi 0, %s151
      %s166 = sphi 0, %s152
      %s170 = sphi 0, %s170
      %s172 = sphi 0, %s170
      %s173 = sphi 0, %s172
      %s187 = sphi 0, %s173
      %s191 = sphi 0, %s191
      %s193 = sphi 0, %s191
      %s194 = sphi 0, %s193
      %s208 = sphi 0, %s194
      %s212 = sphi 0, %s212
      %s214 = sphi 0, %s212
      %s215 = sphi 0, %s214
      %s229 = sphi 0, %s215
      %s233 = sphi 0, %s233
      %s235 = sphi 0, %s233
      %s236 = sphi 0, %s235
      %s250 = sphi 0, %s236
      %s254 = sphi 0, %s254
      %s256 = sphi 0, %s254
      %s257 = sphi 0, %s256
      %s271 = sphi 0, %s257
      %s279 = sphi 0, %s281
      %s282 = sphi 0, %s279
      %s283 = sphi 0, %s282
      %s299 = sphi 0, %s283
      %s305 = sphi 0, %s307
      %s308 = sphi 0, %s305
      %s309 = sphi 0, %s308
      %s325 = sphi 0, %s309
    $region4: #{tpu_custom_call.1} parent=1 // loop_header_branch
      %32 = sbr.rel (%p30) target = $region8
    $region5: #{tpu_custom_call.1} parent=1 // loop_body
      %s34 = ssub.s32 %s29, 1
      %s35 = ssub.s32 %s29, 2
      %s42 = sadd.s32 1, %s37
      %p43 = scmp.ge.s32.totalorder %s42, 2
      %s44 = scalar_select %p43, 0, %s42
      %s45 = sadd.s32 1, %s36
      %s46 = scalar_select %p43, %s45, %s36
      %p47 = scmp.ge.s32.totalorder %s46, 2
      %s48 = scalar_select %p47, 0, %s46
      %s49 = smul.u32 %s37, 8
      %s50 = ssub.s32 %s49, 1
      %p51 = scmp.gt.s32.totalorder %s50, 0
      %s52 = scalar_select %p51, %s50, 0
      %s53 = smul.u32 %s44, 8
      %s54 = ssub.s32 %s53, 1
      %p55 = scmp.gt.s32.totalorder %s54, 0
      %s56 = scalar_select %p55, %s54, 0
      %s57 = ssub.s32 %s36, %s48
      %s58 = ssub.s32 %s52, %s56
      %s59 = sor.u32 %s57, %s58
      %p60 = scmp.eq.s32.totalorder %s59, 0
      %s62 = sadd.s32 %s61, 1
      %s63 = scalar_select %p60, %s61, %s62
      %p66 = pneg %p60
      %p67 = scmp.eq.s32.totalorder %s29, 3
      %p68 = por %p66, %p67
      %p69 = scmp.ne.s32.totalorder %s61, %s64
      %p70 = scmp.eq.s32.totalorder %s29, 0
      %p71 = por %p69, %p70
      %p72 = scmp.ne.s32.totalorder %s61, %s64
      %p73 = scmp.eq.s32.totalorder %s34, 3
      %p74 = por %p72, %p73
      %p75 = scmp.ne.s32.totalorder %s64, %s65
      %p76 = scmp.eq.s32.totalorder %s34, 0
      %p77 = por %p75, %p76
      %p78 = scmp.ne.s32.totalorder %s64, %s65
      %p79 = scmp.eq.s32.totalorder %s35, 3
      %p80 = por %p78, %p79
      %p82 = scmp.ne.s32.totalorder %s65, %s81
      %p83 = scmp.eq.s32.totalorder %s35, 0
      %p84 = por %p82, %p83
      %s85 = ssub.s32 %s36, %s48
      %s86 = ssub.s32 %s37, %s44
      %s87 = sor.u32 %s85, %s86
      %p88 = scmp.eq.s32.totalorder %s87, 0
      %s90 = sadd.s32 %s89, 1
      %s91 = scalar_select %p88, %s89, %s90
      %p94 = pneg %p88
      %p95 = scmp.eq.s32.totalorder %s29, 3
      %p96 = por %p94, %p95
      %p97 = scmp.ne.s32.totalorder %s89, %s92
      %p98 = scmp.eq.s32.totalorder %s29, 0
      %p99 = por %p97, %p98
      %p100 = scmp.ne.s32.totalorder %s89, %s92
      %p101 = scmp.eq.s32.totalorder %s34, 3
      %p102 = por %p100, %p101
      %p103 = scmp.ne.s32.totalorder %s92, %s93
      %p104 = scmp.eq.s32.totalorder %s34, 0
      %p105 = por %p103, %p104
      %p106 = scmp.ne.s32.totalorder %s92, %s93
      %p107 = scmp.eq.s32.totalorder %s35, 3
      %p108 = por %p106, %p107
      %p110 = scmp.ne.s32.totalorder %s93, %s109
      %p111 = scmp.eq.s32.totalorder %s35, 0
      %p112 = por %p110, %p111
      %s113 = sadd.s32 %s37, 1
      %s114 = smul.u32 %s113, 8
      %p115 = scmp.lt.s32.totalorder %s114, 15
      %s116 = scalar_select %p115, %s114, 15
      %s117 = sadd.s32 %s44, 1
      %s118 = smul.u32 %s117, 8
      %p119 = scmp.lt.s32.totalorder %s118, 15
      %s120 = scalar_select %p119, %s118, 15
      %s121 = ssub.s32 %s36, %s48
      %s122 = ssub.s32 %s116, %s120
      %s123 = sor.u32 %s121, %s122
      %p124 = scmp.eq.s32.totalorder %s123, 0
      %s126 = sadd.s32 %s125, 1
      %s127 = scalar_select %p124, %s125, %s126
      %p130 = pneg %p124
      %p131 = scmp.eq.s32.totalorder %s29, 3
      %p132 = por %p130, %p131
      %p133 = scmp.ne.s32.totalorder %s125, %s128
      %p134 = scmp.eq.s32.totalorder %s29, 0
      %p135 = por %p133, %p134
      %p136 = scmp.ne.s32.totalorder %s125, %s128
      %p137 = scmp.eq.s32.totalorder %s34, 3
      %p138 = por %p136, %p137
      %p139 = scmp.ne.s32.totalorder %s128, %s129
      %p140 = scmp.eq.s32.totalorder %s34, 0
      %p141 = por %p139, %p140
      %p142 = scmp.ne.s32.totalorder %s128, %s129
      %p143 = scmp.eq.s32.totalorder %s35, 3
      %p144 = por %p142, %p143
      %p146 = scmp.ne.s32.totalorder %s129, %s145
      %p147 = scmp.eq.s32.totalorder %s35, 0
      %p148 = por %p146, %p147
      %s150 = sadd.s32 %s149, 1
      %p153 = scmp.eq.s32.totalorder %s29, 3
      %p154 = scmp.ne.s32.totalorder %s149, %s151
      %p155 = scmp.eq.s32.totalorder %s29, 0
      %p156 = por %p154, %p155
      %p157 = scmp.ne.s32.totalorder %s149, %s151
      %p158 = scmp.eq.s32.totalorder %s34, 3
      %p159 = por %p157, %p158
      %p160 = scmp.ne.s32.totalorder %s151, %s152
      %p161 = scmp.eq.s32.totalorder %s34, 0
      %p162 = por %p160, %p161
      %p163 = scmp.ne.s32.totalorder %s151, %s152
      %p164 = scmp.eq.s32.totalorder %s35, 3
      %p165 = por %p163, %p164
      %p167 = scmp.ne.s32.totalorder %s152, %s166
      %p168 = scmp.eq.s32.totalorder %s35, 0
      %p169 = por %p167, %p168
      %s171 = sadd.s32 %s170, 1
      %p174 = scmp.eq.s32.totalorder %s29, 3
      %p175 = scmp.ne.s32.totalorder %s170, %s172
      %p176 = scmp.eq.s32.totalorder %s29, 0
      %p177 = por %p175, %p176
      %p178 = scmp.ne.s32.totalorder %s170, %s172
      %p179 = scmp.eq.s32.totalorder %s34, 3
      %p180 = por %p178, %p179
      %p181 = scmp.ne.s32.totalorder %s172, %s173
      %p182 = scmp.eq.s32.totalorder %s34, 0
      %p183 = por %p181, %p182
      %p184 = scmp.ne.s32.totalorder %s172, %s173
      %p185 = scmp.eq.s32.totalorder %s35, 3
      %p186 = por %p184, %p185
      %p188 = scmp.ne.s32.totalorder %s173, %s187
      %p189 = scmp.eq.s32.totalorder %s35, 0
      %p190 = por %p188, %p189
      %s192 = sadd.s32 %s191, 1
      %p195 = scmp.eq.s32.totalorder %s29, 3
      %p196 = scmp.ne.s32.totalorder %s191, %s193
      %p197 = scmp.eq.s32.totalorder %s29, 0
      %p198 = por %p196, %p197
      %p199 = scmp.ne.s32.totalorder %s191, %s193
      %p200 = scmp.eq.s32.totalorder %s34, 3
      %p201 = por %p199, %p200
      %p202 = scmp.ne.s32.totalorder %s193, %s194
      %p203 = scmp.eq.s32.totalorder %s34, 0
      %p204 = por %p202, %p203
      %p205 = scmp.ne.s32.totalorder %s193, %s194
      %p206 = scmp.eq.s32.totalorder %s35, 3
      %p207 = por %p205, %p206
      %p209 = scmp.ne.s32.totalorder %s194, %s208
      %p210 = scmp.eq.s32.totalorder %s35, 0
      %p211 = por %p209, %p210
      %s213 = sadd.s32 %s212, 1
      %p216 = scmp.eq.s32.totalorder %s29, 3
      %p217 = scmp.ne.s32.totalorder %s212, %s214
      %p218 = scmp.eq.s32.totalorder %s29, 0
      %p219 = por %p217, %p218
      %p220 = scmp.ne.s32.totalorder %s212, %s214
      %p221 = scmp.eq.s32.totalorder %s34, 3
      %p222 = por %p220, %p221
      %p223 = scmp.ne.s32.totalorder %s214, %s215
      %p224 = scmp.eq.s32.totalorder %s34, 0
      %p225 = por %p223, %p224
      %p226 = scmp.ne.s32.totalorder %s214, %s215
      %p227 = scmp.eq.s32.totalorder %s35, 3
      %p228 = por %p226, %p227
      %p230 = scmp.ne.s32.totalorder %s215, %s229
      %p231 = scmp.eq.s32.totalorder %s35, 0
      %p232 = por %p230, %p231
      %s234 = sadd.s32 %s233, 1
      %p237 = scmp.eq.s32.totalorder %s29, 3
      %p238 = scmp.ne.s32.totalorder %s233, %s235
      %p239 = scmp.eq.s32.totalorder %s29, 0
      %p240 = por %p238, %p239
      %p241 = scmp.ne.s32.totalorder %s233, %s235
      %p242 = scmp.eq.s32.totalorder %s34, 3
      %p243 = por %p241, %p242
      %p244 = scmp.ne.s32.totalorder %s235, %s236
      %p245 = scmp.eq.s32.totalorder %s34, 0
      %p246 = por %p244, %p245
      %p247 = scmp.ne.s32.totalorder %s235, %s236
      %p248 = scmp.eq.s32.totalorder %s35, 3
      %p249 = por %p247, %p248
      %p251 = scmp.ne.s32.totalorder %s236, %s250
      %p252 = scmp.eq.s32.totalorder %s35, 0
      %p253 = por %p251, %p252
      %s255 = sadd.s32 %s254, 1
      %p258 = scmp.eq.s32.totalorder %s29, 3
      %p259 = scmp.ne.s32.totalorder %s254, %s256
      %p260 = scmp.eq.s32.totalorder %s29, 0
      %p261 = por %p259, %p260
      %p262 = scmp.ne.s32.totalorder %s254, %s256
      %p263 = scmp.eq.s32.totalorder %s34, 3
      %p264 = por %p262, %p263
      %p265 = scmp.ne.s32.totalorder %s256, %s257
      %p266 = scmp.eq.s32.totalorder %s34, 0
      %p267 = por %p265, %p266
      %p268 = scmp.ne.s32.totalorder %s256, %s257
      %p269 = scmp.eq.s32.totalorder %s35, 3
      %p270 = por %p268, %p269
      %p272 = scmp.ne.s32.totalorder %s257, %s271
      %p273 = scmp.eq.s32.totalorder %s35, 0
      %p274 = por %p272, %p273
      %s275 = ssub.s32 %s36, %s48
      %s276 = ssub.s32 %s37, %s44
      %s277 = sor.u32 %s275, %s276
      %p278 = scmp.eq.s32.totalorder %s277, 0
      %s280 = sadd.s32 %s279, 1
      %s281 = scalar_select %p278, %s279, %s280
      %p284 = pneg %p278
      %p285 = scmp.eq.s32.totalorder %s29, 3
      %p286 = por %p284, %p285
      %p287 = scmp.ne.s32.totalorder %s279, %s282
      %p288 = scmp.eq.s32.totalorder %s29, 0
      %p289 = por %p287, %p288
      %p290 = scmp.ne.s32.totalorder %s279, %s282
      %p291 = scmp.eq.s32.totalorder %s34, 3
      %p292 = por %p290, %p291
      %p293 = scmp.ne.s32.totalorder %s282, %s283
      %p294 = scmp.eq.s32.totalorder %s34, 0
      %p295 = por %p293, %p294
      %p296 = scmp.ne.s32.totalorder %s282, %s283
      %p297 = scmp.eq.s32.totalorder %s35, 3
      %p298 = por %p296, %p297
      %p300 = scmp.ne.s32.totalorder %s283, %s299
      %p301 = scmp.eq.s32.totalorder %s35, 0
      %p302 = por %p300, %p301
      %s303 = ssub.s32 %s36, %s48
      %p304 = scmp.eq.s32.totalorder %s303, 0
      %s306 = sadd.s32 %s305, 1
      %s307 = scalar_select %p304, %s305, %s306
      %p310 = pneg %p304
      %p311 = scmp.eq.s32.totalorder %s29, 3
      %p312 = por %p310, %p311
      %p313 = scmp.ne.s32.totalorder %s305, %s308
      %p314 = scmp.eq.s32.totalorder %s29, 0
      %p315 = por %p313, %p314
      %p316 = scmp.ne.s32.totalorder %s305, %s308
      %p317 = scmp.eq.s32.totalorder %s34, 3
      %p318 = por %p316, %p317
      %p319 = scmp.ne.s32.totalorder %s308, %s309
      %p320 = scmp.eq.s32.totalorder %s34, 0
      %p321 = por %p319, %p320
      %p322 = scmp.ne.s32.totalorder %s308, %s309
      %p323 = scmp.eq.s32.totalorder %s35, 3
      %p324 = por %p322, %p323
      %p326 = scmp.ne.s32.totalorder %s309, %s325
      %p327 = scmp.eq.s32.totalorder %s35, 0
      %p328 = por %p326, %p327
      %p329 = scmp.le.s32.totalorder 1, %s29
      %p330 = scmp.lt.s32.totalorder %s29, 5
      %p331 = pnand %p329, %p330
      %p332 = pneg %p331
      // Predicated region
      $region9: #{tpu_custom_call.1} parent=5 // pred_check
        _
      $region10: #{tpu_custom_call.1} parent=5 // pred_check_branch
        %334 = sbr.rel (%p331) target = $region12
      $region11: #{tpu_custom_call.1} parent=5 // pred_region
        %s335 = ssub.s32 %s29, 1
        // Predicated region
        $region13: #{tpu_custom_call.1} parent=11 // pred_check
          %p336 = pneg %p162
        $region14: #{tpu_custom_call.1} parent=11 // pred_check_branch
          %338 = sbr.rel (%p336) target = $region16
        $region15: #{tpu_custom_call.1} parent=11 // pred_region
          _
        $region16: #{tpu_custom_call.1} parent=11 // pred_fallthru
          _
        // Predicated region
        $region17: #{tpu_custom_call.1} parent=11 // pred_check
          %p339 = pneg %p183
        $region18: #{tpu_custom_call.1} parent=11 // pred_check_branch
          %341 = sbr.rel (%p339) target = $region20
        $region19: #{tpu_custom_call.1} parent=11 // pred_region
          _
        $region20: #{tpu_custom_call.1} parent=11 // pred_fallthru
          _
        // Predicated region
        $region21: #{tpu_custom_call.1} parent=11 // pred_check
          %p342 = pneg %p204
        $region22: #{tpu_custom_call.1} parent=11 // pred_check_branch
          %344 = sbr.rel (%p342) target = $region24
        $region23: #{tpu_custom_call.1} parent=11 // pred_region
          _
        $region24: #{tpu_custom_call.1} parent=11 // pred_fallthru
          _
        // Predicated region
        $region25: #{tpu_custom_call.1} parent=11 // pred_check
          %p345 = pneg %p225
        $region26: #{tpu_custom_call.1} parent=11 // pred_check_branch
          %347 = sbr.rel (%p345) target = $region28
        $region27: #{tpu_custom_call.1} parent=11 // pred_region
          _
        $region28: #{tpu_custom_call.1} parent=11 // pred_fallthru
          _
        // Predicated region
        $region29: #{tpu_custom_call.1} parent=11 // pred_check
          %p348 = pneg %p246
        $region30: #{tpu_custom_call.1} parent=11 // pred_check_branch
          %350 = sbr.rel (%p348) target = $region32
        $region31: #{tpu_custom_call.1} parent=11 // pred_region
          _
        $region32: #{tpu_custom_call.1} parent=11 // pred_fallthru
          _
        // Predicated region
        $region33: #{tpu_custom_call.1} parent=11 // pred_check
          %p351 = pneg %p267
        $region34: #{tpu_custom_call.1} parent=11 // pred_check_branch
          %353 = sbr.rel (%p351) target = $region36
        $region35: #{tpu_custom_call.1} parent=11 // pred_region
          _
        $region36: #{tpu_custom_call.1} parent=11 // pred_fallthru
          _
      $region12: #{tpu_custom_call.1} parent=5 // pred_fallthru
        _
      %p354 = scmp.lt.s32.totalorder %s29, 4
      // Predicated region
      $region37: #{tpu_custom_call.1} parent=5 // pred_check
        %p355 = pneg %p354
      $region38: #{tpu_custom_call.1} parent=5 // pred_check_branch
        %357 = sbr.rel (%p355) target = $region40
      $region39: #{tpu_custom_call.1} parent=5 // pred_region
        // Predicated region
        $region41: #{tpu_custom_call.1} parent=39 // pred_check
          %p358 = pneg %p71
        $region42: #{tpu_custom_call.1} parent=39 // pred_check_branch
          %360 = sbr.rel (%p358) target = $region44
        $region43: #{tpu_custom_call.1} parent=39 // pred_region
          %s361 = sand.u32 %s61, 1
          %s362 = scalar_lea.sflag [#allocation4], %s361
          %s363 = sand.u32 %s61, 1
          %s364 = smul.addr %s363, 8
          %s365 = scalar_lea.vmem [#allocation3], %s364
          %s366 = smul.u32 %s37, 8
          %s367 = ssub.s32 %s366, 1
          %p368 = scmp.gt.s32.totalorder %s367, 0
          %s369 = scalar_select %p368, %s367, 0
          %s371 = ssub.s32 128, 128
          %372 = vsyncadd %s362, %s371
          %s373 = smul.addr %s369, 2
          %s374 = smul.addr %s36, 32
          %s375 = sadd.s32 %s373, %s374
          %s376 = smul.addr %s375, 64
          %s377 = scalar_lea.hbm %s0, %s376
          %s378 = sshll.u32 %s365, 4
          %s379 = int_to_ptr.vmem [resolvable:$true] %s378
          %384 = dma.hbm_to_vmem [thread:$0]  %s377, 128, %s379, %s362, 64, 64, 4
        $region44: #{tpu_custom_call.1} parent=39 // pred_fallthru
          _
        // Predicated region
        $region45: #{tpu_custom_call.1} parent=39 // pred_check
          %p385 = pneg %p99
        $region46: #{tpu_custom_call.1} parent=39 // pred_check_branch
          %387 = sbr.rel (%p385) target = $region48
        $region47: #{tpu_custom_call.1} parent=39 // pred_region
          %s388 = sand.u32 %s29, 1
          %s389 = scalar_lea.sflag [#allocation7], %s388
          %s390 = sand.u32 %s89, 1
          %s391 = smul.addr %s390, 64
          %s392 = scalar_lea.vmem [#allocation6], %s391
          %s393 = smul.u32 8, %s37
          %s395 = ssub.s32 1024, 1024
          %396 = vsyncadd %s389, %s395
          %s397 = smul.addr %s393, 2
          %s398 = smul.addr %s36, 32
          %s399 = sadd.s32 %s397, %s398
          %s400 = smul.addr %s399, 64
          %s401 = scalar_lea.hbm %s1, %s400
          %s402 = sshll.u32 %s392, 4
          %s403 = int_to_ptr.vmem [resolvable:$true] %s402
          %408 = dma.hbm_to_vmem [thread:$0]  %s401, 1024, %s403, %s389, 64, 64, 4
        $region48: #{tpu_custom_call.1} parent=39 // pred_fallthru
          _
        // Predicated region
        $region49: #{tpu_custom_call.1} parent=39 // pred_check
          %p409 = pneg %p135
        $region50: #{tpu_custom_call.1} parent=39 // pred_check_branch
          %411 = sbr.rel (%p409) target = $region52
        $region51: #{tpu_custom_call.1} parent=39 // pred_region
          %s412 = sand.u32 %s29, 1
          %s413 = scalar_lea.sflag [#allocation7], %s412
          %s414 = sand.u32 %s125, 1
          %s415 = smul.addr %s414, 8
          %s416 = scalar_lea.vmem [#allocation8], %s415
          %s417 = sadd.s32 %s37, 1
          %s418 = smul.u32 %s417, 8
          %p419 = scmp.lt.s32.totalorder %s418, 15
          %s420 = scalar_select %p419, %s418, 15
          %s422 = ssub.s32 128, 128
          %423 = vsyncadd %s413, %s422
          %s424 = smul.addr %s420, 2
          %s425 = smul.addr %s36, 32
          %s426 = sadd.s32 %s424, %s425
          %s427 = smul.addr %s426, 64
          %s428 = scalar_lea.hbm %s2, %s427
          %s429 = sshll.u32 %s416, 4
          %s430 = int_to_ptr.vmem [resolvable:$true] %s429
          %435 = dma.hbm_to_vmem [thread:$0]  %s428, 128, %s430, %s413, 64, 64, 4
        $region52: #{tpu_custom_call.1} parent=39 // pred_fallthru
          _
      $region40: #{tpu_custom_call.1} parent=5 // pred_fallthru
        _
      %p436 = scmp.le.s32.totalorder 1, %s29
      %p437 = scmp.lt.s32.totalorder %s29, 5
      %p438 = pnand %p436, %p437
      %p439 = pneg %p438
      // Predicated region
      $region53: #{tpu_custom_call.1} parent=5 // pred_check
        _
      $region54: #{tpu_custom_call.1} parent=5 // pred_check_branch
        %441 = sbr.rel (%p438) target = $region56
      $region55: #{tpu_custom_call.1} parent=5 // pred_region
        %s442 = ssub.s32 %s29, 1
        %s443 = sand.u32 %s64, 1
        %s444 = scalar_lea.sflag [#allocation4], %s443
        %s445 = sand.u32 %s64, 1
        %s446 = smul.addr %s445, 8
        %s447 = scalar_lea.vmem [#allocation3], %s446
        // Predicated region
        $region57: #{tpu_custom_call.1} parent=55 // pred_check
          %p448 = pneg %p77
        $region58: #{tpu_custom_call.1} parent=55 // pred_check_branch
          %450 = sbr.rel (%p448) target = $region60
        $region59: #{tpu_custom_call.1} parent=55 // pred_region
          %451 = dma.done %s444, 128
        $region60: #{tpu_custom_call.1} parent=55 // pred_fallthru
          _
        %s452 = sand.u32 %s34, 1
        %s453 = scalar_lea.sflag [#allocation7], %s452
        %s454 = sand.u32 %s92, 1
        %s455 = smul.addr %s454, 64
        %s456 = scalar_lea.vmem [#allocation6], %s455
        // Predicated region
        $region61: #{tpu_custom_call.1} parent=55 // pred_check
          %p457 = pneg %p105
        $region62: #{tpu_custom_call.1} parent=55 // pred_check_branch
          %459 = sbr.rel (%p457) target = $region64
        $region63: #{tpu_custom_call.1} parent=55 // pred_region
          %460 = dma.done %s453, 1024
        $region64: #{tpu_custom_call.1} parent=55 // pred_fallthru
          _
        %s461 = sand.u32 %s34, 1
        %s462 = scalar_lea.sflag [#allocation7], %s461
        %s463 = sand.u32 %s128, 1
        %s464 = smul.addr %s463, 8
        %s465 = scalar_lea.vmem [#allocation8], %s464
        // Predicated region
        $region65: #{tpu_custom_call.1} parent=55 // pred_check
          %p466 = pneg %p141
        $region66: #{tpu_custom_call.1} parent=55 // pred_check_branch
          %468 = sbr.rel (%p466) target = $region68
        $region67: #{tpu_custom_call.1} parent=55 // pred_region
          %469 = dma.done %s462, 128
        $region68: #{tpu_custom_call.1} parent=55 // pred_fallthru
          _
        %s470 = sand.u32 %s64, 1
        %s471 = scalar_lea.sflag [#allocation4], %s470
        %s472 = sand.u32 %s64, 1
        %s473 = smul.addr %s472, 8
        %s474 = scalar_lea.vmem [#allocation3], %s473
        %p475 = pneg %p77
        %p476 = pneg %p74
        %s477 = sand.u32 %s34, 1
        %s478 = scalar_lea.sflag [#allocation7], %s477
        %s479 = sand.u32 %s92, 1
        %s480 = smul.addr %s479, 64
        %s481 = scalar_lea.vmem [#allocation6], %s480
        %p482 = pneg %p105
        %p483 = pneg %p102
        %s484 = sand.u32 %s34, 1
        %s485 = scalar_lea.sflag [#allocation7], %s484
        %s486 = sand.u32 %s128, 1
        %s487 = smul.addr %s486, 8
        %s488 = scalar_lea.vmem [#allocation8], %s487
        %p489 = pneg %p141
        %p490 = pneg %p138
        %p491 = pneg %p162
        %p492 = pneg %p159
        %p493 = pneg %p183
        %p494 = pneg %p180
        %p495 = pneg %p204
        %p496 = pneg %p201
        %p497 = pneg %p225
        %p498 = pneg %p222
        %p499 = pneg %p246
        %p500 = pneg %p243
        %p501 = pneg %p267
        %p502 = pneg %p264
        %p503 = pneg %p295
        %p504 = pneg %p292
        %s505 = sand.u32 %s282, 1
        %s506 = scalar_lea.sflag [#allocation5], %s505
        %s507 = sand.u32 %s282, 1
        %s508 = smul.addr %s507, 64
        %s509 = scalar_lea.vmem [#allocation9], %s508
        %p510 = pneg %p321
        %p511 = pneg %p318
        %s512 = sand.u32 %s308, 1
        %s513 = scalar_lea.sflag [#allocation11], %s512
        %s514 = sand.u32 %s308, 1
        %s515 = scalar_lea.vmem [#allocation10], %s514
        %s516 = smul.u32 %s39, 8
        %s517 = ssub.s32 %s516, 1
        %p518 = scmp.gt.s32.totalorder %s517, 0
        %s519 = scalar_select %p518, %s517, 0
        %s520 = smul.u32 8, %s39
        %s521 = sadd.s32 %s39, 1
        %s522 = smul.u32 %s521, 8
        %p523 = scmp.lt.s32.totalorder %s522, 15
        %s524 = scalar_select %p523, %s522, 15
        %s525 = smul.u32 8, %s39
        %v527 = vld [vmem:[%s447] sm:$0xf]
        %v528 = vld [vmem:[%s447 + $0x4] sm:$0xf]
        %v529 = vld [vmem:[%s456] sm:$0xf]
        %v530 = vld [vmem:[%s456 + $0x4] sm:$0xf]
        %v531 = vld [vmem:[%s456 + $0x8] sm:$0xf]
        %v532 = vld [vmem:[%s456 + $0xc] sm:$0xf]
        %v533 = vld [vmem:[%s456 + $0x10] sm:$0xf]
        %v534 = vld [vmem:[%s456 + $0x14] sm:$0xf]
        %v535 = vld [vmem:[%s456 + $0x18] sm:$0xf]
        %v536 = vld [vmem:[%s456 + $0x1c] sm:$0xf]
        %v537 = vld [vmem:[%s456 + $0x20] sm:$0xf]
        %v538 = vld [vmem:[%s456 + $0x24] sm:$0xf]
        %v539 = vld [vmem:[%s456 + $0x28] sm:$0xf]
        %v540 = vld [vmem:[%s456 + $0x2c] sm:$0xf]
        %v541 = vld [vmem:[%s456 + $0x30] sm:$0xf]
        %v542 = vld [vmem:[%s456 + $0x34] sm:$0xf]
        %v543 = vld [vmem:[%s456 + $0x38] sm:$0xf]
        %v544 = vld [vmem:[%s456 + $0x3c] sm:$0xf]
        %v545 = vld [vmem:[%s465] sm:$0xf]
        %v546 = vld [vmem:[%s465 + $0x4] sm:$0xf]
        %v547 = vld [vmem:[%s3] sm:$0xf]
        %v548 = vld [vmem:[%s3 + $0x4] sm:$0xf]
        %v549 = vld [vmem:[%s4] sm:$0x1]
        %v551 = vlaneseq
        %v552 = vshrl.u32 %v551, 7
        %v553 = vsub.s32 0, %v552
        %v554 = vrot.slane %v549, %v553
        %v576 = vunpack.c.l.b16 %v527
        %v577 = vunpack.c.l.b16 %v528
        %v578 = vunpack.c.l.b16 %v529
        %v579 = vunpack.c.l.b16 %v530
        %v580 = vunpack.c.l.b16 %v531
        %v581 = vunpack.c.l.b16 %v532
        %v582 = vunpack.c.l.b16 %v533
        %v583 = vunpack.c.l.b16 %v534
        %v584 = vunpack.c.l.b16 %v535
        %v585 = vunpack.c.l.b16 %v536
        %v586 = vunpack.c.l.b16 %v537
        %v587 = vunpack.c.l.b16 %v538
        %v588 = vunpack.c.l.b16 %v539
        %v589 = vunpack.c.l.b16 %v540
        %v590 = vunpack.c.l.b16 %v541
        %v591 = vunpack.c.l.b16 %v542
        %v592 = vunpack.c.l.b16 %v543
        %v593 = vunpack.c.l.b16 %v544
        %v594 = vunpack.c.l.b16 %v545
        %v595 = vunpack.c.l.b16 %v546
        %v596 = vpack.c.b16 %v577, %v576
        %v597 = vpack.c.b16 %v579, %v578
        %v598 = vpack.c.b16 %v581, %v580
        %v599 = vpack.c.b16 %v583, %v582
        %v600 = vpack.c.b16 %v585, %v584
        %v601 = vpack.c.b16 %v587, %v586
        %v602 = vpack.c.b16 %v589, %v588
        %v603 = vpack.c.b16 %v591, %v590
        %v604 = vpack.c.b16 %v593, %v592
        %v605 = vpack.c.b16 %v595, %v594
        %v608 = vunpack.c.l.b16 %v547
        %v609 = vunpack.c.l.b16 %v548
        %v610 = vpack.c.b16 %v609, %v608
        %vm612 = vcmask 130048
        %v614 = vsel %vm612, %v596, 0
        %v617 = vsel %vm612, %v597, 0
        %v620 = vsel %vm612, %v598, 0
        %v623 = vsel %vm612, %v599, 0
        %v626 = vsel %vm612, %v600, 0
        %v629 = vsel %vm612, %v601, 0
        %v632 = vsel %vm612, %v602, 0
        %v635 = vsel %vm612, %v603, 0
        %v638 = vsel %vm612, %v604, 0
        %v641 = vsel %vm612, %v605, 0
        %643 = vmatprep.subr.bf16.mxu0 0
        %644 = vmatpush1.bf16.msra.mxu0 %v610
        %645 = vmatprep.subr.bf16.mxu0 0
        %646 = vmatpush1.bf16.msra.mxu0 0
        %647 = vmatprep.subr.bf16.mxu0 0
        %648 = vmatpush1.bf16.msra.mxu0 0
        %649 = vmatprep.subr.bf16.mxu0 0
        %650 = vmatpush1.bf16.msra.mxu0 0
        %651 = vmatprep.subr.bf16.mxu0 0
        %652 = vmatpush1.bf16.msra.mxu0 0
        %653 = vmatprep.subr.bf16.mxu0 0
        %654 = vmatpush1.bf16.msra.mxu0 0
        %655 = vmatprep.subr.bf16.mxu0 0
        %656 = vmatpush1.bf16.msra.mxu0 0
        %657 = vmatprep.subr.bf16.mxu0 0
        %658 = vmatpush1.bf16.msra.mxu0 0
        %659 = vmatprep.subr.bf16.mxu0 0
        %660 = vmatpush1.bf16.msra.mxu0 0
        %661 = vmatprep.subr.bf16.mxu0 0
        %662 = vmatpush1.bf16.msra.mxu0 0
        %663 = vmatprep.subr.bf16.mxu0 0
        %664 = vmatpush1.bf16.msra.mxu0 0
        %665 = vmatprep.subr.bf16.mxu0 0
        %666 = vmatpush1.bf16.msra.mxu0 0
        %667 = vmatprep.subr.bf16.mxu0 0
        %668 = vmatpush1.bf16.msra.mxu0 0
        %669 = vmatprep.subr.bf16.mxu0 0
        %670 = vmatpush1.bf16.msra.mxu0 0
        %671 = vmatprep.subr.bf16.mxu0 0
        %672 = vmatpush1.bf16.msra.mxu0 0
        %673 = vmatprep.subr.bf16.mxu0 0
        %674 = vmatpush1.bf16.msra.mxu0 0
        %675 = vmatprep.mubr.bf16.mxu0 0
        %676 = vmatmul.mubr.bf16.gmra.mrb[0].mxu0 %v614
        %v677 = vpop.f32.mrb[0].mxu0
        %v678 = vadd.f32 %v554, %v677
        %v679 = vpop.f32.mrb[0].mxu0
        %v680 = vpop.f32.mrb[0].mxu0
        %v681 = vadd.f32 %v554, %v680
        %v682 = vpop.f32.mrb[0].mxu0
        %683 = vmatprep.mubr.bf16.mxu0 0
        %684 = vmatmul.mubr.bf16.gmra.mrb[0].mxu0 %v617
        %v685 = vpop.f32.mrb[0].mxu0
        %v686 = vadd.f32 %v554, %v685
        %v687 = vpop.f32.mrb[0].mxu0
        %v688 = vpop.f32.mrb[0].mxu0
        %v689 = vadd.f32 %v554, %v688
        %v690 = vpop.f32.mrb[0].mxu0
        %691 = vmatprep.mubr.bf16.mxu0 0
        %692 = vmatmul.mubr.bf16.gmra.mrb[0].mxu0 %v620
        %v693 = vpop.f32.mrb[0].mxu0
        %v694 = vadd.f32 %v554, %v693
        %v695 = vpop.f32.mrb[0].mxu0
        %v696 = vpop.f32.mrb[0].mxu0
        %v697 = vadd.f32 %v554, %v696
        %v698 = vpop.f32.mrb[0].mxu0
        %699 = vmatprep.mubr.bf16.mxu0 0
        %700 = vmatmul.mubr.bf16.gmra.mrb[0].mxu0 %v623
        %v701 = vpop.f32.mrb[0].mxu0
        %v702 = vadd.f32 %v554, %v701
        %v703 = vpop.f32.mrb[0].mxu0
        %v704 = vpop.f32.mrb[0].mxu0
        %v705 = vadd.f32 %v554, %v704
        %v706 = vpop.f32.mrb[0].mxu0
        %707 = vmatprep.mubr.bf16.mxu0 0
        %708 = vmatmul.mubr.bf16.gmra.mrb[0].mxu0 %v626
        %v709 = vpop.f32.mrb[0].mxu0
        %v710 = vadd.f32 %v554, %v709
        %v711 = vpop.f32.mrb[0].mxu0
        %v712 = vpop.f32.mrb[0].mxu0
        %v713 = vadd.f32 %v554, %v712
        %v714 = vpop.f32.mrb[0].mxu0
        %715 = vmatprep.mubr.bf16.mxu0 0
        %716 = vmatmul.mubr.bf16.gmra.mrb[0].mxu0 %v629
        %v717 = vpop.f32.mrb[0].mxu0
        %v718 = vadd.f32 %v554, %v717
        %v719 = vpop.f32.mrb[0].mxu0
        %v720 = vpop.f32.mrb[0].mxu0
        %v721 = vadd.f32 %v554, %v720
        %v722 = vpop.f32.mrb[0].mxu0
        %723 = vmatprep.mubr.bf16.mxu0 0
        %724 = vmatmul.mubr.bf16.gmra.mrb[0].mxu0 %v632
        %v725 = vpop.f32.mrb[0].mxu0
        %v726 = vadd.f32 %v554, %v725
        %v727 = vpop.f32.mrb[0].mxu0
        %v728 = vpop.f32.mrb[0].mxu0
        %v729 = vadd.f32 %v554, %v728
        %v730 = vpop.f32.mrb[0].mxu0
        %731 = vmatprep.mubr.bf16.mxu0 0
        %732 = vmatmul.mubr.bf16.gmra.mrb[0].mxu0 %v635
        %v733 = vpop.f32.mrb[0].mxu0
        %v734 = vadd.f32 %v554, %v733
        %v735 = vpop.f32.mrb[0].mxu0
        %v736 = vpop.f32.mrb[0].mxu0
        %v737 = vadd.f32 %v554, %v736
        %v738 = vpop.f32.mrb[0].mxu0
        %739 = vmatprep.mubr.bf16.mxu0 0
        %740 = vmatmul.mubr.bf16.gmra.mrb[0].mxu0 %v638
        %v741 = vpop.f32.mrb[0].mxu0
        %v742 = vadd.f32 %v554, %v741
        %v743 = vpop.f32.mrb[0].mxu0
        %v744 = vpop.f32.mrb[0].mxu0
        %v745 = vadd.f32 %v554, %v744
        %v746 = vpop.f32.mrb[0].mxu0
        %747 = vmatprep.mubr.bf16.mxu0 0
        %748 = vmatmul.mubr.bf16.gmra.mrb[0].mxu0 %v641
        %v749 = vpop.f32.mrb[0].mxu0
        %v750 = vadd.f32 %v554, %v749
        %v751 = vpop.f32.mrb[0].mxu0
        %v752 = vpop.f32.mrb[0].mxu0
        %v753 = vadd.f32 %v554, %v752
        %v754 = vpop.f32.mrb[0].mxu0
        %755 = vdwg.mxu0
        %v756 = vmax.f32 %v678, 0.0
        %v757 = vmax.f32 %v681, 0.0
        %v758 = vmax.f32 %v686, 0.0
        %v759 = vmax.f32 %v689, 0.0
        %v760 = vmax.f32 %v694, 0.0
        %v761 = vmax.f32 %v697, 0.0
        %v762 = vmax.f32 %v702, 0.0
        %v763 = vmax.f32 %v705, 0.0
        %v764 = vmax.f32 %v710, 0.0
        %v765 = vmax.f32 %v713, 0.0
        %v766 = vmax.f32 %v718, 0.0
        %v767 = vmax.f32 %v721, 0.0
        %v768 = vmax.f32 %v726, 0.0
        %v769 = vmax.f32 %v729, 0.0
        %v770 = vmax.f32 %v734, 0.0
        %v771 = vmax.f32 %v737, 0.0
        %v772 = vmax.f32 %v742, 0.0
        %v773 = vmax.f32 %v745, 0.0
        %v774 = vmax.f32 %v750, 0.0
        %v775 = vmax.f32 %v753, 0.0
        %p776 = scmp.gt.s32.totalorder %s39, 0
        %s777 = scalar_select %p776, 1, 0
        %s778 = scvt.s32.f32 %s777
        %p779 = scmp.lt.s32.totalorder %s39, 1
        %s780 = scalar_select %p779, 1, 0
        %s781 = scvt.s32.f32 %s780
        %vm782 = vcmask 27648
        %783 = vst.msk [vmem:[#allocation2] sm:$0xf] %vm782, 0
        %784 = vst.msk [vmem:[#allocation2 + $0x4] sm:$0xf] %vm782, 0
        %vm785 = vcmask 24576
        %786 = vst.msk [vmem:[#allocation2 + $0x8] sm:$0x1] %vm785, 0
        %787 = vst.msk [vmem:[#allocation2 + $0xc] sm:$0xf] %vm782, 0
        %788 = vst.msk [vmem:[#allocation2 + $0x10] sm:$0xf] %vm782, 0
        %789 = vst.msk [vmem:[#allocation2 + $0x14] sm:$0x1] %vm785, 0
        %790 = vst.msk [vmem:[#allocation2 + $0x18] sm:$0xf] %vm782, 0
        %791 = vst.msk [vmem:[#allocation2 + $0x1c] sm:$0xf] %vm782, 0
        %792 = vst.msk [vmem:[#allocation2 + $0x20] sm:$0x1] %vm785, 0
        %793 = vst.msk [vmem:[#allocation2 + $0x24] sm:$0xf] %vm782, 0
        %794 = vst.msk [vmem:[#allocation2 + $0x28] sm:$0xf] %vm782, 0
        %795 = vst.msk [vmem:[#allocation2 + $0x2c] sm:$0x1] %vm785, 0
        %796 = vst.msk [vmem:[#allocation2 + $0x30] sm:$0xf] %vm782, 0
        %797 = vst.msk [vmem:[#allocation2 + $0x34] sm:$0xf] %vm782, 0
        %798 = vst.msk [vmem:[#allocation2 + $0x38] sm:$0x1] %vm785, 0
        %799 = vst.msk [vmem:[#allocation2 + $0x3c] sm:$0xf] %vm782, 0
        %800 = vst.msk [vmem:[#allocation2 + $0x40] sm:$0xf] %vm782, 0
        %801 = vst.msk [vmem:[#allocation2 + $0x44] sm:$0x1] %vm785, 0
        %802 = vst.msk [vmem:[#allocation2 + $0x48] sm:$0xf] %vm782, 0
        %803 = vst.msk [vmem:[#allocation2 + $0x4c] sm:$0xf] %vm782, 0
        %804 = vst.msk [vmem:[#allocation2 + $0x50] sm:$0x1] %vm785, 0
        %805 = vst.msk [vmem:[#allocation2 + $0x54] sm:$0xf] %vm782, 0
        %806 = vst.msk [vmem:[#allocation2 + $0x58] sm:$0xf] %vm782, 0
        %807 = vst.msk [vmem:[#allocation2 + $0x5c] sm:$0x1] %vm785, 0
        %808 = vst.msk [vmem:[#allocation2 + $0x60] sm:$0xf] %vm782, 0
        %809 = vst.msk [vmem:[#allocation2 + $0x64] sm:$0xf] %vm782, 0
        %810 = vst.msk [vmem:[#allocation2 + $0x68] sm:$0x1] %vm785, 0
        %811 = vst.msk [vmem:[#allocation2 + $0x6c] sm:$0xf] %vm782, 0
        %812 = vst.msk [vmem:[#allocation2 + $0x70] sm:$0xf] %vm782, 0
        %813 = vst.msk [vmem:[#allocation2 + $0x74] sm:$0x1] %vm785, 0
        %v814 = vstv %s778
        %v815 = vmul.f32 %v756, %v814
        %v816 = vmul.f32 %v757, %v814
        %v817 = vpack.c.bf16 %v816, %v815
        %v819 = vunpack.c.l.b16 %v817
        %v820 = vunpack.c.h.b16 %v817
        %v821 = vpack.c.b16 %v819, %v819
        %v822 = vpack.c.b16 %v820, %v820
        %vm823 = vsmask.f32 256
        %vm824 = vsmask.f32 4368
        %vm825 = vmor %vm823, %vm824
        %v827 = vshrl.u32 %v821, 16
        %v829 = vrot.slane %v827, 7
        %v830 = vshll.u32 %v821, 16
        %v832 = vor.u32 %v829, %v830
        %v833 = vrot.slane %v829, 4
        %v835 = vshrl.u32 %v822, 16
        %v837 = vrot.slane %v835, 7
        %v838 = vshll.u32 %v822, 16
        %v840 = vor.u32 %v837, %v838
        %v841 = vsel %vm825, %v833, %v840
        %v842 = vrot.slane %v837, 4
        %vm846 = vcmask 27648
        %vm847 = vsmask.f32 7938
        %vm848 = vmand %vm846, %vm847
        %v849 = vld [vmem:[#allocation2] sm:$0xf]
        %v850 = vsel %vm848, %v832, %v849
        %851 = vst [vmem:[#allocation2] sm:$0xf] %v850
        %852 = vst.msk [vmem:[#allocation2 + $0x4] sm:$0xf] %vm782, %v841
        %vm853 = vcmask 24576
        %vm854 = vmand %vm853, %vm823
        %v855 = vld [vmem:[#allocation2 + $0x8] sm:$0x1]
        %v856 = vsel %vm854, %v842, %v855
        %857 = vst [vmem:[#allocation2 + $0x8] sm:$0x1] %v856
        %v858 = vpack.c.bf16 %v759, %v758
        %v859 = vpack.c.bf16 %v761, %v760
        %v860 = vpack.c.bf16 %v763, %v762
        %v861 = vpack.c.bf16 %v765, %v764
        %v862 = vpack.c.bf16 %v767, %v766
        %v863 = vpack.c.bf16 %v769, %v768
        %v864 = vpack.c.bf16 %v771, %v770
        %v865 = vpack.c.bf16 %v773, %v772
        %v874 = vunpack.c.l.b16 %v858
        %v875 = vunpack.c.h.b16 %v858
        %v876 = vunpack.c.l.b16 %v859
        %v877 = vunpack.c.h.b16 %v859
        %v878 = vunpack.c.l.b16 %v860
        %v879 = vunpack.c.h.b16 %v860
        %v880 = vunpack.c.l.b16 %v861
        %v881 = vunpack.c.h.b16 %v861
        %v882 = vunpack.c.l.b16 %v862
        %v883 = vunpack.c.h.b16 %v862
        %v884 = vunpack.c.l.b16 %v863
        %v885 = vunpack.c.h.b16 %v863
        %v886 = vunpack.c.l.b16 %v864
        %v887 = vunpack.c.h.b16 %v864
        %v888 = vunpack.c.l.b16 %v865
        %v889 = vunpack.c.h.b16 %v865
        %v890 = vpack.c.b16 %v874, %v874
        %v891 = vpack.c.b16 %v875, %v875
        %v892 = vpack.c.b16 %v876, %v876
        %v893 = vpack.c.b16 %v877, %v877
        %v894 = vpack.c.b16 %v878, %v878
        %v895 = vpack.c.b16 %v879, %v879
        %v896 = vpack.c.b16 %v880, %v880
        %v897 = vpack.c.b16 %v881, %v881
        %v898 = vpack.c.b16 %v882, %v882
        %v899 = vpack.c.b16 %v883, %v883
        %v900 = vpack.c.b16 %v884, %v884
        %v901 = vpack.c.b16 %v885, %v885
        %v902 = vpack.c.b16 %v886, %v886
        %v903 = vpack.c.b16 %v887, %v887
        %v904 = vpack.c.b16 %v888, %v888
        %v905 = vpack.c.b16 %v889, %v889
        %v907 = vshrl.u32 %v890, 16
        %v909 = vrot.slane %v907, 7
        %v910 = vshll.u32 %v890, 16
        %v912 = vor.u32 %v909, %v910
        %v913 = vrot.slane %v909, 4
        %v915 = vshrl.u32 %v891, 16
        %v917 = vrot.slane %v915, 7
        %v918 = vshll.u32 %v891, 16
        %v920 = vor.u32 %v917, %v918
        %v921 = vsel %vm825, %v913, %v920
        %v922 = vrot.slane %v917, 4
        %v924 = vshrl.u32 %v892, 16
        %v926 = vrot.slane %v924, 7
        %v927 = vshll.u32 %v892, 16
        %v929 = vor.u32 %v926, %v927
        %v930 = vrot.slane %v926, 4
        %v932 = vshrl.u32 %v893, 16
        %v934 = vrot.slane %v932, 7
        %v935 = vshll.u32 %v893, 16
        %v937 = vor.u32 %v934, %v935
        %v938 = vsel %vm825, %v930, %v937
        %v939 = vrot.slane %v934, 4
        %v941 = vshrl.u32 %v894, 16
        %v943 = vrot.slane %v941, 7
        %v944 = vshll.u32 %v894, 16
        %v946 = vor.u32 %v943, %v944
        %v947 = vrot.slane %v943, 4
        %v949 = vshrl.u32 %v895, 16
        %v951 = vrot.slane %v949, 7
        %v952 = vshll.u32 %v895, 16
        %v954 = vor.u32 %v951, %v952
        %v955 = vsel %vm825, %v947, %v954
        %v956 = vrot.slane %v951, 4
        %v958 = vshrl.u32 %v896, 16
        %v960 = vrot.slane %v958, 7
        %v961 = vshll.u32 %v896, 16
        %v963 = vor.u32 %v960, %v961
        %v964 = vrot.slane %v960, 4
        %v966 = vshrl.u32 %v897, 16
        %v968 = vrot.slane %v966, 7
        %v969 = vshll.u32 %v897, 16
        %v971 = vor.u32 %v968, %v969
        %v972 = vsel %vm825, %v964, %v971
        %v973 = vrot.slane %v968, 4
        %v975 = vshrl.u32 %v898, 16
        %v977 = vrot.slane %v975, 7
        %v978 = vshll.u32 %v898, 16
        %v980 = vor.u32 %v977, %v978
        %v981 = vrot.slane %v977, 4
        %v983 = vshrl.u32 %v899, 16
        %v985 = vrot.slane %v983, 7
        %v986 = vshll.u32 %v899, 16
        %v988 = vor.u32 %v985, %v986
        %v989 = vsel %vm825, %v981, %v988
        %v990 = vrot.slane %v985, 4
        %v992 = vshrl.u32 %v900, 16
        %v994 = vrot.slane %v992, 7
        %v995 = vshll.u32 %v900, 16
        %v997 = vor.u32 %v994, %v995
        %v998 = vrot.slane %v994, 4
        %v1000 = vshrl.u32 %v901, 16
        %v1002 = vrot.slane %v1000, 7
        %v1003 = vshll.u32 %v901, 16
        %v1005 = vor.u32 %v1002, %v1003
        %v1006 = vsel %vm825, %v998, %v1005
        %v1007 = vrot.slane %v1002, 4
        %v1009 = vshrl.u32 %v902, 16
        %v1011 = vrot.slane %v1009, 7
        %v1012 = vshll.u32 %v902, 16
        %v1014 = vor.u32 %v1011, %v1012
        %v1015 = vrot.slane %v1011, 4
        %v1017 = vshrl.u32 %v903, 16
        %v1019 = vrot.slane %v1017, 7
        %v1020 = vshll.u32 %v903, 16
        %v1022 = vor.u32 %v1019, %v1020
        %v1023 = vsel %vm825, %v1015, %v1022
        %v1024 = vrot.slane %v1019, 4
        %v1026 = vshrl.u32 %v904, 16
        %v1028 = vrot.slane %v1026, 7
        %v1029 = vshll.u32 %v904, 16
        %v1031 = vor.u32 %v1028, %v1029
        %v1032 = vrot.slane %v1028, 4
        %v1034 = vshrl.u32 %v905, 16
        %v1036 = vrot.slane %v1034, 7
        %v1037 = vshll.u32 %v905, 16
        %v1039 = vor.u32 %v1036, %v1037
        %v1040 = vsel %vm825, %v1032, %v1039
        %v1041 = vrot.slane %v1036, 4
        %s1066 = scalar_lea.vmem [#allocation2], 12
        %v1067 = vld [vmem:[%s1066] sm:$0xf]
        %v1068 = vsel %vm848, %v912, %v1067
        %1069 = vst [vmem:[%s1066] sm:$0xf] %v1068
        %1070 = vst.msk [vmem:[%s1066 + $0x4] sm:$0xf] %vm782, %v921
        %v1071 = vld [vmem:[%s1066 + $0x8] sm:$0x1]
        %v1072 = vsel %vm854, %v922, %v1071
        %1073 = vst [vmem:[%s1066 + $0x8] sm:$0x1] %v1072
        %v1074 = vld [vmem:[%s1066 + $0xc] sm:$0xf]
        %v1075 = vsel %vm848, %v929, %v1074
        %1076 = vst [vmem:[%s1066 + $0xc] sm:$0xf] %v1075
        %1077 = vst.msk [vmem:[%s1066 + $0x10] sm:$0xf] %vm782, %v938
        %v1078 = vld [vmem:[%s1066 + $0x14] sm:$0x1]
        %v1079 = vsel %vm854, %v939, %v1078
        %1080 = vst [vmem:[%s1066 + $0x14] sm:$0x1] %v1079
        %v1081 = vld [vmem:[%s1066 + $0x18] sm:$0xf]
        %v1082 = vsel %vm848, %v946, %v1081
        %1083 = vst [vmem:[%s1066 + $0x18] sm:$0xf] %v1082
        %1084 = vst.msk [vmem:[%s1066 + $0x1c] sm:$0xf] %vm782, %v955
        %v1085 = vld [vmem:[%s1066 + $0x20] sm:$0x1]
        %v1086 = vsel %vm854, %v956, %v1085
        %1087 = vst [vmem:[%s1066 + $0x20] sm:$0x1] %v1086
        %v1088 = vld [vmem:[%s1066 + $0x24] sm:$0xf]
        %v1089 = vsel %vm848, %v963, %v1088
        %1090 = vst [vmem:[%s1066 + $0x24] sm:$0xf] %v1089
        %1091 = vst.msk [vmem:[%s1066 + $0x28] sm:$0xf] %vm782, %v972
        %v1092 = vld [vmem:[%s1066 + $0x2c] sm:$0x1]
        %v1093 = vsel %vm854, %v973, %v1092
        %1094 = vst [vmem:[%s1066 + $0x2c] sm:$0x1] %v1093
        %v1095 = vld [vmem:[%s1066 + $0x30] sm:$0xf]
        %v1096 = vsel %vm848, %v980, %v1095
        %1097 = vst [vmem:[%s1066 + $0x30] sm:$0xf] %v1096
        %1098 = vst.msk [vmem:[%s1066 + $0x34] sm:$0xf] %vm782, %v989
        %v1099 = vld [vmem:[%s1066 + $0x38] sm:$0x1]
        %v1100 = vsel %vm854, %v990, %v1099
        %1101 = vst [vmem:[%s1066 + $0x38] sm:$0x1] %v1100
        %v1102 = vld [vmem:[%s1066 + $0x3c] sm:$0xf]
        %v1103 = vsel %vm848, %v997, %v1102
        %1104 = vst [vmem:[%s1066 + $0x3c] sm:$0xf] %v1103
        %1105 = vst.msk [vmem:[%s1066 + $0x40] sm:$0xf] %vm782, %v1006
        %v1106 = vld [vmem:[%s1066 + $0x44] sm:$0x1]
        %v1107 = vsel %vm854, %v1007, %v1106
        %1108 = vst [vmem:[%s1066 + $0x44] sm:$0x1] %v1107
        %v1109 = vld [vmem:[%s1066 + $0x48] sm:$0xf]
        %v1110 = vsel %vm848, %v1014, %v1109
        %1111 = vst [vmem:[%s1066 + $0x48] sm:$0xf] %v1110
        %1112 = vst.msk [vmem:[%s1066 + $0x4c] sm:$0xf] %vm782, %v1023
        %v1113 = vld [vmem:[%s1066 + $0x50] sm:$0x1]
        %v1114 = vsel %vm854, %v1024, %v1113
        %1115 = vst [vmem:[%s1066 + $0x50] sm:$0x1] %v1114
        %v1116 = vld [vmem:[%s1066 + $0x54] sm:$0xf]
        %v1117 = vsel %vm848, %v1031, %v1116
        %1118 = vst [vmem:[%s1066 + $0x54] sm:$0xf] %v1117
        %1119 = vst.msk [vmem:[%s1066 + $0x58] sm:$0xf] %vm782, %v1040
        %v1120 = vld [vmem:[%s1066 + $0x5c] sm:$0x1]
        %v1121 = vsel %vm854, %v1041, %v1120
        %1122 = vst [vmem:[%s1066 + $0x5c] sm:$0x1] %v1121
        %v1123 = vstv %s781
        %v1124 = vmul.f32 %v774, %v1123
        %v1125 = vmul.f32 %v775, %v1123
        %v1126 = vpack.c.bf16 %v1125, %v1124
        %v1128 = vunpack.c.l.b16 %v1126
        %v1129 = vunpack.c.h.b16 %v1126
        %v1130 = vpack.c.b16 %v1128, %v1128
        %v1131 = vpack.c.b16 %v1129, %v1129
        %v1133 = vshrl.u32 %v1130, 16
        %v1135 = vrot.slane %v1133, 7
        %v1136 = vshll.u32 %v1130, 16
        %v1138 = vor.u32 %v1135, %v1136
        %v1139 = vrot.slane %v1135, 4
        %v1141 = vshrl.u32 %v1131, 16
        %v1143 = vrot.slane %v1141, 7
        %v1144 = vshll.u32 %v1131, 16
        %v1146 = vor.u32 %v1143, %v1144
        %v1147 = vsel %vm825, %v1139, %v1146
        %v1148 = vrot.slane %v1143, 4
        %s1152 = scalar_lea.vmem [#allocation2], 108
        %v1153 = vld [vmem:[%s1152] sm:$0xf]
        %v1154 = vsel %vm848, %v1138, %v1153
        %1155 = vst [vmem:[%s1152] sm:$0xf] %v1154
        %1156 = vst.msk [vmem:[%s1152 + $0x4] sm:$0xf] %vm782, %v1147
        %v1157 = vld [vmem:[%s1152 + $0x8] sm:$0x1]
        %v1158 = vsel %vm854, %v1148, %v1157
        %1159 = vst [vmem:[%s1152 + $0x8] sm:$0x1] %v1158
        %v1160 = vld [vmem:[#allocation2] sm:$0xf]
        %v1161 = vld [vmem:[#allocation2 + $0x4] sm:$0xf]
        %v1162 = vld [vmem:[#allocation2 + $0xc] sm:$0xf]
        %v1163 = vld [vmem:[#allocation2 + $0x10] sm:$0xf]
        %v1164 = vld [vmem:[#allocation2 + $0x18] sm:$0xf]
        %v1165 = vld [vmem:[#allocation2 + $0x1c] sm:$0xf]
        %v1166 = vld [vmem:[#allocation2 + $0x24] sm:$0xf]
        %v1167 = vld [vmem:[#allocation2 + $0x28] sm:$0xf]
        %v1168 = vld [vmem:[#allocation2 + $0x30] sm:$0xf]
        %v1169 = vld [vmem:[#allocation2 + $0x34] sm:$0xf]
        %v1170 = vld [vmem:[#allocation2 + $0x3c] sm:$0xf]
        %v1171 = vld [vmem:[#allocation2 + $0x40] sm:$0xf]
        %v1172 = vld [vmem:[#allocation2 + $0x48] sm:$0xf]
        %v1173 = vld [vmem:[#allocation2 + $0x4c] sm:$0xf]
        %v1174 = vld [vmem:[#allocation2 + $0x54] sm:$0xf]
        %v1175 = vld [vmem:[#allocation2 + $0x58] sm:$0xf]
        %v1176 = vld [vmem:[%s5] sm:$0x3]
        %v1177 = vld [vmem:[#allocation2 + $0x8] sm:$0x1]
        %v1178 = vld [vmem:[#allocation2 + $0x14] sm:$0x1]
        %v1179 = vld [vmem:[#allocation2 + $0x20] sm:$0x1]
        %v1180 = vld [vmem:[#allocation2 + $0x2c] sm:$0x1]
        %v1181 = vld [vmem:[#allocation2 + $0x38] sm:$0x1]
        %v1182 = vld [vmem:[#allocation2 + $0x44] sm:$0x1]
        %v1183 = vld [vmem:[#allocation2 + $0x50] sm:$0x1]
        %v1184 = vld [vmem:[#allocation2 + $0x5c] sm:$0x1]
        %vm1185 = vsmask.f32 3328
        %vm1186 = vsmask.f32 7440
        %vm1187 = vmor %vm1185, %vm1186
        %v1189 = vshrl.u32 %v1160, 16
        %v1191 = vrot.slane %v1189, 4
        %v1192 = vshll.u32 %v1160, 16
        %v1194 = vrot.slane %v1192, 5
        %v1195 = vor.u32 %v1191, %v1194
        %v1196 = vrot.slane %v1195, 4
        %v1198 = vshll.u32 %v1161, 16
        %v1200 = vrot.slane %v1198, 5
        %v1201 = vsel %vm1187, %v1196, %v1200
        %v1202 = vshrl.u32 %v1161, 16
        %v1204 = vrot.slane %v1202, 4
        %v1205 = vor.u32 %v1204, %v1200
        %v1206 = vrot.slane %v1205, 4
        %v1208 = vshll.u32 %v1177, 16
        %v1210 = vrot.slane %v1208, 5
        %v1211 = vsel %vm1187, %v1206, %v1210
        %v1213 = vshrl.u32 %v1162, 16
        %v1215 = vrot.slane %v1213, 4
        %v1216 = vshll.u32 %v1162, 16
        %v1218 = vrot.slane %v1216, 5
        %v1219 = vor.u32 %v1215, %v1218
        %v1220 = vrot.slane %v1219, 4
        %v1222 = vshll.u32 %v1163, 16
        %v1224 = vrot.slane %v1222, 5
        %v1225 = vsel %vm1187, %v1220, %v1224
        %v1226 = vshrl.u32 %v1163, 16
        %v1228 = vrot.slane %v1226, 4
        %v1229 = vor.u32 %v1228, %v1224
        %v1230 = vrot.slane %v1229, 4
        %v1232 = vshll.u32 %v1178, 16
        %v1234 = vrot.slane %v1232, 5
        %v1235 = vsel %vm1187, %v1230, %v1234
        %v1237 = vshrl.u32 %v1164, 16
        %v1239 = vrot.slane %v1237, 4
        %v1240 = vshll.u32 %v1164, 16
        %v1242 = vrot.slane %v1240, 5
        %v1243 = vor.u32 %v1239, %v1242
        %v1244 = vrot.slane %v1243, 4
        %v1246 = vshll.u32 %v1165, 16
        %v1248 = vrot.slane %v1246, 5
        %v1249 = vsel %vm1187, %v1244, %v1248
        %v1250 = vshrl.u32 %v1165, 16
        %v1252 = vrot.slane %v1250, 4
        %v1253 = vor.u32 %v1252, %v1248
        %v1254 = vrot.slane %v1253, 4
        %v1256 = vshll.u32 %v1179, 16
        %v1258 = vrot.slane %v1256, 5
        %v1259 = vsel %vm1187, %v1254, %v1258
        %v1261 = vshrl.u32 %v1166, 16
        %v1263 = vrot.slane %v1261, 4
        %v1264 = vshll.u32 %v1166, 16
        %v1266 = vrot.slane %v1264, 5
        %v1267 = vor.u32 %v1263, %v1266
        %v1268 = vrot.slane %v1267, 4
        %v1270 = vshll.u32 %v1167, 16
        %v1272 = vrot.slane %v1270, 5
        %v1273 = vsel %vm1187, %v1268, %v1272
        %v1274 = vshrl.u32 %v1167, 16
        %v1276 = vrot.slane %v1274, 4
        %v1277 = vor.u32 %v1276, %v1272
        %v1278 = vrot.slane %v1277, 4
        %v1280 = vshll.u32 %v1180, 16
        %v1282 = vrot.slane %v1280, 5
        %v1283 = vsel %vm1187, %v1278, %v1282
        %v1285 = vshrl.u32 %v1168, 16
        %v1287 = vrot.slane %v1285, 4
        %v1288 = vshll.u32 %v1168, 16
        %v1290 = vrot.slane %v1288, 5
        %v1291 = vor.u32 %v1287, %v1290
        %v1292 = vrot.slane %v1291, 4
        %v1294 = vshll.u32 %v1169, 16
        %v1296 = vrot.slane %v1294, 5
        %v1297 = vsel %vm1187, %v1292, %v1296
        %v1298 = vshrl.u32 %v1169, 16
        %v1300 = vrot.slane %v1298, 4
        %v1301 = vor.u32 %v1300, %v1296
        %v1302 = vrot.slane %v1301, 4
        %v1304 = vshll.u32 %v1181, 16
        %v1306 = vrot.slane %v1304, 5
        %v1307 = vsel %vm1187, %v1302, %v1306
        %v1309 = vshrl.u32 %v1170, 16
        %v1311 = vrot.slane %v1309, 4
        %v1312 = vshll.u32 %v1170, 16
        %v1314 = vrot.slane %v1312, 5
        %v1315 = vor.u32 %v1311, %v1314
        %v1316 = vrot.slane %v1315, 4
        %v1318 = vshll.u32 %v1171, 16
        %v1320 = vrot.slane %v1318, 5
        %v1321 = vsel %vm1187, %v1316, %v1320
        %v1322 = vshrl.u32 %v1171, 16
        %v1324 = vrot.slane %v1322, 4
        %v1325 = vor.u32 %v1324, %v1320
        %v1326 = vrot.slane %v1325, 4
        %v1328 = vshll.u32 %v1182, 16
        %v1330 = vrot.slane %v1328, 5
        %v1331 = vsel %vm1187, %v1326, %v1330
        %v1333 = vshrl.u32 %v1172, 16
        %v1335 = vrot.slane %v1333, 4
        %v1336 = vshll.u32 %v1172, 16
        %v1338 = vrot.slane %v1336, 5
        %v1339 = vor.u32 %v1335, %v1338
        %v1340 = vrot.slane %v1339, 4
        %v1342 = vshll.u32 %v1173, 16
        %v1344 = vrot.slane %v1342, 5
        %v1345 = vsel %vm1187, %v1340, %v1344
        %v1346 = vshrl.u32 %v1173, 16
        %v1348 = vrot.slane %v1346, 4
        %v1349 = vor.u32 %v1348, %v1344
        %v1350 = vrot.slane %v1349, 4
        %v1352 = vshll.u32 %v1183, 16
        %v1354 = vrot.slane %v1352, 5
        %v1355 = vsel %vm1187, %v1350, %v1354
        %v1357 = vshrl.u32 %v1174, 16
        %v1359 = vrot.slane %v1357, 4
        %v1360 = vshll.u32 %v1174, 16
        %v1362 = vrot.slane %v1360, 5
        %v1363 = vor.u32 %v1359, %v1362
        %v1364 = vrot.slane %v1363, 4
        %v1366 = vshll.u32 %v1175, 16
        %v1368 = vrot.slane %v1366, 5
        %v1369 = vsel %vm1187, %v1364, %v1368
        %v1370 = vshrl.u32 %v1175, 16
        %v1372 = vrot.slane %v1370, 4
        %v1373 = vor.u32 %v1372, %v1368
        %v1374 = vrot.slane %v1373, 4
        %v1376 = vshll.u32 %v1184, 16
        %v1378 = vrot.slane %v1376, 5
        %v1379 = vsel %vm1187, %v1374, %v1378
        %s1380 = scalar_lea.vmem %s5, 2
        %v1381 = vld [vmem:[%s1380] sm:$0x3]
        %v1382 = vunpack.c.l.b16 %v1201
        %v1383 = vunpack.c.l.b16 %v1211
        %v1384 = vunpack.c.l.b16 %v1225
        %v1385 = vunpack.c.l.b16 %v1235
        %v1386 = vunpack.c.l.b16 %v1249
        %v1387 = vunpack.c.l.b16 %v1259
        %v1388 = vunpack.c.l.b16 %v1273
        %v1389 = vunpack.c.l.b16 %v1283
        %v1390 = vunpack.c.l.b16 %v1297
        %v1391 = vunpack.c.l.b16 %v1307
        %v1392 = vunpack.c.l.b16 %v1321
        %v1393 = vunpack.c.l.b16 %v1331
        %v1394 = vunpack.c.l.b16 %v1345
        %v1395 = vunpack.c.l.b16 %v1355
        %v1396 = vunpack.c.l.b16 %v1369
        %v1397 = vunpack.c.l.b16 %v1379
        %v1398 = vpack.c.b16 %v1383, %v1382
        %v1399 = vpack.c.b16 %v1385, %v1384
        %v1400 = vpack.c.b16 %v1387, %v1386
        %v1401 = vpack.c.b16 %v1389, %v1388
        %v1402 = vpack.c.b16 %v1391, %v1390
        %v1403 = vpack.c.b16 %v1393, %v1392
        %v1404 = vpack.c.b16 %v1395, %v1394
        %v1405 = vpack.c.b16 %v1397, %v1396
        %vm1406 = vcmask 31744
        %v1408 = vsel %vm1406, %v1398, 0
        %v1411 = vsel %vm1406, %v1399, 0
        %v1414 = vsel %vm1406, %v1400, 0
        %v1417 = vsel %vm1406, %v1401, 0
        %v1420 = vsel %vm1406, %v1402, 0
        %v1423 = vsel %vm1406, %v1403, 0
        %v1426 = vsel %vm1406, %v1404, 0
        %v1429 = vsel %vm1406, %v1405, 0
        %vm1431 = vcmask 1041408
        %v1433 = vsel %vm1431, %v1381, 0
        %1435 = vmatprep.subr.bf16.mxu0 0
        %1436 = vmatpush1.bf16.msra.mxu0 %v1433
        %1437 = vmatprep.subr.bf16.mxu0 0
        %1438 = vmatpush1.bf16.msra.mxu0 0
        %1439 = vmatprep.subr.bf16.mxu0 0
        %1440 = vmatpush1.bf16.msra.mxu0 0
        %1441 = vmatprep.subr.bf16.mxu0 0
        %1442 = vmatpush1.bf16.msra.mxu0 0
        %1443 = vmatprep.subr.bf16.mxu0 0
        %1444 = vmatpush1.bf16.msra.mxu0 0
        %1445 = vmatprep.subr.bf16.mxu0 0
        %1446 = vmatpush1.bf16.msra.mxu0 0
        %1447 = vmatprep.subr.bf16.mxu0 0
        %1448 = vmatpush1.bf16.msra.mxu0 0
        %1449 = vmatprep.subr.bf16.mxu0 0
        %1450 = vmatpush1.bf16.msra.mxu0 0
        %1451 = vmatprep.subr.bf16.mxu0 0
        %1452 = vmatpush1.bf16.msra.mxu0 0
        %1453 = vmatprep.subr.bf16.mxu0 0
        %1454 = vmatpush1.bf16.msra.mxu0 0
        %1455 = vmatprep.subr.bf16.mxu0 0
        %1456 = vmatpush1.bf16.msra.mxu0 0
        %1457 = vmatprep.subr.bf16.mxu0 0
        %1458 = vmatpush1.bf16.msra.mxu0 0
        %1459 = vmatprep.subr.bf16.mxu0 0
        %1460 = vmatpush1.bf16.msra.mxu0 0
        %1461 = vmatprep.subr.bf16.mxu0 0
        %1462 = vmatpush1.bf16.msra.mxu0 0
        %1463 = vmatprep.subr.bf16.mxu0 0
        %1464 = vmatpush1.bf16.msra.mxu0 0
        %1465 = vmatprep.subr.bf16.mxu0 0
        %1466 = vmatpush1.bf16.msra.mxu0 0
        %1467 = vmatprep.mubr.bf16.mxu0 0
        %1468 = vmatmul.mubr.bf16.gmra.mrb[0].mxu0 %v1408
        %v1469 = vpop.f32.mrb[0].mxu0
        %v1470 = vadd.f32 0.0, %v1469
        %v1471 = vpop.f32.mrb[0].mxu0
        %v1472 = vpop.f32.mrb[0].mxu0
        %v1473 = vadd.f32 0.0, %v1472
        %v1474 = vpop.f32.mrb[0].mxu0
        %1475 = vmatprep.mubr.bf16.mxu0 0
        %1476 = vmatmul.mubr.bf16.gmra.mrb[0].mxu0 %v1411
        %v1477 = vpop.f32.mrb[0].mxu0
        %v1478 = vadd.f32 0.0, %v1477
        %v1479 = vpop.f32.mrb[0].mxu0
        %v1480 = vpop.f32.mrb[0].mxu0
        %v1481 = vadd.f32 0.0, %v1480
        %v1482 = vpop.f32.mrb[0].mxu0
        %1483 = vmatprep.mubr.bf16.mxu0 0
        %1484 = vmatmul.mubr.bf16.gmra.mrb[0].mxu0 %v1414
        %v1485 = vpop.f32.mrb[0].mxu0
        %v1486 = vadd.f32 0.0, %v1485
        %v1487 = vpop.f32.mrb[0].mxu0
        %v1488 = vpop.f32.mrb[0].mxu0
        %v1489 = vadd.f32 0.0, %v1488
        %v1490 = vpop.f32.mrb[0].mxu0
        %1491 = vmatprep.mubr.bf16.mxu0 0
        %1492 = vmatmul.mubr.bf16.gmra.mrb[0].mxu0 %v1417
        %v1493 = vpop.f32.mrb[0].mxu0
        %v1494 = vadd.f32 0.0, %v1493
        %v1495 = vpop.f32.mrb[0].mxu0
        %v1496 = vpop.f32.mrb[0].mxu0
        %v1497 = vadd.f32 0.0, %v1496
        %v1498 = vpop.f32.mrb[0].mxu0
        %1499 = vmatprep.mubr.bf16.mxu0 0
        %1500 = vmatmul.mubr.bf16.gmra.mrb[0].mxu0 %v1420
        %v1501 = vpop.f32.mrb[0].mxu0
        %v1502 = vadd.f32 0.0, %v1501
        %v1503 = vpop.f32.mrb[0].mxu0
        %v1504 = vpop.f32.mrb[0].mxu0
        %v1505 = vadd.f32 0.0, %v1504
        %v1506 = vpop.f32.mrb[0].mxu0
        %1507 = vmatprep.mubr.bf16.mxu0 0
        %1508 = vmatmul.mubr.bf16.gmra.mrb[0].mxu0 %v1423
        %v1509 = vpop.f32.mrb[0].mxu0
        %v1510 = vadd.f32 0.0, %v1509
        %v1511 = vpop.f32.mrb[0].mxu0
        %v1512 = vpop.f32.mrb[0].mxu0
        %v1513 = vadd.f32 0.0, %v1512
        %v1514 = vpop.f32.mrb[0].mxu0
        %1515 = vmatprep.mubr.bf16.mxu0 0
        %1516 = vmatmul.mubr.bf16.gmra.mrb[0].mxu0 %v1426
        %v1517 = vpop.f32.mrb[0].mxu0
        %v1518 = vadd.f32 0.0, %v1517
        %v1519 = vpop.f32.mrb[0].mxu0
        %v1520 = vpop.f32.mrb[0].mxu0
        %v1521 = vadd.f32 0.0, %v1520
        %v1522 = vpop.f32.mrb[0].mxu0
        %1523 = vmatprep.mubr.bf16.mxu0 0
        %1524 = vmatmul.mubr.bf16.gmra.mrb[0].mxu0 %v1429
        %v1525 = vpop.f32.mrb[0].mxu0
        %v1526 = vadd.f32 0.0, %v1525
        %v1527 = vpop.f32.mrb[0].mxu0
        %v1528 = vpop.f32.mrb[0].mxu0
        %v1529 = vadd.f32 0.0, %v1528
        %v1530 = vpop.f32.mrb[0].mxu0
        %1531 = vdwg.mxu0
        %v1548 = vunpack.c.l.b16 %v1160
        %v1549 = vunpack.c.l.b16 %v1161
        %v1550 = vunpack.c.l.b16 %v1162
        %v1551 = vunpack.c.l.b16 %v1163
        %v1552 = vunpack.c.l.b16 %v1164
        %v1553 = vunpack.c.l.b16 %v1165
        %v1554 = vunpack.c.l.b16 %v1166
        %v1555 = vunpack.c.l.b16 %v1167
        %v1556 = vunpack.c.l.b16 %v1168
        %v1557 = vunpack.c.l.b16 %v1169
        %v1558 = vunpack.c.l.b16 %v1170
        %v1559 = vunpack.c.l.b16 %v1171
        %v1560 = vunpack.c.l.b16 %v1172
        %v1561 = vunpack.c.l.b16 %v1173
        %v1562 = vunpack.c.l.b16 %v1174
        %v1563 = vunpack.c.l.b16 %v1175
        %v1564 = vpack.c.b16 %v1549, %v1548
        %v1565 = vpack.c.b16 %v1551, %v1550
        %v1566 = vpack.c.b16 %v1553, %v1552
        %v1567 = vpack.c.b16 %v1555, %v1554
        %v1568 = vpack.c.b16 %v1557, %v1556
        %v1569 = vpack.c.b16 %v1559, %v1558
        %v1570 = vpack.c.b16 %v1561, %v1560
        %v1571 = vpack.c.b16 %v1563, %v1562
        %v1573 = vsel %vm1406, %v1564, 0
        %v1576 = vsel %vm1406, %v1565, 0
        %v1579 = vsel %vm1406, %v1566, 0
        %v1582 = vsel %vm1406, %v1567, 0
        %v1585 = vsel %vm1406, %v1568, 0
        %v1588 = vsel %vm1406, %v1569, 0
        %v1591 = vsel %vm1406, %v1570, 0
        %v1594 = vsel %vm1406, %v1571, 0
        %v1597 = vsel %vm1431, %v1176, 0
        %1599 = vmatprep.subr.bf16.mxu0 0
        %1600 = vmatpush1.bf16.msra.mxu0 %v1597
        %1601 = vmatprep.subr.bf16.mxu0 0
        %1602 = vmatpush1.bf16.msra.mxu0 0
        %1603 = vmatprep.subr.bf16.mxu0 0
        %1604 = vmatpush1.bf16.msra.mxu0 0
        %1605 = vmatprep.subr.bf16.mxu0 0
        %1606 = vmatpush1.bf16.msra.mxu0 0
        %1607 = vmatprep.subr.bf16.mxu0 0
        %1608 = vmatpush1.bf16.msra.mxu0 0
        %1609 = vmatprep.subr.bf16.mxu0 0
        %1610 = vmatpush1.bf16.msra.mxu0 0
        %1611 = vmatprep.subr.bf16.mxu0 0
        %1612 = vmatpush1.bf16.msra.mxu0 0
        %1613 = vmatprep.subr.bf16.mxu0 0
        %1614 = vmatpush1.bf16.msra.mxu0 0
        %1615 = vmatprep.subr.bf16.mxu0 0
        %1616 = vmatpush1.bf16.msra.mxu0 0
        %1617 = vmatprep.subr.bf16.mxu0 0
        %1618 = vmatpush1.bf16.msra.mxu0 0
        %1619 = vmatprep.subr.bf16.mxu0 0
        %1620 = vmatpush1.bf16.msra.mxu0 0
        %1621 = vmatprep.subr.bf16.mxu0 0
        %1622 = vmatpush1.bf16.msra.mxu0 0
        %1623 = vmatprep.subr.bf16.mxu0 0
        %1624 = vmatpush1.bf16.msra.mxu0 0
        %1625 = vmatprep.subr.bf16.mxu0 0
        %1626 = vmatpush1.bf16.msra.mxu0 0
        %1627 = vmatprep.subr.bf16.mxu0 0
        %1628 = vmatpush1.bf16.msra.mxu0 0
        %1629 = vmatprep.subr.bf16.mxu0 0
        %1630 = vmatpush1.bf16.msra.mxu0 0
        %1631 = vmatprep.mubr.bf16.mxu0 0
        %1632 = vmatmul.mubr.bf16.gmra.mrb[0].mxu0 %v1573
        %v1633 = vpop.f32.mrb[0].mxu0
        %v1634 = vadd.f32 %v1470, %v1633
        %v1635 = vpop.f32.mrb[0].mxu0
        %v1636 = vpop.f32.mrb[0].mxu0
        %v1637 = vadd.f32 %v1473, %v1636
        %v1638 = vpop.f32.mrb[0].mxu0
        %1639 = vmatprep.mubr.bf16.mxu0 0
        %1640 = vmatmul.mubr.bf16.gmra.mrb[0].mxu0 %v1576
        %v1641 = vpop.f32.mrb[0].mxu0
        %v1642 = vadd.f32 %v1478, %v1641
        %v1643 = vpop.f32.mrb[0].mxu0
        %v1644 = vpop.f32.mrb[0].mxu0
        %v1645 = vadd.f32 %v1481, %v1644
        %v1646 = vpop.f32.mrb[0].mxu0
        %1647 = vmatprep.mubr.bf16.mxu0 0
        %1648 = vmatmul.mubr.bf16.gmra.mrb[0].mxu0 %v1579
        %v1649 = vpop.f32.mrb[0].mxu0
        %v1650 = vadd.f32 %v1486, %v1649
        %v1651 = vpop.f32.mrb[0].mxu0
        %v1652 = vpop.f32.mrb[0].mxu0
        %v1653 = vadd.f32 %v1489, %v1652
        %v1654 = vpop.f32.mrb[0].mxu0
        %1655 = vmatprep.mubr.bf16.mxu0 0
        %1656 = vmatmul.mubr.bf16.gmra.mrb[0].mxu0 %v1582
        %v1657 = vpop.f32.mrb[0].mxu0
        %v1658 = vadd.f32 %v1494, %v1657
        %v1659 = vpop.f32.mrb[0].mxu0
        %v1660 = vpop.f32.mrb[0].mxu0
        %v1661 = vadd.f32 %v1497, %v1660
        %v1662 = vpop.f32.mrb[0].mxu0
        %1663 = vmatprep.mubr.bf16.mxu0 0
        %1664 = vmatmul.mubr.bf16.gmra.mrb[0].mxu0 %v1585
        %v1665 = vpop.f32.mrb[0].mxu0
        %v1666 = vadd.f32 %v1502, %v1665
        %v1667 = vpop.f32.mrb[0].mxu0
        %v1668 = vpop.f32.mrb[0].mxu0
        %v1669 = vadd.f32 %v1505, %v1668
        %v1670 = vpop.f32.mrb[0].mxu0
        %1671 = vmatprep.mubr.bf16.mxu0 0
        %1672 = vmatmul.mubr.bf16.gmra.mrb[0].mxu0 %v1588
        %v1673 = vpop.f32.mrb[0].mxu0
        %v1674 = vadd.f32 %v1510, %v1673
        %v1675 = vpop.f32.mrb[0].mxu0
        %v1676 = vpop.f32.mrb[0].mxu0
        %v1677 = vadd.f32 %v1513, %v1676
        %v1678 = vpop.f32.mrb[0].mxu0
        %1679 = vmatprep.mubr.bf16.mxu0 0
        %1680 = vmatmul.mubr.bf16.gmra.mrb[0].mxu0 %v1591
        %v1681 = vpop.f32.mrb[0].mxu0
        %v1682 = vadd.f32 %v1518, %v1681
        %v1683 = vpop.f32.mrb[0].mxu0
        %v1684 = vpop.f32.mrb[0].mxu0
        %v1685 = vadd.f32 %v1521, %v1684
        %v1686 = vpop.f32.mrb[0].mxu0
        %1687 = vmatprep.mubr.bf16.mxu0 0
        %1688 = vmatmul.mubr.bf16.gmra.mrb[0].mxu0 %v1594
        %v1689 = vpop.f32.mrb[0].mxu0
        %v1690 = vadd.f32 %v1526, %v1689
        %v1691 = vpop.f32.mrb[0].mxu0
        %v1692 = vpop.f32.mrb[0].mxu0
        %v1693 = vadd.f32 %v1529, %v1692
        %v1694 = vpop.f32.mrb[0].mxu0
        %1695 = vdwg.mxu0
        %v1696 = vld [vmem:[#allocation2] sm:$0xe]
        %v1697 = vld [vmem:[#allocation2 + $0xc] sm:$0xe]
        %v1698 = vld [vmem:[#allocation2 + $0x18] sm:$0xe]
        %v1699 = vld [vmem:[#allocation2 + $0x24] sm:$0xe]
        %v1700 = vld [vmem:[#allocation2 + $0x30] sm:$0xe]
        %v1701 = vld [vmem:[#allocation2 + $0x3c] sm:$0xe]
        %v1702 = vld [vmem:[#allocation2 + $0x48] sm:$0xe]
        %v1703 = vld [vmem:[#allocation2 + $0x54] sm:$0xe]
        %vm1720 = vcmask 1042432
        %vm1721 = vcmask 1046532
        %vm1722 = vmor %vm1720, %vm1721
        %v1723 = vrot.slane %v1696, 5
        %v1724 = vrot.slane %v1723, 4
        %v1725 = vrot.slane %v1161, 5
        %v1726 = vsel %vm1722, %v1724, %v1725
        %v1727 = vrot.slane %v1725, 4
        %v1728 = vrot.slane %v1177, 5
        %v1729 = vsel %vm1722, %v1727, %v1728
        %v1730 = vrot.slane %v1697, 5
        %v1731 = vrot.slane %v1730, 4
        %v1732 = vrot.slane %v1163, 5
        %v1733 = vsel %vm1722, %v1731, %v1732
        %v1734 = vrot.slane %v1732, 4
        %v1735 = vrot.slane %v1178, 5
        %v1736 = vsel %vm1722, %v1734, %v1735
        %v1737 = vrot.slane %v1698, 5
        %v1738 = vrot.slane %v1737, 4
        %v1739 = vrot.slane %v1165, 5
        %v1740 = vsel %vm1722, %v1738, %v1739
        %v1741 = vrot.slane %v1739, 4
        %v1742 = vrot.slane %v1179, 5
        %v1743 = vsel %vm1722, %v1741, %v1742
        %v1744 = vrot.slane %v1699, 5
        %v1745 = vrot.slane %v1744, 4
        %v1746 = vrot.slane %v1167, 5
        %v1747 = vsel %vm1722, %v1745, %v1746
        %v1748 = vrot.slane %v1746, 4
        %v1749 = vrot.slane %v1180, 5
        %v1750 = vsel %vm1722, %v1748, %v1749
        %v1751 = vrot.slane %v1700, 5
        %v1752 = vrot.slane %v1751, 4
        %v1753 = vrot.slane %v1169, 5
        %v1754 = vsel %vm1722, %v1752, %v1753
        %v1755 = vrot.slane %v1753, 4
        %v1756 = vrot.slane %v1181, 5
        %v1757 = vsel %vm1722, %v1755, %v1756
        %v1758 = vrot.slane %v1701, 5
        %v1759 = vrot.slane %v1758, 4
        %v1760 = vrot.slane %v1171, 5
        %v1761 = vsel %vm1722, %v1759, %v1760
        %v1762 = vrot.slane %v1760, 4
        %v1763 = vrot.slane %v1182, 5
        %v1764 = vsel %vm1722, %v1762, %v1763
        %v1765 = vrot.slane %v1702, 5
        %v1766 = vrot.slane %v1765, 4
        %v1767 = vrot.slane %v1173, 5
        %v1768 = vsel %vm1722, %v1766, %v1767
        %v1769 = vrot.slane %v1767, 4
        %v1770 = vrot.slane %v1183, 5
        %v1771 = vsel %vm1722, %v1769, %v1770
        %v1772 = vrot.slane %v1703, 5
        %v1773 = vrot.slane %v1772, 4
        %v1774 = vrot.slane %v1175, 5
        %v1775 = vsel %vm1722, %v1773, %v1774
        %v1776 = vrot.slane %v1774, 4
        %v1777 = vrot.slane %v1184, 5
        %v1778 = vsel %vm1722, %v1776, %v1777
        %s1779 = scalar_lea.vmem %s5, 4
        %v1780 = vld [vmem:[%s1779] sm:$0x3]
        %v1781 = vunpack.c.l.b16 %v1726
        %v1782 = vunpack.c.l.b16 %v1729
        %v1783 = vunpack.c.l.b16 %v1733
        %v1784 = vunpack.c.l.b16 %v1736
        %v1785 = vunpack.c.l.b16 %v1740
        %v1786 = vunpack.c.l.b16 %v1743
        %v1787 = vunpack.c.l.b16 %v1747
        %v1788 = vunpack.c.l.b16 %v1750
        %v1789 = vunpack.c.l.b16 %v1754
        %v1790 = vunpack.c.l.b16 %v1757
        %v1791 = vunpack.c.l.b16 %v1761
        %v1792 = vunpack.c.l.b16 %v1764
        %v1793 = vunpack.c.l.b16 %v1768
        %v1794 = vunpack.c.l.b16 %v1771
        %v1795 = vunpack.c.l.b16 %v1775
        %v1796 = vunpack.c.l.b16 %v1778
        %v1797 = vpack.c.b16 %v1782, %v1781
        %v1798 = vpack.c.b16 %v1784, %v1783
        %v1799 = vpack.c.b16 %v1786, %v1785
        %v1800 = vpack.c.b16 %v1788, %v1787
        %v1801 = vpack.c.b16 %v1790, %v1789
        %v1802 = vpack.c.b16 %v1792, %v1791
        %v1803 = vpack.c.b16 %v1794, %v1793
        %v1804 = vpack.c.b16 %v1796, %v1795
        %v1806 = vsel %vm1406, %v1797, 0
        %v1809 = vsel %vm1406, %v1798, 0
        %v1812 = vsel %vm1406, %v1799, 0
        %v1815 = vsel %vm1406, %v1800, 0
        %v1818 = vsel %vm1406, %v1801, 0
        %v1821 = vsel %vm1406, %v1802, 0
        %v1824 = vsel %vm1406, %v1803, 0
        %v1827 = vsel %vm1406, %v1804, 0
        %v1830 = vsel %vm1431, %v1780, 0
        %1832 = vmatprep.subr.bf16.mxu0 0
        %1833 = vmatpush1.bf16.msra.mxu0 %v1830
        %1834 = vmatprep.subr.bf16.mxu0 0
        %1835 = vmatpush1.bf16.msra.mxu0 0
        %1836 = vmatprep.subr.bf16.mxu0 0
        %1837 = vmatpush1.bf16.msra.mxu0 0
        %1838 = vmatprep.subr.bf16.mxu0 0
        %1839 = vmatpush1.bf16.msra.mxu0 0
        %1840 = vmatprep.subr.bf16.mxu0 0
        %1841 = vmatpush1.bf16.msra.mxu0 0
        %1842 = vmatprep.subr.bf16.mxu0 0
        %1843 = vmatpush1.bf16.msra.mxu0 0
        %1844 = vmatprep.subr.bf16.mxu0 0
        %1845 = vmatpush1.bf16.msra.mxu0 0
        %1846 = vmatprep.subr.bf16.mxu0 0
        %1847 = vmatpush1.bf16.msra.mxu0 0
        %1848 = vmatprep.subr.bf16.mxu0 0
        %1849 = vmatpush1.bf16.msra.mxu0 0
        %1850 = vmatprep.subr.bf16.mxu0 0
        %1851 = vmatpush1.bf16.msra.mxu0 0
        %1852 = vmatprep.subr.bf16.mxu0 0
        %1853 = vmatpush1.bf16.msra.mxu0 0
        %1854 = vmatprep.subr.bf16.mxu0 0
        %1855 = vmatpush1.bf16.msra.mxu0 0
        %1856 = vmatprep.subr.bf16.mxu0 0
        %1857 = vmatpush1.bf16.msra.mxu0 0
        %1858 = vmatprep.subr.bf16.mxu0 0
        %1859 = vmatpush1.bf16.msra.mxu0 0
        %1860 = vmatprep.subr.bf16.mxu0 0
        %1861 = vmatpush1.bf16.msra.mxu0 0
        %1862 = vmatprep.subr.bf16.mxu0 0
        %1863 = vmatpush1.bf16.msra.mxu0 0
        %1864 = vmatprep.mubr.bf16.mxu0 0
        %1865 = vmatmul.mubr.bf16.gmra.mrb[0].mxu0 %v1806
        %v1866 = vpop.f32.mrb[0].mxu0
        %v1867 = vadd.f32 0.0, %v1866
        %v1868 = vpop.f32.mrb[0].mxu0
        %v1869 = vpop.f32.mrb[0].mxu0
        %v1870 = vadd.f32 0.0, %v1869
        %v1871 = vpop.f32.mrb[0].mxu0
        %1872 = vmatprep.mubr.bf16.mxu0 0
        %1873 = vmatmul.mubr.bf16.gmra.mrb[0].mxu0 %v1809
        %v1874 = vpop.f32.mrb[0].mxu0
        %v1875 = vadd.f32 0.0, %v1874
        %v1876 = vpop.f32.mrb[0].mxu0
        %v1877 = vpop.f32.mrb[0].mxu0
        %v1878 = vadd.f32 0.0, %v1877
        %v1879 = vpop.f32.mrb[0].mxu0
        %1880 = vmatprep.mubr.bf16.mxu0 0
        %1881 = vmatmul.mubr.bf16.gmra.mrb[0].mxu0 %v1812
        %v1882 = vpop.f32.mrb[0].mxu0
        %v1883 = vadd.f32 0.0, %v1882
        %v1884 = vpop.f32.mrb[0].mxu0
        %v1885 = vpop.f32.mrb[0].mxu0
        %v1886 = vadd.f32 0.0, %v1885
        %v1887 = vpop.f32.mrb[0].mxu0
        %1888 = vmatprep.mubr.bf16.mxu0 0
        %1889 = vmatmul.mubr.bf16.gmra.mrb[0].mxu0 %v1815
        %v1890 = vpop.f32.mrb[0].mxu0
        %v1891 = vadd.f32 0.0, %v1890
        %v1892 = vpop.f32.mrb[0].mxu0
        %v1893 = vpop.f32.mrb[0].mxu0
        %v1894 = vadd.f32 0.0, %v1893
        %v1895 = vpop.f32.mrb[0].mxu0
        %1896 = vmatprep.mubr.bf16.mxu0 0
        %1897 = vmatmul.mubr.bf16.gmra.mrb[0].mxu0 %v1818
        %v1898 = vpop.f32.mrb[0].mxu0
        %v1899 = vadd.f32 0.0, %v1898
        %v1900 = vpop.f32.mrb[0].mxu0
        %v1901 = vpop.f32.mrb[0].mxu0
        %v1902 = vadd.f32 0.0, %v1901
        %v1903 = vpop.f32.mrb[0].mxu0
        %1904 = vmatprep.mubr.bf16.mxu0 0
        %1905 = vmatmul.mubr.bf16.gmra.mrb[0].mxu0 %v1821
        %v1906 = vpop.f32.mrb[0].mxu0
        %v1907 = vadd.f32 0.0, %v1906
        %v1908 = vpop.f32.mrb[0].mxu0
        %v1909 = vpop.f32.mrb[0].mxu0
        %v1910 = vadd.f32 0.0, %v1909
        %v1911 = vpop.f32.mrb[0].mxu0
        %1912 = vmatprep.mubr.bf16.mxu0 0
        %1913 = vmatmul.mubr.bf16.gmra.mrb[0].mxu0 %v1824
        %v1914 = vpop.f32.mrb[0].mxu0
        %v1915 = vadd.f32 0.0, %v1914
        %v1916 = vpop.f32.mrb[0].mxu0
        %v1917 = vpop.f32.mrb[0].mxu0
        %v1918 = vadd.f32 0.0, %v1917
        %v1919 = vpop.f32.mrb[0].mxu0
        %1920 = vmatprep.mubr.bf16.mxu0 0
        %1921 = vmatmul.mubr.bf16.gmra.mrb[0].mxu0 %v1827
        %v1922 = vpop.f32.mrb[0].mxu0
        %v1923 = vadd.f32 0.0, %v1922
        %v1924 = vpop.f32.mrb[0].mxu0
        %v1925 = vpop.f32.mrb[0].mxu0
        %v1926 = vadd.f32 0.0, %v1925
        %v1927 = vpop.f32.mrb[0].mxu0
        %1928 = vdwg.mxu0
        %v1929 = vadd.f32 %v1634, %v1867
        %v1930 = vadd.f32 %v1637, %v1870
        %v1931 = vadd.f32 %v1642, %v1875
        %v1932 = vadd.f32 %v1645, %v1878
        %v1933 = vadd.f32 %v1650, %v1883
        %v1934 = vadd.f32 %v1653, %v1886
        %v1935 = vadd.f32 %v1658, %v1891
        %v1936 = vadd.f32 %v1661, %v1894
        %v1937 = vadd.f32 %v1666, %v1899
        %v1938 = vadd.f32 %v1669, %v1902
        %v1939 = vadd.f32 %v1674, %v1907
        %v1940 = vadd.f32 %v1677, %v1910
        %v1941 = vadd.f32 %v1682, %v1915
        %v1942 = vadd.f32 %v1685, %v1918
        %v1943 = vadd.f32 %v1690, %v1923
        %v1944 = vadd.f32 %v1693, %v1926
        %v1945 = vld [vmem:[%s1066] sm:$0xf]
        %v1946 = vld [vmem:[%s1066 + $0x4] sm:$0xf]
        %v1947 = vld [vmem:[%s1066 + $0xc] sm:$0xf]
        %v1948 = vld [vmem:[%s1066 + $0x10] sm:$0xf]
        %v1949 = vld [vmem:[%s1066 + $0x18] sm:$0xf]
        %v1950 = vld [vmem:[%s1066 + $0x1c] sm:$0xf]
        %v1951 = vld [vmem:[%s1066 + $0x24] sm:$0xf]
        %v1952 = vld [vmem:[%s1066 + $0x28] sm:$0xf]
        %v1953 = vld [vmem:[%s1066 + $0x30] sm:$0xf]
        %v1954 = vld [vmem:[%s1066 + $0x34] sm:$0xf]
        %v1955 = vld [vmem:[%s1066 + $0x3c] sm:$0xf]
        %v1956 = vld [vmem:[%s1066 + $0x40] sm:$0xf]
        %v1957 = vld [vmem:[%s1066 + $0x48] sm:$0xf]
        %v1958 = vld [vmem:[%s1066 + $0x4c] sm:$0xf]
        %v1959 = vld [vmem:[%s1066 + $0x54] sm:$0xf]
        %v1960 = vld [vmem:[%s1066 + $0x58] sm:$0xf]
        %s1961 = scalar_lea.vmem %s5, 6
        %v1962 = vld [vmem:[%s1961] sm:$0x3]
        %v1979 = vunpack.c.l.b16 %v1945
        %v1980 = vunpack.c.l.b16 %v1946
        %v1981 = vunpack.c.l.b16 %v1947
        %v1982 = vunpack.c.l.b16 %v1948
        %v1983 = vunpack.c.l.b16 %v1949
        %v1984 = vunpack.c.l.b16 %v1950
        %v1985 = vunpack.c.l.b16 %v1951
        %v1986 = vunpack.c.l.b16 %v1952
        %v1987 = vunpack.c.l.b16 %v1953
        %v1988 = vunpack.c.l.b16 %v1954
        %v1989 = vunpack.c.l.b16 %v1955
        %v1990 = vunpack.c.l.b16 %v1956
        %v1991 = vunpack.c.l.b16 %v1957
        %v1992 = vunpack.c.l.b16 %v1958
        %v1993 = vunpack.c.l.b16 %v1959
        %v1994 = vunpack.c.l.b16 %v1960
        %v1995 = vpack.c.b16 %v1980, %v1979
        %v1996 = vpack.c.b16 %v1982, %v1981
        %v1997 = vpack.c.b16 %v1984, %v1983
        %v1998 = vpack.c.b16 %v1986, %v1985
        %v1999 = vpack.c.b16 %v1988, %v1987
        %v2000 = vpack.c.b16 %v1990, %v1989
        %v2001 = vpack.c.b16 %v1992, %v1991
        %v2002 = vpack.c.b16 %v1994, %v1993
        %v2004 = vsel %vm1406, %v1995, 0
        %v2007 = vsel %vm1406, %v1996, 0
        %v2010 = vsel %vm1406, %v1997, 0
        %v2013 = vsel %vm1406, %v1998, 0
        %v2016 = vsel %vm1406, %v1999, 0
        %v2019 = vsel %vm1406, %v2000, 0
        %v2022 = vsel %vm1406, %v2001, 0
        %v2025 = vsel %vm1406, %v2002, 0
        %v2028 = vsel %vm1431, %v1962, 0
        %2030 = vmatprep.subr.bf16.mxu0 0
        %2031 = vmatpush1.bf16.msra.mxu0 %v2028
        %2032 = vmatprep.subr.bf16.mxu0 0
        %2033 = vmatpush1.bf16.msra.mxu0 0
        %2034 = vmatprep.subr.bf16.mxu0 0
        %2035 = vmatpush1.bf16.msra.mxu0 0
        %2036 = vmatprep.subr.bf16.mxu0 0
        %2037 = vmatpush1.bf16.msra.mxu0 0
        %2038 = vmatprep.subr.bf16.mxu0 0
        %2039 = vmatpush1.bf16.msra.mxu0 0
        %2040 = vmatprep.subr.bf16.mxu0 0
        %2041 = vmatpush1.bf16.msra.mxu0 0
        %2042 = vmatprep.subr.bf16.mxu0 0
        %2043 = vmatpush1.bf16.msra.mxu0 0
        %2044 = vmatprep.subr.bf16.mxu0 0
        %2045 = vmatpush1.bf16.msra.mxu0 0
        %2046 = vmatprep.subr.bf16.mxu0 0
        %2047 = vmatpush1.bf16.msra.mxu0 0
        %2048 = vmatprep.subr.bf16.mxu0 0
        %2049 = vmatpush1.bf16.msra.mxu0 0
        %2050 = vmatprep.subr.bf16.mxu0 0
        %2051 = vmatpush1.bf16.msra.mxu0 0
        %2052 = vmatprep.subr.bf16.mxu0 0
        %2053 = vmatpush1.bf16.msra.mxu0 0
        %2054 = vmatprep.subr.bf16.mxu0 0
        %2055 = vmatpush1.bf16.msra.mxu0 0
        %2056 = vmatprep.subr.bf16.mxu0 0
        %2057 = vmatpush1.bf16.msra.mxu0 0
        %2058 = vmatprep.subr.bf16.mxu0 0
        %2059 = vmatpush1.bf16.msra.mxu0 0
        %2060 = vmatprep.subr.bf16.mxu0 0
        %2061 = vmatpush1.bf16.msra.mxu0 0
        %2062 = vmatprep.mubr.bf16.mxu0 0
        %2063 = vmatmul.mubr.bf16.gmra.mrb[0].mxu0 %v2004
        %v2064 = vpop.f32.mrb[0].mxu0
        %v2065 = vadd.f32 0.0, %v2064
        %v2066 = vpop.f32.mrb[0].mxu0
        %v2067 = vpop.f32.mrb[0].mxu0
        %v2068 = vadd.f32 0.0, %v2067
        %v2069 = vpop.f32.mrb[0].mxu0
        %2070 = vmatprep.mubr.bf16.mxu0 0
        %2071 = vmatmul.mubr.bf16.gmra.mrb[0].mxu0 %v2007
        %v2072 = vpop.f32.mrb[0].mxu0
        %v2073 = vadd.f32 0.0, %v2072
        %v2074 = vpop.f32.mrb[0].mxu0
        %v2075 = vpop.f32.mrb[0].mxu0
        %v2076 = vadd.f32 0.0, %v2075
        %v2077 = vpop.f32.mrb[0].mxu0
        %2078 = vmatprep.mubr.bf16.mxu0 0
        %2079 = vmatmul.mubr.bf16.gmra.mrb[0].mxu0 %v2010
        %v2080 = vpop.f32.mrb[0].mxu0
        %v2081 = vadd.f32 0.0, %v2080
        %v2082 = vpop.f32.mrb[0].mxu0
        %v2083 = vpop.f32.mrb[0].mxu0
        %v2084 = vadd.f32 0.0, %v2083
        %v2085 = vpop.f32.mrb[0].mxu0
        %2086 = vmatprep.mubr.bf16.mxu0 0
        %2087 = vmatmul.mubr.bf16.gmra.mrb[0].mxu0 %v2013
        %v2088 = vpop.f32.mrb[0].mxu0
        %v2089 = vadd.f32 0.0, %v2088
        %v2090 = vpop.f32.mrb[0].mxu0
        %v2091 = vpop.f32.mrb[0].mxu0
        %v2092 = vadd.f32 0.0, %v2091
        %v2093 = vpop.f32.mrb[0].mxu0
        %2094 = vmatprep.mubr.bf16.mxu0 0
        %2095 = vmatmul.mubr.bf16.gmra.mrb[0].mxu0 %v2016
        %v2096 = vpop.f32.mrb[0].mxu0
        %v2097 = vadd.f32 0.0, %v2096
        %v2098 = vpop.f32.mrb[0].mxu0
        %v2099 = vpop.f32.mrb[0].mxu0
        %v2100 = vadd.f32 0.0, %v2099
        %v2101 = vpop.f32.mrb[0].mxu0
        %2102 = vmatprep.mubr.bf16.mxu0 0
        %2103 = vmatmul.mubr.bf16.gmra.mrb[0].mxu0 %v2019
        %v2104 = vpop.f32.mrb[0].mxu0
        %v2105 = vadd.f32 0.0, %v2104
        %v2106 = vpop.f32.mrb[0].mxu0
        %v2107 = vpop.f32.mrb[0].mxu0
        %v2108 = vadd.f32 0.0, %v2107
        %v2109 = vpop.f32.mrb[0].mxu0
        %2110 = vmatprep.mubr.bf16.mxu0 0
        %2111 = vmatmul.mubr.bf16.gmra.mrb[0].mxu0 %v2022
        %v2112 = vpop.f32.mrb[0].mxu0
        %v2113 = vadd.f32 0.0, %v2112
        %v2114 = vpop.f32.mrb[0].mxu0
        %v2115 = vpop.f32.mrb[0].mxu0
        %v2116 = vadd.f32 0.0, %v2115
        %v2117 = vpop.f32.mrb[0].mxu0
        %2118 = vmatprep.mubr.bf16.mxu0 0
        %2119 = vmatmul.mubr.bf16.gmra.mrb[0].mxu0 %v2025
        %v2120 = vpop.f32.mrb[0].mxu0
        %v2121 = vadd.f32 0.0, %v2120
        %v2122 = vpop.f32.mrb[0].mxu0
        %v2123 = vpop.f32.mrb[0].mxu0
        %v2124 = vadd.f32 0.0, %v2123
        %v2125 = vpop.f32.mrb[0].mxu0
        %2126 = vdwg.mxu0
        %v2127 = vadd.f32 %v1929, %v2065
        %v2128 = vadd.f32 %v1930, %v2068
        %v2129 = vadd.f32 %v1931, %v2073
        %v2130 = vadd.f32 %v1932, %v2076
        %v2131 = vadd.f32 %v1933, %v2081
        %v2132 = vadd.f32 %v1934, %v2084
        %v2133 = vadd.f32 %v1935, %v2089
        %v2134 = vadd.f32 %v1936, %v2092
        %v2135 = vadd.f32 %v1937, %v2097
        %v2136 = vadd.f32 %v1938, %v2100
        %v2137 = vadd.f32 %v1939, %v2105
        %v2138 = vadd.f32 %v1940, %v2108
        %v2139 = vadd.f32 %v1941, %v2113
        %v2140 = vadd.f32 %v1942, %v2116
        %v2141 = vadd.f32 %v1943, %v2121
        %v2142 = vadd.f32 %v1944, %v2124
        %v2143 = vld [vmem:[%s1066] sm:$0xf]
        %v2144 = vld [vmem:[%s1066 + $0x4] sm:$0xf]
        %v2145 = vld [vmem:[%s1066 + $0x8] sm:$0x1]
        %v2146 = vld [vmem:[%s1066 + $0xc] sm:$0xf]
        %v2147 = vld [vmem:[%s1066 + $0x10] sm:$0xf]
        %v2148 = vld [vmem:[%s1066 + $0x14] sm:$0x1]
        %v2149 = vld [vmem:[%s1066 + $0x18] sm:$0xf]
        %v2150 = vld [vmem:[%s1066 + $0x1c] sm:$0xf]
        %v2151 = vld [vmem:[%s1066 + $0x20] sm:$0x1]
        %v2152 = vld [vmem:[%s1066 + $0x24] sm:$0xf]
        %v2153 = vld [vmem:[%s1066 + $0x28] sm:$0xf]
        %v2154 = vld [vmem:[%s1066 + $0x2c] sm:$0x1]
        %v2155 = vld [vmem:[%s1066 + $0x30] sm:$0xf]
        %v2156 = vld [vmem:[%s1066 + $0x34] sm:$0xf]
        %v2157 = vld [vmem:[%s1066 + $0x38] sm:$0x1]
        %v2158 = vld [vmem:[%s1066 + $0x3c] sm:$0xf]
        %v2159 = vld [vmem:[%s1066 + $0x40] sm:$0xf]
        %v2160 = vld [vmem:[%s1066 + $0x44] sm:$0x1]
        %v2161 = vld [vmem:[%s1066 + $0x48] sm:$0xf]
        %v2162 = vld [vmem:[%s1066 + $0x4c] sm:$0xf]
        %v2163 = vld [vmem:[%s1066 + $0x50] sm:$0x1]
        %v2164 = vld [vmem:[%s1066 + $0x54] sm:$0xf]
        %v2165 = vld [vmem:[%s1066 + $0x58] sm:$0xf]
        %v2166 = vld [vmem:[%s1066 + $0x5c] sm:$0x1]
        %v2168 = vshrl.u32 %v2143, 16
        %v2170 = vrot.slane %v2168, 4
        %v2171 = vshll.u32 %v2143, 16
        %v2173 = vrot.slane %v2171, 5
        %v2174 = vor.u32 %v2170, %v2173
        %v2175 = vrot.slane %v2174, 4
        %v2177 = vshll.u32 %v2144, 16
        %v2179 = vrot.slane %v2177, 5
        %v2180 = vsel %vm1187, %v2175, %v2179
        %v2181 = vshrl.u32 %v2144, 16
        %v2183 = vrot.slane %v2181, 4
        %v2184 = vor.u32 %v2183, %v2179
        %v2185 = vrot.slane %v2184, 4
        %v2187 = vshll.u32 %v2145, 16
        %v2189 = vrot.slane %v2187, 5
        %v2190 = vsel %vm1187, %v2185, %v2189
        %v2192 = vshrl.u32 %v2146, 16
        %v2194 = vrot.slane %v2192, 4
        %v2195 = vshll.u32 %v2146, 16
        %v2197 = vrot.slane %v2195, 5
        %v2198 = vor.u32 %v2194, %v2197
        %v2199 = vrot.slane %v2198, 4
        %v2201 = vshll.u32 %v2147, 16
        %v2203 = vrot.slane %v2201, 5
        %v2204 = vsel %vm1187, %v2199, %v2203
        %v2205 = vshrl.u32 %v2147, 16
        %v2207 = vrot.slane %v2205, 4
        %v2208 = vor.u32 %v2207, %v2203
        %v2209 = vrot.slane %v2208, 4
        %v2211 = vshll.u32 %v2148, 16
        %v2213 = vrot.slane %v2211, 5
        %v2214 = vsel %vm1187, %v2209, %v2213
        %v2216 = vshrl.u32 %v2149, 16
        %v2218 = vrot.slane %v2216, 4
        %v2219 = vshll.u32 %v2149, 16
        %v2221 = vrot.slane %v2219, 5
        %v2222 = vor.u32 %v2218, %v2221
        %v2223 = vrot.slane %v2222, 4
        %v2225 = vshll.u32 %v2150, 16
        %v2227 = vrot.slane %v2225, 5
        %v2228 = vsel %vm1187, %v2223, %v2227
        %v2229 = vshrl.u32 %v2150, 16
        %v2231 = vrot.slane %v2229, 4
        %v2232 = vor.u32 %v2231, %v2227
        %v2233 = vrot.slane %v2232, 4
        %v2235 = vshll.u32 %v2151, 16
        %v2237 = vrot.slane %v2235, 5
        %v2238 = vsel %vm1187, %v2233, %v2237
        %v2240 = vshrl.u32 %v2152, 16
        %v2242 = vrot.slane %v2240, 4
        %v2243 = vshll.u32 %v2152, 16
        %v2245 = vrot.slane %v2243, 5
        %v2246 = vor.u32 %v2242, %v2245
        %v2247 = vrot.slane %v2246, 4
        %v2249 = vshll.u32 %v2153, 16
        %v2251 = vrot.slane %v2249, 5
        %v2252 = vsel %vm1187, %v2247, %v2251
        %v2253 = vshrl.u32 %v2153, 16
        %v2255 = vrot.slane %v2253, 4
        %v2256 = vor.u32 %v2255, %v2251
        %v2257 = vrot.slane %v2256, 4
        %v2259 = vshll.u32 %v2154, 16
        %v2261 = vrot.slane %v2259, 5
        %v2262 = vsel %vm1187, %v2257, %v2261
        %v2264 = vshrl.u32 %v2155, 16
        %v2266 = vrot.slane %v2264, 4
        %v2267 = vshll.u32 %v2155, 16
        %v2269 = vrot.slane %v2267, 5
        %v2270 = vor.u32 %v2266, %v2269
        %v2271 = vrot.slane %v2270, 4
        %v2273 = vshll.u32 %v2156, 16
        %v2275 = vrot.slane %v2273, 5
        %v2276 = vsel %vm1187, %v2271, %v2275
        %v2277 = vshrl.u32 %v2156, 16
        %v2279 = vrot.slane %v2277, 4
        %v2280 = vor.u32 %v2279, %v2275
        %v2281 = vrot.slane %v2280, 4
        %v2283 = vshll.u32 %v2157, 16
        %v2285 = vrot.slane %v2283, 5
        %v2286 = vsel %vm1187, %v2281, %v2285
        %v2288 = vshrl.u32 %v2158, 16
        %v2290 = vrot.slane %v2288, 4
        %v2291 = vshll.u32 %v2158, 16
        %v2293 = vrot.slane %v2291, 5
        %v2294 = vor.u32 %v2290, %v2293
        %v2295 = vrot.slane %v2294, 4
        %v2297 = vshll.u32 %v2159, 16
        %v2299 = vrot.slane %v2297, 5
        %v2300 = vsel %vm1187, %v2295, %v2299
        %v2301 = vshrl.u32 %v2159, 16
        %v2303 = vrot.slane %v2301, 4
        %v2304 = vor.u32 %v2303, %v2299
        %v2305 = vrot.slane %v2304, 4
        %v2307 = vshll.u32 %v2160, 16
        %v2309 = vrot.slane %v2307, 5
        %v2310 = vsel %vm1187, %v2305, %v2309
        %v2312 = vshrl.u32 %v2161, 16
        %v2314 = vrot.slane %v2312, 4
        %v2315 = vshll.u32 %v2161, 16
        %v2317 = vrot.slane %v2315, 5
        %v2318 = vor.u32 %v2314, %v2317
        %v2319 = vrot.slane %v2318, 4
        %v2321 = vshll.u32 %v2162, 16
        %v2323 = vrot.slane %v2321, 5
        %v2324 = vsel %vm1187, %v2319, %v2323
        %v2325 = vshrl.u32 %v2162, 16
        %v2327 = vrot.slane %v2325, 4
        %v2328 = vor.u32 %v2327, %v2323
        %v2329 = vrot.slane %v2328, 4
        %v2331 = vshll.u32 %v2163, 16
        %v2333 = vrot.slane %v2331, 5
        %v2334 = vsel %vm1187, %v2329, %v2333
        %v2336 = vshrl.u32 %v2164, 16
        %v2338 = vrot.slane %v2336, 4
        %v2339 = vshll.u32 %v2164, 16
        %v2341 = vrot.slane %v2339, 5
        %v2342 = vor.u32 %v2338, %v2341
        %v2343 = vrot.slane %v2342, 4
        %v2345 = vshll.u32 %v2165, 16
        %v2347 = vrot.slane %v2345, 5
        %v2348 = vsel %vm1187, %v2343, %v2347
        %v2349 = vshrl.u32 %v2165, 16
        %v2351 = vrot.slane %v2349, 4
        %v2352 = vor.u32 %v2351, %v2347
        %v2353 = vrot.slane %v2352, 4
        %v2355 = vshll.u32 %v2166, 16
        %v2357 = vrot.slane %v2355, 5
        %v2358 = vsel %vm1187, %v2353, %v2357
        %s2359 = scalar_lea.vmem %s5, 8
        %v2360 = vld [vmem:[%s2359] sm:$0x3]
        %v2361 = vunpack.c.l.b16 %v2180
        %v2362 = vunpack.c.l.b16 %v2190
        %v2363 = vunpack.c.l.b16 %v2204
        %v2364 = vunpack.c.l.b16 %v2214
        %v2365 = vunpack.c.l.b16 %v2228
        %v2366 = vunpack.c.l.b16 %v2238
        %v2367 = vunpack.c.l.b16 %v2252
        %v2368 = vunpack.c.l.b16 %v2262
        %v2369 = vunpack.c.l.b16 %v2276
        %v2370 = vunpack.c.l.b16 %v2286
        %v2371 = vunpack.c.l.b16 %v2300
        %v2372 = vunpack.c.l.b16 %v2310
        %v2373 = vunpack.c.l.b16 %v2324
        %v2374 = vunpack.c.l.b16 %v2334
        %v2375 = vunpack.c.l.b16 %v2348
        %v2376 = vunpack.c.l.b16 %v2358
        %v2377 = vpack.c.b16 %v2362, %v2361
        %v2378 = vpack.c.b16 %v2364, %v2363
        %v2379 = vpack.c.b16 %v2366, %v2365
        %v2380 = vpack.c.b16 %v2368, %v2367
        %v2381 = vpack.c.b16 %v2370, %v2369
        %v2382 = vpack.c.b16 %v2372, %v2371
        %v2383 = vpack.c.b16 %v2374, %v2373
        %v2384 = vpack.c.b16 %v2376, %v2375
        %v2386 = vsel %vm1406, %v2377, 0
        %v2389 = vsel %vm1406, %v2378, 0
        %v2392 = vsel %vm1406, %v2379, 0
        %v2395 = vsel %vm1406, %v2380, 0
        %v2398 = vsel %vm1406, %v2381, 0
        %v2401 = vsel %vm1406, %v2382, 0
        %v2404 = vsel %vm1406, %v2383, 0
        %v2407 = vsel %vm1406, %v2384, 0
        %v2410 = vsel %vm1431, %v2360, 0
        %2412 = vmatprep.subr.bf16.mxu0 0
        %2413 = vmatpush1.bf16.msra.mxu0 %v2410
        %2414 = vmatprep.subr.bf16.mxu0 0
        %2415 = vmatpush1.bf16.msra.mxu0 0
        %2416 = vmatprep.subr.bf16.mxu0 0
        %2417 = vmatpush1.bf16.msra.mxu0 0
        %2418 = vmatprep.subr.bf16.mxu0 0
        %2419 = vmatpush1.bf16.msra.mxu0 0
        %2420 = vmatprep.subr.bf16.mxu0 0
        %2421 = vmatpush1.bf16.msra.mxu0 0
        %2422 = vmatprep.subr.bf16.mxu0 0
        %2423 = vmatpush1.bf16.msra.mxu0 0
        %2424 = vmatprep.subr.bf16.mxu0 0
        %2425 = vmatpush1.bf16.msra.mxu0 0
        %2426 = vmatprep.subr.bf16.mxu0 0
        %2427 = vmatpush1.bf16.msra.mxu0 0
        %2428 = vmatprep.subr.bf16.mxu0 0
        %2429 = vmatpush1.bf16.msra.mxu0 0
        %2430 = vmatprep.subr.bf16.mxu0 0
        %2431 = vmatpush1.bf16.msra.mxu0 0
        %2432 = vmatprep.subr.bf16.mxu0 0
        %2433 = vmatpush1.bf16.msra.mxu0 0
        %2434 = vmatprep.subr.bf16.mxu0 0
        %2435 = vmatpush1.bf16.msra.mxu0 0
        %2436 = vmatprep.subr.bf16.mxu0 0
        %2437 = vmatpush1.bf16.msra.mxu0 0
        %2438 = vmatprep.subr.bf16.mxu0 0
        %2439 = vmatpush1.bf16.msra.mxu0 0
        %2440 = vmatprep.subr.bf16.mxu0 0
        %2441 = vmatpush1.bf16.msra.mxu0 0
        %2442 = vmatprep.subr.bf16.mxu0 0
        %2443 = vmatpush1.bf16.msra.mxu0 0
        %2444 = vmatprep.mubr.bf16.mxu0 0
        %2445 = vmatmul.mubr.bf16.gmra.mrb[0].mxu0 %v2386
        %v2446 = vpop.f32.mrb[0].mxu0
        %v2447 = vadd.f32 0.0, %v2446
        %v2448 = vpop.f32.mrb[0].mxu0
        %v2449 = vpop.f32.mrb[0].mxu0
        %v2450 = vadd.f32 0.0, %v2449
        %v2451 = vpop.f32.mrb[0].mxu0
        %2452 = vmatprep.mubr.bf16.mxu0 0
        %2453 = vmatmul.mubr.bf16.gmra.mrb[0].mxu0 %v2389
        %v2454 = vpop.f32.mrb[0].mxu0
        %v2455 = vadd.f32 0.0, %v2454
        %v2456 = vpop.f32.mrb[0].mxu0
        %v2457 = vpop.f32.mrb[0].mxu0
        %v2458 = vadd.f32 0.0, %v2457
        %v2459 = vpop.f32.mrb[0].mxu0
        %2460 = vmatprep.mubr.bf16.mxu0 0
        %2461 = vmatmul.mubr.bf16.gmra.mrb[0].mxu0 %v2392
        %v2462 = vpop.f32.mrb[0].mxu0
        %v2463 = vadd.f32 0.0, %v2462
        %v2464 = vpop.f32.mrb[0].mxu0
        %v2465 = vpop.f32.mrb[0].mxu0
        %v2466 = vadd.f32 0.0, %v2465
        %v2467 = vpop.f32.mrb[0].mxu0
        %2468 = vmatprep.mubr.bf16.mxu0 0
        %2469 = vmatmul.mubr.bf16.gmra.mrb[0].mxu0 %v2395
        %v2470 = vpop.f32.mrb[0].mxu0
        %v2471 = vadd.f32 0.0, %v2470
        %v2472 = vpop.f32.mrb[0].mxu0
        %v2473 = vpop.f32.mrb[0].mxu0
        %v2474 = vadd.f32 0.0, %v2473
        %v2475 = vpop.f32.mrb[0].mxu0
        %2476 = vmatprep.mubr.bf16.mxu0 0
        %2477 = vmatmul.mubr.bf16.gmra.mrb[0].mxu0 %v2398
        %v2478 = vpop.f32.mrb[0].mxu0
        %v2479 = vadd.f32 0.0, %v2478
        %v2480 = vpop.f32.mrb[0].mxu0
        %v2481 = vpop.f32.mrb[0].mxu0
        %v2482 = vadd.f32 0.0, %v2481
        %v2483 = vpop.f32.mrb[0].mxu0
        %2484 = vmatprep.mubr.bf16.mxu0 0
        %2485 = vmatmul.mubr.bf16.gmra.mrb[0].mxu0 %v2401
        %v2486 = vpop.f32.mrb[0].mxu0
        %v2487 = vadd.f32 0.0, %v2486
        %v2488 = vpop.f32.mrb[0].mxu0
        %v2489 = vpop.f32.mrb[0].mxu0
        %v2490 = vadd.f32 0.0, %v2489
        %v2491 = vpop.f32.mrb[0].mxu0
        %2492 = vmatprep.mubr.bf16.mxu0 0
        %2493 = vmatmul.mubr.bf16.gmra.mrb[0].mxu0 %v2404
        %v2494 = vpop.f32.mrb[0].mxu0
        %v2495 = vadd.f32 0.0, %v2494
        %v2496 = vpop.f32.mrb[0].mxu0
        %v2497 = vpop.f32.mrb[0].mxu0
        %v2498 = vadd.f32 0.0, %v2497
        %v2499 = vpop.f32.mrb[0].mxu0
        %2500 = vmatprep.mubr.bf16.mxu0 0
        %2501 = vmatmul.mubr.bf16.gmra.mrb[0].mxu0 %v2407
        %v2502 = vpop.f32.mrb[0].mxu0
        %v2503 = vadd.f32 0.0, %v2502
        %v2504 = vpop.f32.mrb[0].mxu0
        %v2505 = vpop.f32.mrb[0].mxu0
        %v2506 = vadd.f32 0.0, %v2505
        %v2507 = vpop.f32.mrb[0].mxu0
        %2508 = vdwg.mxu0
        %v2509 = vadd.f32 %v2127, %v2447
        %v2510 = vadd.f32 %v2128, %v2450
        %v2511 = vadd.f32 %v2129, %v2455
        %v2512 = vadd.f32 %v2130, %v2458
        %v2513 = vadd.f32 %v2131, %v2463
        %v2514 = vadd.f32 %v2132, %v2466
        %v2515 = vadd.f32 %v2133, %v2471
        %v2516 = vadd.f32 %v2134, %v2474
        %v2517 = vadd.f32 %v2135, %v2479
        %v2518 = vadd.f32 %v2136, %v2482
        %v2519 = vadd.f32 %v2137, %v2487
        %v2520 = vadd.f32 %v2138, %v2490
        %v2521 = vadd.f32 %v2139, %v2495
        %v2522 = vadd.f32 %v2140, %v2498
        %v2523 = vadd.f32 %v2141, %v2503
        %v2524 = vadd.f32 %v2142, %v2506
        %v2525 = vld [vmem:[%s1066] sm:$0xe]
        %v2526 = vld [vmem:[%s1066 + $0xc] sm:$0xe]
        %v2527 = vld [vmem:[%s1066 + $0x18] sm:$0xe]
        %v2528 = vld [vmem:[%s1066 + $0x24] sm:$0xe]
        %v2529 = vld [vmem:[%s1066 + $0x30] sm:$0xe]
        %v2530 = vld [vmem:[%s1066 + $0x3c] sm:$0xe]
        %v2531 = vld [vmem:[%s1066 + $0x48] sm:$0xe]
        %v2532 = vld [vmem:[%s1066 + $0x54] sm:$0xe]
        %v2557 = vrot.slane %v2525, 5
        %v2558 = vrot.slane %v2557, 4
        %v2559 = vrot.slane %v2144, 5
        %v2560 = vsel %vm1722, %v2558, %v2559
        %v2561 = vrot.slane %v2559, 4
        %v2562 = vrot.slane %v2145, 5
        %v2563 = vsel %vm1722, %v2561, %v2562
        %v2564 = vrot.slane %v2526, 5
        %v2565 = vrot.slane %v2564, 4
        %v2566 = vrot.slane %v2147, 5
        %v2567 = vsel %vm1722, %v2565, %v2566
        %v2568 = vrot.slane %v2566, 4
        %v2569 = vrot.slane %v2148, 5
        %v2570 = vsel %vm1722, %v2568, %v2569
        %v2571 = vrot.slane %v2527, 5
        %v2572 = vrot.slane %v2571, 4
        %v2573 = vrot.slane %v2150, 5
        %v2574 = vsel %vm1722, %v2572, %v2573
        %v2575 = vrot.slane %v2573, 4
        %v2576 = vrot.slane %v2151, 5
        %v2577 = vsel %vm1722, %v2575, %v2576
        %v2578 = vrot.slane %v2528, 5
        %v2579 = vrot.slane %v2578, 4
        %v2580 = vrot.slane %v2153, 5
        %v2581 = vsel %vm1722, %v2579, %v2580
        %v2582 = vrot.slane %v2580, 4
        %v2583 = vrot.slane %v2154, 5
        %v2584 = vsel %vm1722, %v2582, %v2583
        %v2585 = vrot.slane %v2529, 5
        %v2586 = vrot.slane %v2585, 4
        %v2587 = vrot.slane %v2156, 5
        %v2588 = vsel %vm1722, %v2586, %v2587
        %v2589 = vrot.slane %v2587, 4
        %v2590 = vrot.slane %v2157, 5
        %v2591 = vsel %vm1722, %v2589, %v2590
        %v2592 = vrot.slane %v2530, 5
        %v2593 = vrot.slane %v2592, 4
        %v2594 = vrot.slane %v2159, 5
        %v2595 = vsel %vm1722, %v2593, %v2594
        %v2596 = vrot.slane %v2594, 4
        %v2597 = vrot.slane %v2160, 5
        %v2598 = vsel %vm1722, %v2596, %v2597
        %v2599 = vrot.slane %v2531, 5
        %v2600 = vrot.slane %v2599, 4
        %v2601 = vrot.slane %v2162, 5
        %v2602 = vsel %vm1722, %v2600, %v2601
        %v2603 = vrot.slane %v2601, 4
        %v2604 = vrot.slane %v2163, 5
        %v2605 = vsel %vm1722, %v2603, %v2604
        %v2606 = vrot.slane %v2532, 5
        %v2607 = vrot.slane %v2606, 4
        %v2608 = vrot.slane %v2165, 5
        %v2609 = vsel %vm1722, %v2607, %v2608
        %v2610 = vrot.slane %v2608, 4
        %v2611 = vrot.slane %v2166, 5
        %v2612 = vsel %vm1722, %v2610, %v2611
        %s2613 = scalar_lea.vmem %s5, 10
        %v2614 = vld [vmem:[%s2613] sm:$0x3]
        %v2615 = vunpack.c.l.b16 %v2560
        %v2616 = vunpack.c.l.b16 %v2563
        %v2617 = vunpack.c.l.b16 %v2567
        %v2618 = vunpack.c.l.b16 %v2570
        %v2619 = vunpack.c.l.b16 %v2574
        %v2620 = vunpack.c.l.b16 %v2577
        %v2621 = vunpack.c.l.b16 %v2581
        %v2622 = vunpack.c.l.b16 %v2584
        %v2623 = vunpack.c.l.b16 %v2588
        %v2624 = vunpack.c.l.b16 %v2591
        %v2625 = vunpack.c.l.b16 %v2595
        %v2626 = vunpack.c.l.b16 %v2598
        %v2627 = vunpack.c.l.b16 %v2602
        %v2628 = vunpack.c.l.b16 %v2605
        %v2629 = vunpack.c.l.b16 %v2609
        %v2630 = vunpack.c.l.b16 %v2612
        %v2631 = vpack.c.b16 %v2616, %v2615
        %v2632 = vpack.c.b16 %v2618, %v2617
        %v2633 = vpack.c.b16 %v2620, %v2619
        %v2634 = vpack.c.b16 %v2622, %v2621
        %v2635 = vpack.c.b16 %v2624, %v2623
        %v2636 = vpack.c.b16 %v2626, %v2625
        %v2637 = vpack.c.b16 %v2628, %v2627
        %v2638 = vpack.c.b16 %v2630, %v2629
        %v2640 = vsel %vm1406, %v2631, 0
        %v2643 = vsel %vm1406, %v2632, 0
        %v2646 = vsel %vm1406, %v2633, 0
        %v2649 = vsel %vm1406, %v2634, 0
        %v2652 = vsel %vm1406, %v2635, 0
        %v2655 = vsel %vm1406, %v2636, 0
        %v2658 = vsel %vm1406, %v2637, 0
        %v2661 = vsel %vm1406, %v2638, 0
        %v2664 = vsel %vm1431, %v2614, 0
        %2666 = vmatprep.subr.bf16.mxu0 0
        %2667 = vmatpush1.bf16.msra.mxu0 %v2664
        %2668 = vmatprep.subr.bf16.mxu0 0
        %2669 = vmatpush1.bf16.msra.mxu0 0
        %2670 = vmatprep.subr.bf16.mxu0 0
        %2671 = vmatpush1.bf16.msra.mxu0 0
        %2672 = vmatprep.subr.bf16.mxu0 0
        %2673 = vmatpush1.bf16.msra.mxu0 0
        %2674 = vmatprep.subr.bf16.mxu0 0
        %2675 = vmatpush1.bf16.msra.mxu0 0
        %2676 = vmatprep.subr.bf16.mxu0 0
        %2677 = vmatpush1.bf16.msra.mxu0 0
        %2678 = vmatprep.subr.bf16.mxu0 0
        %2679 = vmatpush1.bf16.msra.mxu0 0
        %2680 = vmatprep.subr.bf16.mxu0 0
        %2681 = vmatpush1.bf16.msra.mxu0 0
        %2682 = vmatprep.subr.bf16.mxu0 0
        %2683 = vmatpush1.bf16.msra.mxu0 0
        %2684 = vmatprep.subr.bf16.mxu0 0
        %2685 = vmatpush1.bf16.msra.mxu0 0
        %2686 = vmatprep.subr.bf16.mxu0 0
        %2687 = vmatpush1.bf16.msra.mxu0 0
        %2688 = vmatprep.subr.bf16.mxu0 0
        %2689 = vmatpush1.bf16.msra.mxu0 0
        %2690 = vmatprep.subr.bf16.mxu0 0
        %2691 = vmatpush1.bf16.msra.mxu0 0
        %2692 = vmatprep.subr.bf16.mxu0 0
        %2693 = vmatpush1.bf16.msra.mxu0 0
        %2694 = vmatprep.subr.bf16.mxu0 0
        %2695 = vmatpush1.bf16.msra.mxu0 0
        %2696 = vmatprep.subr.bf16.mxu0 0
        %2697 = vmatpush1.bf16.msra.mxu0 0
        %2698 = vmatprep.mubr.bf16.mxu0 0
        %2699 = vmatmul.mubr.bf16.gmra.mrb[0].mxu0 %v2640
        %v2700 = vpop.f32.mrb[0].mxu0
        %v2701 = vadd.f32 0.0, %v2700
        %v2702 = vpop.f32.mrb[0].mxu0
        %v2703 = vpop.f32.mrb[0].mxu0
        %v2704 = vadd.f32 0.0, %v2703
        %v2705 = vpop.f32.mrb[0].mxu0
        %2706 = vmatprep.mubr.bf16.mxu0 0
        %2707 = vmatmul.mubr.bf16.gmra.mrb[0].mxu0 %v2643
        %v2708 = vpop.f32.mrb[0].mxu0
        %v2709 = vadd.f32 0.0, %v2708
        %v2710 = vpop.f32.mrb[0].mxu0
        %v2711 = vpop.f32.mrb[0].mxu0
        %v2712 = vadd.f32 0.0, %v2711
        %v2713 = vpop.f32.mrb[0].mxu0
        %2714 = vmatprep.mubr.bf16.mxu0 0
        %2715 = vmatmul.mubr.bf16.gmra.mrb[0].mxu0 %v2646
        %v2716 = vpop.f32.mrb[0].mxu0
        %v2717 = vadd.f32 0.0, %v2716
        %v2718 = vpop.f32.mrb[0].mxu0
        %v2719 = vpop.f32.mrb[0].mxu0
        %v2720 = vadd.f32 0.0, %v2719
        %v2721 = vpop.f32.mrb[0].mxu0
        %2722 = vmatprep.mubr.bf16.mxu0 0
        %2723 = vmatmul.mubr.bf16.gmra.mrb[0].mxu0 %v2649
        %v2724 = vpop.f32.mrb[0].mxu0
        %v2725 = vadd.f32 0.0, %v2724
        %v2726 = vpop.f32.mrb[0].mxu0
        %v2727 = vpop.f32.mrb[0].mxu0
        %v2728 = vadd.f32 0.0, %v2727
        %v2729 = vpop.f32.mrb[0].mxu0
        %2730 = vmatprep.mubr.bf16.mxu0 0
        %2731 = vmatmul.mubr.bf16.gmra.mrb[0].mxu0 %v2652
        %v2732 = vpop.f32.mrb[0].mxu0
        %v2733 = vadd.f32 0.0, %v2732
        %v2734 = vpop.f32.mrb[0].mxu0
        %v2735 = vpop.f32.mrb[0].mxu0
        %v2736 = vadd.f32 0.0, %v2735
        %v2737 = vpop.f32.mrb[0].mxu0
        %2738 = vmatprep.mubr.bf16.mxu0 0
        %2739 = vmatmul.mubr.bf16.gmra.mrb[0].mxu0 %v2655
        %v2740 = vpop.f32.mrb[0].mxu0
        %v2741 = vadd.f32 0.0, %v2740
        %v2742 = vpop.f32.mrb[0].mxu0
        %v2743 = vpop.f32.mrb[0].mxu0
        %v2744 = vadd.f32 0.0, %v2743
        %v2745 = vpop.f32.mrb[0].mxu0
        %2746 = vmatprep.mubr.bf16.mxu0 0
        %2747 = vmatmul.mubr.bf16.gmra.mrb[0].mxu0 %v2658
        %v2748 = vpop.f32.mrb[0].mxu0
        %v2749 = vadd.f32 0.0, %v2748
        %v2750 = vpop.f32.mrb[0].mxu0
        %v2751 = vpop.f32.mrb[0].mxu0
        %v2752 = vadd.f32 0.0, %v2751
        %v2753 = vpop.f32.mrb[0].mxu0
        %2754 = vmatprep.mubr.bf16.mxu0 0
        %2755 = vmatmul.mubr.bf16.gmra.mrb[0].mxu0 %v2661
        %v2756 = vpop.f32.mrb[0].mxu0
        %v2757 = vadd.f32 0.0, %v2756
        %v2758 = vpop.f32.mrb[0].mxu0
        %v2759 = vpop.f32.mrb[0].mxu0
        %v2760 = vadd.f32 0.0, %v2759
        %v2761 = vpop.f32.mrb[0].mxu0
        %2762 = vdwg.mxu0
        %v2763 = vadd.f32 %v2509, %v2701
        %v2764 = vadd.f32 %v2510, %v2704
        %v2765 = vadd.f32 %v2511, %v2709
        %v2766 = vadd.f32 %v2512, %v2712
        %v2767 = vadd.f32 %v2513, %v2717
        %v2768 = vadd.f32 %v2514, %v2720
        %v2769 = vadd.f32 %v2515, %v2725
        %v2770 = vadd.f32 %v2516, %v2728
        %v2771 = vadd.f32 %v2517, %v2733
        %v2772 = vadd.f32 %v2518, %v2736
        %v2773 = vadd.f32 %v2519, %v2741
        %v2774 = vadd.f32 %v2520, %v2744
        %v2775 = vadd.f32 %v2521, %v2749
        %v2776 = vadd.f32 %v2522, %v2752
        %v2777 = vadd.f32 %v2523, %v2757
        %v2778 = vadd.f32 %v2524, %v2760
        %s2779 = scalar_lea.vmem [#allocation2], 24
        %v2780 = vld [vmem:[%s2779] sm:$0xf]
        %v2781 = vld [vmem:[%s2779 + $0x4] sm:$0xf]
        %v2782 = vld [vmem:[%s2779 + $0xc] sm:$0xf]
        %v2783 = vld [vmem:[%s2779 + $0x10] sm:$0xf]
        %v2784 = vld [vmem:[%s2779 + $0x18] sm:$0xf]
        %v2785 = vld [vmem:[%s2779 + $0x1c] sm:$0xf]
        %v2786 = vld [vmem:[%s2779 + $0x24] sm:$0xf]
        %v2787 = vld [vmem:[%s2779 + $0x28] sm:$0xf]
        %v2788 = vld [vmem:[%s2779 + $0x30] sm:$0xf]
        %v2789 = vld [vmem:[%s2779 + $0x34] sm:$0xf]
        %v2790 = vld [vmem:[%s2779 + $0x3c] sm:$0xf]
        %v2791 = vld [vmem:[%s2779 + $0x40] sm:$0xf]
        %v2792 = vld [vmem:[%s2779 + $0x48] sm:$0xf]
        %v2793 = vld [vmem:[%s2779 + $0x4c] sm:$0xf]
        %v2794 = vld [vmem:[%s2779 + $0x54] sm:$0xf]
        %v2795 = vld [vmem:[%s2779 + $0x58] sm:$0xf]
        %s2796 = scalar_lea.vmem %s5, 12
        %v2797 = vld [vmem:[%s2796] sm:$0x3]
        %v2814 = vunpack.c.l.b16 %v2780
        %v2815 = vunpack.c.l.b16 %v2781
        %v2816 = vunpack.c.l.b16 %v2782
        %v2817 = vunpack.c.l.b16 %v2783
        %v2818 = vunpack.c.l.b16 %v2784
        %v2819 = vunpack.c.l.b16 %v2785
        %v2820 = vunpack.c.l.b16 %v2786
        %v2821 = vunpack.c.l.b16 %v2787
        %v2822 = vunpack.c.l.b16 %v2788
        %v2823 = vunpack.c.l.b16 %v2789
        %v2824 = vunpack.c.l.b16 %v2790
        %v2825 = vunpack.c.l.b16 %v2791
        %v2826 = vunpack.c.l.b16 %v2792
        %v2827 = vunpack.c.l.b16 %v2793
        %v2828 = vunpack.c.l.b16 %v2794
        %v2829 = vunpack.c.l.b16 %v2795
        %v2830 = vpack.c.b16 %v2815, %v2814
        %v2831 = vpack.c.b16 %v2817, %v2816
        %v2832 = vpack.c.b16 %v2819, %v2818
        %v2833 = vpack.c.b16 %v2821, %v2820
        %v2834 = vpack.c.b16 %v2823, %v2822
        %v2835 = vpack.c.b16 %v2825, %v2824
        %v2836 = vpack.c.b16 %v2827, %v2826
        %v2837 = vpack.c.b16 %v2829, %v2828
        %v2839 = vsel %vm1406, %v2830, 0
        %v2842 = vsel %vm1406, %v2831, 0
        %v2845 = vsel %vm1406, %v2832, 0
        %v2848 = vsel %vm1406, %v2833, 0
        %v2851 = vsel %vm1406, %v2834, 0
        %v2854 = vsel %vm1406, %v2835, 0
        %v2857 = vsel %vm1406, %v2836, 0
        %v2860 = vsel %vm1406, %v2837, 0
        %v2863 = vsel %vm1431, %v2797, 0
        %2865 = vmatprep.subr.bf16.mxu0 0
        %2866 = vmatpush1.bf16.msra.mxu0 %v2863
        %2867 = vmatprep.subr.bf16.mxu0 0
        %2868 = vmatpush1.bf16.msra.mxu0 0
        %2869 = vmatprep.subr.bf16.mxu0 0
        %2870 = vmatpush1.bf16.msra.mxu0 0
        %2871 = vmatprep.subr.bf16.mxu0 0
        %2872 = vmatpush1.bf16.msra.mxu0 0
        %2873 = vmatprep.subr.bf16.mxu0 0
        %2874 = vmatpush1.bf16.msra.mxu0 0
        %2875 = vmatprep.subr.bf16.mxu0 0
        %2876 = vmatpush1.bf16.msra.mxu0 0
        %2877 = vmatprep.subr.bf16.mxu0 0
        %2878 = vmatpush1.bf16.msra.mxu0 0
        %2879 = vmatprep.subr.bf16.mxu0 0
        %2880 = vmatpush1.bf16.msra.mxu0 0
        %2881 = vmatprep.subr.bf16.mxu0 0
        %2882 = vmatpush1.bf16.msra.mxu0 0
        %2883 = vmatprep.subr.bf16.mxu0 0
        %2884 = vmatpush1.bf16.msra.mxu0 0
        %2885 = vmatprep.subr.bf16.mxu0 0
        %2886 = vmatpush1.bf16.msra.mxu0 0
        %2887 = vmatprep.subr.bf16.mxu0 0
        %2888 = vmatpush1.bf16.msra.mxu0 0
        %2889 = vmatprep.subr.bf16.mxu0 0
        %2890 = vmatpush1.bf16.msra.mxu0 0
        %2891 = vmatprep.subr.bf16.mxu0 0
        %2892 = vmatpush1.bf16.msra.mxu0 0
        %2893 = vmatprep.subr.bf16.mxu0 0
        %2894 = vmatpush1.bf16.msra.mxu0 0
        %2895 = vmatprep.subr.bf16.mxu0 0
        %2896 = vmatpush1.bf16.msra.mxu0 0
        %2897 = vmatprep.mubr.bf16.mxu0 0
        %2898 = vmatmul.mubr.bf16.gmra.mrb[0].mxu0 %v2839
        %v2899 = vpop.f32.mrb[0].mxu0
        %v2900 = vadd.f32 0.0, %v2899
        %v2901 = vpop.f32.mrb[0].mxu0
        %v2902 = vpop.f32.mrb[0].mxu0
        %v2903 = vadd.f32 0.0, %v2902
        %v2904 = vpop.f32.mrb[0].mxu0
        %2905 = vmatprep.mubr.bf16.mxu0 0
        %2906 = vmatmul.mubr.bf16.gmra.mrb[0].mxu0 %v2842
        %v2907 = vpop.f32.mrb[0].mxu0
        %v2908 = vadd.f32 0.0, %v2907
        %v2909 = vpop.f32.mrb[0].mxu0
        %v2910 = vpop.f32.mrb[0].mxu0
        %v2911 = vadd.f32 0.0, %v2910
        %v2912 = vpop.f32.mrb[0].mxu0
        %2913 = vmatprep.mubr.bf16.mxu0 0
        %2914 = vmatmul.mubr.bf16.gmra.mrb[0].mxu0 %v2845
        %v2915 = vpop.f32.mrb[0].mxu0
        %v2916 = vadd.f32 0.0, %v2915
        %v2917 = vpop.f32.mrb[0].mxu0
        %v2918 = vpop.f32.mrb[0].mxu0
        %v2919 = vadd.f32 0.0, %v2918
        %v2920 = vpop.f32.mrb[0].mxu0
        %2921 = vmatprep.mubr.bf16.mxu0 0
        %2922 = vmatmul.mubr.bf16.gmra.mrb[0].mxu0 %v2848
        %v2923 = vpop.f32.mrb[0].mxu0
        %v2924 = vadd.f32 0.0, %v2923
        %v2925 = vpop.f32.mrb[0].mxu0
        %v2926 = vpop.f32.mrb[0].mxu0
        %v2927 = vadd.f32 0.0, %v2926
        %v2928 = vpop.f32.mrb[0].mxu0
        %2929 = vmatprep.mubr.bf16.mxu0 0
        %2930 = vmatmul.mubr.bf16.gmra.mrb[0].mxu0 %v2851
        %v2931 = vpop.f32.mrb[0].mxu0
        %v2932 = vadd.f32 0.0, %v2931
        %v2933 = vpop.f32.mrb[0].mxu0
        %v2934 = vpop.f32.mrb[0].mxu0
        %v2935 = vadd.f32 0.0, %v2934
        %v2936 = vpop.f32.mrb[0].mxu0
        %2937 = vmatprep.mubr.bf16.mxu0 0
        %2938 = vmatmul.mubr.bf16.gmra.mrb[0].mxu0 %v2854
        %v2939 = vpop.f32.mrb[0].mxu0
        %v2940 = vadd.f32 0.0, %v2939
        %v2941 = vpop.f32.mrb[0].mxu0
        %v2942 = vpop.f32.mrb[0].mxu0
        %v2943 = vadd.f32 0.0, %v2942
        %v2944 = vpop.f32.mrb[0].mxu0
        %2945 = vmatprep.mubr.bf16.mxu0 0
        %2946 = vmatmul.mubr.bf16.gmra.mrb[0].mxu0 %v2857
        %v2947 = vpop.f32.mrb[0].mxu0
        %v2948 = vadd.f32 0.0, %v2947
        %v2949 = vpop.f32.mrb[0].mxu0
        %v2950 = vpop.f32.mrb[0].mxu0
        %v2951 = vadd.f32 0.0, %v2950
        %v2952 = vpop.f32.mrb[0].mxu0
        %2953 = vmatprep.mubr.bf16.mxu0 0
        %2954 = vmatmul.mubr.bf16.gmra.mrb[0].mxu0 %v2860
        %v2955 = vpop.f32.mrb[0].mxu0
        %v2956 = vadd.f32 0.0, %v2955
        %v2957 = vpop.f32.mrb[0].mxu0
        %v2958 = vpop.f32.mrb[0].mxu0
        %v2959 = vadd.f32 0.0, %v2958
        %v2960 = vpop.f32.mrb[0].mxu0
        %2961 = vdwg.mxu0
        %v2962 = vadd.f32 %v2763, %v2900
        %v2963 = vadd.f32 %v2764, %v2903
        %v2964 = vadd.f32 %v2765, %v2908
        %v2965 = vadd.f32 %v2766, %v2911
        %v2966 = vadd.f32 %v2767, %v2916
        %v2967 = vadd.f32 %v2768, %v2919
        %v2968 = vadd.f32 %v2769, %v2924
        %v2969 = vadd.f32 %v2770, %v2927
        %v2970 = vadd.f32 %v2771, %v2932
        %v2971 = vadd.f32 %v2772, %v2935
        %v2972 = vadd.f32 %v2773, %v2940
        %v2973 = vadd.f32 %v2774, %v2943
        %v2974 = vadd.f32 %v2775, %v2948
        %v2975 = vadd.f32 %v2776, %v2951
        %v2976 = vadd.f32 %v2777, %v2956
        %v2977 = vadd.f32 %v2778, %v2959
        %v2978 = vld [vmem:[%s2779] sm:$0xf]
        %v2979 = vld [vmem:[%s2779 + $0x4] sm:$0xf]
        %v2980 = vld [vmem:[%s2779 + $0x8] sm:$0x1]
        %v2981 = vld [vmem:[%s2779 + $0xc] sm:$0xf]
        %v2982 = vld [vmem:[%s2779 + $0x10] sm:$0xf]
        %v2983 = vld [vmem:[%s2779 + $0x14] sm:$0x1]
        %v2984 = vld [vmem:[%s2779 + $0x18] sm:$0xf]
        %v2985 = vld [vmem:[%s2779 + $0x1c] sm:$0xf]
        %v2986 = vld [vmem:[%s2779 + $0x20] sm:$0x1]
        %v2987 = vld [vmem:[%s2779 + $0x24] sm:$0xf]
        %v2988 = vld [vmem:[%s2779 + $0x28] sm:$0xf]
        %v2989 = vld [vmem:[%s2779 + $0x2c] sm:$0x1]
        %v2990 = vld [vmem:[%s2779 + $0x30] sm:$0xf]
        %v2991 = vld [vmem:[%s2779 + $0x34] sm:$0xf]
        %v2992 = vld [vmem:[%s2779 + $0x38] sm:$0x1]
        %v2993 = vld [vmem:[%s2779 + $0x3c] sm:$0xf]
        %v2994 = vld [vmem:[%s2779 + $0x40] sm:$0xf]
        %v2995 = vld [vmem:[%s2779 + $0x44] sm:$0x1]
        %v2996 = vld [vmem:[%s2779 + $0x48] sm:$0xf]
        %v2997 = vld [vmem:[%s2779 + $0x4c] sm:$0xf]
        %v2998 = vld [vmem:[%s2779 + $0x50] sm:$0x1]
        %v2999 = vld [vmem:[%s2779 + $0x54] sm:$0xf]
        %v3000 = vld [vmem:[%s2779 + $0x58] sm:$0xf]
        %v3001 = vld [vmem:[%s2779 + $0x5c] sm:$0x1]
        %v3003 = vshrl.u32 %v2978, 16
        %v3005 = vrot.slane %v3003, 4
        %v3006 = vshll.u32 %v2978, 16
        %v3008 = vrot.slane %v3006, 5
        %v3009 = vor.u32 %v3005, %v3008
        %v3010 = vrot.slane %v3009, 4
        %v3012 = vshll.u32 %v2979, 16
        %v3014 = vrot.slane %v3012, 5
        %v3015 = vsel %vm1187, %v3010, %v3014
        %v3016 = vshrl.u32 %v2979, 16
        %v3018 = vrot.slane %v3016, 4
        %v3019 = vor.u32 %v3018, %v3014
        %v3020 = vrot.slane %v3019, 4
        %v3022 = vshll.u32 %v2980, 16
        %v3024 = vrot.slane %v3022, 5
        %v3025 = vsel %vm1187, %v3020, %v3024
        %v3027 = vshrl.u32 %v2981, 16
        %v3029 = vrot.slane %v3027, 4
        %v3030 = vshll.u32 %v2981, 16
        %v3032 = vrot.slane %v3030, 5
        %v3033 = vor.u32 %v3029, %v3032
        %v3034 = vrot.slane %v3033, 4
        %v3036 = vshll.u32 %v2982, 16
        %v3038 = vrot.slane %v3036, 5
        %v3039 = vsel %vm1187, %v3034, %v3038
        %v3040 = vshrl.u32 %v2982, 16
        %v3042 = vrot.slane %v3040, 4
        %v3043 = vor.u32 %v3042, %v3038
        %v3044 = vrot.slane %v3043, 4
        %v3046 = vshll.u32 %v2983, 16
        %v3048 = vrot.slane %v3046, 5
        %v3049 = vsel %vm1187, %v3044, %v3048
        %v3051 = vshrl.u32 %v2984, 16
        %v3053 = vrot.slane %v3051, 4
        %v3054 = vshll.u32 %v2984, 16
        %v3056 = vrot.slane %v3054, 5
        %v3057 = vor.u32 %v3053, %v3056
        %v3058 = vrot.slane %v3057, 4
        %v3060 = vshll.u32 %v2985, 16
        %v3062 = vrot.slane %v3060, 5
        %v3063 = vsel %vm1187, %v3058, %v3062
        %v3064 = vshrl.u32 %v2985, 16
        %v3066 = vrot.slane %v3064, 4
        %v3067 = vor.u32 %v3066, %v3062
        %v3068 = vrot.slane %v3067, 4
        %v3070 = vshll.u32 %v2986, 16
        %v3072 = vrot.slane %v3070, 5
        %v3073 = vsel %vm1187, %v3068, %v3072
        %v3075 = vshrl.u32 %v2987, 16
        %v3077 = vrot.slane %v3075, 4
        %v3078 = vshll.u32 %v2987, 16
        %v3080 = vrot.slane %v3078, 5
        %v3081 = vor.u32 %v3077, %v3080
        %v3082 = vrot.slane %v3081, 4
        %v3084 = vshll.u32 %v2988, 16
        %v3086 = vrot.slane %v3084, 5
        %v3087 = vsel %vm1187, %v3082, %v3086
        %v3088 = vshrl.u32 %v2988, 16
        %v3090 = vrot.slane %v3088, 4
        %v3091 = vor.u32 %v3090, %v3086
        %v3092 = vrot.slane %v3091, 4
        %v3094 = vshll.u32 %v2989, 16
        %v3096 = vrot.slane %v3094, 5
        %v3097 = vsel %vm1187, %v3092, %v3096
        %v3099 = vshrl.u32 %v2990, 16
        %v3101 = vrot.slane %v3099, 4
        %v3102 = vshll.u32 %v2990, 16
        %v3104 = vrot.slane %v3102, 5
        %v3105 = vor.u32 %v3101, %v3104
        %v3106 = vrot.slane %v3105, 4
        %v3108 = vshll.u32 %v2991, 16
        %v3110 = vrot.slane %v3108, 5
        %v3111 = vsel %vm1187, %v3106, %v3110
        %v3112 = vshrl.u32 %v2991, 16
        %v3114 = vrot.slane %v3112, 4
        %v3115 = vor.u32 %v3114, %v3110
        %v3116 = vrot.slane %v3115, 4
        %v3118 = vshll.u32 %v2992, 16
        %v3120 = vrot.slane %v3118, 5
        %v3121 = vsel %vm1187, %v3116, %v3120
        %v3123 = vshrl.u32 %v2993, 16
        %v3125 = vrot.slane %v3123, 4
        %v3126 = vshll.u32 %v2993, 16
        %v3128 = vrot.slane %v3126, 5
        %v3129 = vor.u32 %v3125, %v3128
        %v3130 = vrot.slane %v3129, 4
        %v3132 = vshll.u32 %v2994, 16
        %v3134 = vrot.slane %v3132, 5
        %v3135 = vsel %vm1187, %v3130, %v3134
        %v3136 = vshrl.u32 %v2994, 16
        %v3138 = vrot.slane %v3136, 4
        %v3139 = vor.u32 %v3138, %v3134
        %v3140 = vrot.slane %v3139, 4
        %v3142 = vshll.u32 %v2995, 16
        %v3144 = vrot.slane %v3142, 5
        %v3145 = vsel %vm1187, %v3140, %v3144
        %v3147 = vshrl.u32 %v2996, 16
        %v3149 = vrot.slane %v3147, 4
        %v3150 = vshll.u32 %v2996, 16
        %v3152 = vrot.slane %v3150, 5
        %v3153 = vor.u32 %v3149, %v3152
        %v3154 = vrot.slane %v3153, 4
        %v3156 = vshll.u32 %v2997, 16
        %v3158 = vrot.slane %v3156, 5
        %v3159 = vsel %vm1187, %v3154, %v3158
        %v3160 = vshrl.u32 %v2997, 16
        %v3162 = vrot.slane %v3160, 4
        %v3163 = vor.u32 %v3162, %v3158
        %v3164 = vrot.slane %v3163, 4
        %v3166 = vshll.u32 %v2998, 16
        %v3168 = vrot.slane %v3166, 5
        %v3169 = vsel %vm1187, %v3164, %v3168
        %v3171 = vshrl.u32 %v2999, 16
        %v3173 = vrot.slane %v3171, 4
        %v3174 = vshll.u32 %v2999, 16
        %v3176 = vrot.slane %v3174, 5
        %v3177 = vor.u32 %v3173, %v3176
        %v3178 = vrot.slane %v3177, 4
        %v3180 = vshll.u32 %v3000, 16
        %v3182 = vrot.slane %v3180, 5
        %v3183 = vsel %vm1187, %v3178, %v3182
        %v3184 = vshrl.u32 %v3000, 16
        %v3186 = vrot.slane %v3184, 4
        %v3187 = vor.u32 %v3186, %v3182
        %v3188 = vrot.slane %v3187, 4
        %v3190 = vshll.u32 %v3001, 16
        %v3192 = vrot.slane %v3190, 5
        %v3193 = vsel %vm1187, %v3188, %v3192
        %s3194 = scalar_lea.vmem %s5, 14
        %v3195 = vld [vmem:[%s3194] sm:$0x3]
        %v3196 = vunpack.c.l.b16 %v3015
        %v3197 = vunpack.c.l.b16 %v3025
        %v3198 = vunpack.c.l.b16 %v3039
        %v3199 = vunpack.c.l.b16 %v3049
        %v3200 = vunpack.c.l.b16 %v3063
        %v3201 = vunpack.c.l.b16 %v3073
        %v3202 = vunpack.c.l.b16 %v3087
        %v3203 = vunpack.c.l.b16 %v3097
        %v3204 = vunpack.c.l.b16 %v3111
        %v3205 = vunpack.c.l.b16 %v3121
        %v3206 = vunpack.c.l.b16 %v3135
        %v3207 = vunpack.c.l.b16 %v3145
        %v3208 = vunpack.c.l.b16 %v3159
        %v3209 = vunpack.c.l.b16 %v3169
        %v3210 = vunpack.c.l.b16 %v3183
        %v3211 = vunpack.c.l.b16 %v3193
        %v3212 = vpack.c.b16 %v3197, %v3196
        %v3213 = vpack.c.b16 %v3199, %v3198
        %v3214 = vpack.c.b16 %v3201, %v3200
        %v3215 = vpack.c.b16 %v3203, %v3202
        %v3216 = vpack.c.b16 %v3205, %v3204
        %v3217 = vpack.c.b16 %v3207, %v3206
        %v3218 = vpack.c.b16 %v3209, %v3208
        %v3219 = vpack.c.b16 %v3211, %v3210
        %v3221 = vsel %vm1406, %v3212, 0
        %v3224 = vsel %vm1406, %v3213, 0
        %v3227 = vsel %vm1406, %v3214, 0
        %v3230 = vsel %vm1406, %v3215, 0
        %v3233 = vsel %vm1406, %v3216, 0
        %v3236 = vsel %vm1406, %v3217, 0
        %v3239 = vsel %vm1406, %v3218, 0
        %v3242 = vsel %vm1406, %v3219, 0
        %v3245 = vsel %vm1431, %v3195, 0
        %3247 = vmatprep.subr.bf16.mxu0 0
        %3248 = vmatpush1.bf16.msra.mxu0 %v3245
        %3249 = vmatprep.subr.bf16.mxu0 0
        %3250 = vmatpush1.bf16.msra.mxu0 0
        %3251 = vmatprep.subr.bf16.mxu0 0
        %3252 = vmatpush1.bf16.msra.mxu0 0
        %3253 = vmatprep.subr.bf16.mxu0 0
        %3254 = vmatpush1.bf16.msra.mxu0 0
        %3255 = vmatprep.subr.bf16.mxu0 0
        %3256 = vmatpush1.bf16.msra.mxu0 0
        %3257 = vmatprep.subr.bf16.mxu0 0
        %3258 = vmatpush1.bf16.msra.mxu0 0
        %3259 = vmatprep.subr.bf16.mxu0 0
        %3260 = vmatpush1.bf16.msra.mxu0 0
        %3261 = vmatprep.subr.bf16.mxu0 0
        %3262 = vmatpush1.bf16.msra.mxu0 0
        %3263 = vmatprep.subr.bf16.mxu0 0
        %3264 = vmatpush1.bf16.msra.mxu0 0
        %3265 = vmatprep.subr.bf16.mxu0 0
        %3266 = vmatpush1.bf16.msra.mxu0 0
        %3267 = vmatprep.subr.bf16.mxu0 0
        %3268 = vmatpush1.bf16.msra.mxu0 0
        %3269 = vmatprep.subr.bf16.mxu0 0
        %3270 = vmatpush1.bf16.msra.mxu0 0
        %3271 = vmatprep.subr.bf16.mxu0 0
        %3272 = vmatpush1.bf16.msra.mxu0 0
        %3273 = vmatprep.subr.bf16.mxu0 0
        %3274 = vmatpush1.bf16.msra.mxu0 0
        %3275 = vmatprep.subr.bf16.mxu0 0
        %3276 = vmatpush1.bf16.msra.mxu0 0
        %3277 = vmatprep.subr.bf16.mxu0 0
        %3278 = vmatpush1.bf16.msra.mxu0 0
        %3279 = vmatprep.mubr.bf16.mxu0 0
        %3280 = vmatmul.mubr.bf16.gmra.mrb[0].mxu0 %v3221
        %v3281 = vpop.f32.mrb[0].mxu0
        %v3282 = vadd.f32 0.0, %v3281
        %v3283 = vpop.f32.mrb[0].mxu0
        %v3284 = vpop.f32.mrb[0].mxu0
        %v3285 = vadd.f32 0.0, %v3284
        %v3286 = vpop.f32.mrb[0].mxu0
        %3287 = vmatprep.mubr.bf16.mxu0 0
        %3288 = vmatmul.mubr.bf16.gmra.mrb[0].mxu0 %v3224
        %v3289 = vpop.f32.mrb[0].mxu0
        %v3290 = vadd.f32 0.0, %v3289
        %v3291 = vpop.f32.mrb[0].mxu0
        %v3292 = vpop.f32.mrb[0].mxu0
        %v3293 = vadd.f32 0.0, %v3292
        %v3294 = vpop.f32.mrb[0].mxu0
        %3295 = vmatprep.mubr.bf16.mxu0 0
        %3296 = vmatmul.mubr.bf16.gmra.mrb[0].mxu0 %v3227
        %v3297 = vpop.f32.mrb[0].mxu0
        %v3298 = vadd.f32 0.0, %v3297
        %v3299 = vpop.f32.mrb[0].mxu0
        %v3300 = vpop.f32.mrb[0].mxu0
        %v3301 = vadd.f32 0.0, %v3300
        %v3302 = vpop.f32.mrb[0].mxu0
        %3303 = vmatprep.mubr.bf16.mxu0 0
        %3304 = vmatmul.mubr.bf16.gmra.mrb[0].mxu0 %v3230
        %v3305 = vpop.f32.mrb[0].mxu0
        %v3306 = vadd.f32 0.0, %v3305
        %v3307 = vpop.f32.mrb[0].mxu0
        %v3308 = vpop.f32.mrb[0].mxu0
        %v3309 = vadd.f32 0.0, %v3308
        %v3310 = vpop.f32.mrb[0].mxu0
        %3311 = vmatprep.mubr.bf16.mxu0 0
        %3312 = vmatmul.mubr.bf16.gmra.mrb[0].mxu0 %v3233
        %v3313 = vpop.f32.mrb[0].mxu0
        %v3314 = vadd.f32 0.0, %v3313
        %v3315 = vpop.f32.mrb[0].mxu0
        %v3316 = vpop.f32.mrb[0].mxu0
        %v3317 = vadd.f32 0.0, %v3316
        %v3318 = vpop.f32.mrb[0].mxu0
        %3319 = vmatprep.mubr.bf16.mxu0 0
        %3320 = vmatmul.mubr.bf16.gmra.mrb[0].mxu0 %v3236
        %v3321 = vpop.f32.mrb[0].mxu0
        %v3322 = vadd.f32 0.0, %v3321
        %v3323 = vpop.f32.mrb[0].mxu0
        %v3324 = vpop.f32.mrb[0].mxu0
        %v3325 = vadd.f32 0.0, %v3324
        %v3326 = vpop.f32.mrb[0].mxu0
        %3327 = vmatprep.mubr.bf16.mxu0 0
        %3328 = vmatmul.mubr.bf16.gmra.mrb[0].mxu0 %v3239
        %v3329 = vpop.f32.mrb[0].mxu0
        %v3330 = vadd.f32 0.0, %v3329
        %v3331 = vpop.f32.mrb[0].mxu0
        %v3332 = vpop.f32.mrb[0].mxu0
        %v3333 = vadd.f32 0.0, %v3332
        %v3334 = vpop.f32.mrb[0].mxu0
        %3335 = vmatprep.mubr.bf16.mxu0 0
        %3336 = vmatmul.mubr.bf16.gmra.mrb[0].mxu0 %v3242
        %v3337 = vpop.f32.mrb[0].mxu0
        %v3338 = vadd.f32 0.0, %v3337
        %v3339 = vpop.f32.mrb[0].mxu0
        %v3340 = vpop.f32.mrb[0].mxu0
        %v3341 = vadd.f32 0.0, %v3340
        %v3342 = vpop.f32.mrb[0].mxu0
        %3343 = vdwg.mxu0
        %v3344 = vadd.f32 %v2962, %v3282
        %v3345 = vadd.f32 %v2963, %v3285
        %v3346 = vadd.f32 %v2964, %v3290
        %v3347 = vadd.f32 %v2965, %v3293
        %v3348 = vadd.f32 %v2966, %v3298
        %v3349 = vadd.f32 %v2967, %v3301
        %v3350 = vadd.f32 %v2968, %v3306
        %v3351 = vadd.f32 %v2969, %v3309
        %v3352 = vadd.f32 %v2970, %v3314
        %v3353 = vadd.f32 %v2971, %v3317
        %v3354 = vadd.f32 %v2972, %v3322
        %v3355 = vadd.f32 %v2973, %v3325
        %v3356 = vadd.f32 %v2974, %v3330
        %v3357 = vadd.f32 %v2975, %v3333
        %v3358 = vadd.f32 %v2976, %v3338
        %v3359 = vadd.f32 %v2977, %v3341
        %v3360 = vld [vmem:[%s2779] sm:$0xe]
        %v3361 = vld [vmem:[%s2779 + $0xc] sm:$0xe]
        %v3362 = vld [vmem:[%s2779 + $0x18] sm:$0xe]
        %v3363 = vld [vmem:[%s2779 + $0x24] sm:$0xe]
        %v3364 = vld [vmem:[%s2779 + $0x30] sm:$0xe]
        %v3365 = vld [vmem:[%s2779 + $0x3c] sm:$0xe]
        %v3366 = vld [vmem:[%s2779 + $0x48] sm:$0xe]
        %v3367 = vld [vmem:[%s2779 + $0x54] sm:$0xe]
        %v3392 = vrot.slane %v3360, 5
        %v3393 = vrot.slane %v3392, 4
        %v3394 = vrot.slane %v2979, 5
        %v3395 = vsel %vm1722, %v3393, %v3394
        %v3396 = vrot.slane %v3394, 4
        %v3397 = vrot.slane %v2980, 5
        %v3398 = vsel %vm1722, %v3396, %v3397
        %v3399 = vrot.slane %v3361, 5
        %v3400 = vrot.slane %v3399, 4
        %v3401 = vrot.slane %v2982, 5
        %v3402 = vsel %vm1722, %v3400, %v3401
        %v3403 = vrot.slane %v3401, 4
        %v3404 = vrot.slane %v2983, 5
        %v3405 = vsel %vm1722, %v3403, %v3404
        %v3406 = vrot.slane %v3362, 5
        %v3407 = vrot.slane %v3406, 4
        %v3408 = vrot.slane %v2985, 5
        %v3409 = vsel %vm1722, %v3407, %v3408
        %v3410 = vrot.slane %v3408, 4
        %v3411 = vrot.slane %v2986, 5
        %v3412 = vsel %vm1722, %v3410, %v3411
        %v3413 = vrot.slane %v3363, 5
        %v3414 = vrot.slane %v3413, 4
        %v3415 = vrot.slane %v2988, 5
        %v3416 = vsel %vm1722, %v3414, %v3415
        %v3417 = vrot.slane %v3415, 4
        %v3418 = vrot.slane %v2989, 5
        %v3419 = vsel %vm1722, %v3417, %v3418
        %v3420 = vrot.slane %v3364, 5
        %v3421 = vrot.slane %v3420, 4
        %v3422 = vrot.slane %v2991, 5
        %v3423 = vsel %vm1722, %v3421, %v3422
        %v3424 = vrot.slane %v3422, 4
        %v3425 = vrot.slane %v2992, 5
        %v3426 = vsel %vm1722, %v3424, %v3425
        %v3427 = vrot.slane %v3365, 5
        %v3428 = vrot.slane %v3427, 4
        %v3429 = vrot.slane %v2994, 5
        %v3430 = vsel %vm1722, %v3428, %v3429
        %v3431 = vrot.slane %v3429, 4
        %v3432 = vrot.slane %v2995, 5
        %v3433 = vsel %vm1722, %v3431, %v3432
        %v3434 = vrot.slane %v3366, 5
        %v3435 = vrot.slane %v3434, 4
        %v3436 = vrot.slane %v2997, 5
        %v3437 = vsel %vm1722, %v3435, %v3436
        %v3438 = vrot.slane %v3436, 4
        %v3439 = vrot.slane %v2998, 5
        %v3440 = vsel %vm1722, %v3438, %v3439
        %v3441 = vrot.slane %v3367, 5
        %v3442 = vrot.slane %v3441, 4
        %v3443 = vrot.slane %v3000, 5
        %v3444 = vsel %vm1722, %v3442, %v3443
        %v3445 = vrot.slane %v3443, 4
        %v3446 = vrot.slane %v3001, 5
        %v3447 = vsel %vm1722, %v3445, %v3446
        %s3448 = scalar_lea.vmem %s5, 16
        %v3449 = vld [vmem:[%s3448] sm:$0x3]
        %v3450 = vunpack.c.l.b16 %v3395
        %v3451 = vunpack.c.l.b16 %v3398
        %v3452 = vunpack.c.l.b16 %v3402
        %v3453 = vunpack.c.l.b16 %v3405
        %v3454 = vunpack.c.l.b16 %v3409
        %v3455 = vunpack.c.l.b16 %v3412
        %v3456 = vunpack.c.l.b16 %v3416
        %v3457 = vunpack.c.l.b16 %v3419
        %v3458 = vunpack.c.l.b16 %v3423
        %v3459 = vunpack.c.l.b16 %v3426
        %v3460 = vunpack.c.l.b16 %v3430
        %v3461 = vunpack.c.l.b16 %v3433
        %v3462 = vunpack.c.l.b16 %v3437
        %v3463 = vunpack.c.l.b16 %v3440
        %v3464 = vunpack.c.l.b16 %v3444
        %v3465 = vunpack.c.l.b16 %v3447
        %v3466 = vpack.c.b16 %v3451, %v3450
        %v3467 = vpack.c.b16 %v3453, %v3452
        %v3468 = vpack.c.b16 %v3455, %v3454
        %v3469 = vpack.c.b16 %v3457, %v3456
        %v3470 = vpack.c.b16 %v3459, %v3458
        %v3471 = vpack.c.b16 %v3461, %v3460
        %v3472 = vpack.c.b16 %v3463, %v3462
        %v3473 = vpack.c.b16 %v3465, %v3464
        %v3475 = vsel %vm1406, %v3466, 0
        %v3478 = vsel %vm1406, %v3467, 0
        %v3481 = vsel %vm1406, %v3468, 0
        %v3484 = vsel %vm1406, %v3469, 0
        %v3487 = vsel %vm1406, %v3470, 0
        %v3490 = vsel %vm1406, %v3471, 0
        %v3493 = vsel %vm1406, %v3472, 0
        %v3496 = vsel %vm1406, %v3473, 0
        %v3499 = vsel %vm1431, %v3449, 0
        %3501 = vmatprep.subr.bf16.mxu0 0
        %3502 = vmatpush1.bf16.msra.mxu0 %v3499
        %3503 = vmatprep.subr.bf16.mxu0 0
        %3504 = vmatpush1.bf16.msra.mxu0 0
        %3505 = vmatprep.subr.bf16.mxu0 0
        %3506 = vmatpush1.bf16.msra.mxu0 0
        %3507 = vmatprep.subr.bf16.mxu0 0
        %3508 = vmatpush1.bf16.msra.mxu0 0
        %3509 = vmatprep.subr.bf16.mxu0 0
        %3510 = vmatpush1.bf16.msra.mxu0 0
        %3511 = vmatprep.subr.bf16.mxu0 0
        %3512 = vmatpush1.bf16.msra.mxu0 0
        %3513 = vmatprep.subr.bf16.mxu0 0
        %3514 = vmatpush1.bf16.msra.mxu0 0
        %3515 = vmatprep.subr.bf16.mxu0 0
        %3516 = vmatpush1.bf16.msra.mxu0 0
        %3517 = vmatprep.subr.bf16.mxu0 0
        %3518 = vmatpush1.bf16.msra.mxu0 0
        %3519 = vmatprep.subr.bf16.mxu0 0
        %3520 = vmatpush1.bf16.msra.mxu0 0
        %3521 = vmatprep.subr.bf16.mxu0 0
        %3522 = vmatpush1.bf16.msra.mxu0 0
        %3523 = vmatprep.subr.bf16.mxu0 0
        %3524 = vmatpush1.bf16.msra.mxu0 0
        %3525 = vmatprep.subr.bf16.mxu0 0
        %3526 = vmatpush1.bf16.msra.mxu0 0
        %3527 = vmatprep.subr.bf16.mxu0 0
        %3528 = vmatpush1.bf16.msra.mxu0 0
        %3529 = vmatprep.subr.bf16.mxu0 0
        %3530 = vmatpush1.bf16.msra.mxu0 0
        %3531 = vmatprep.subr.bf16.mxu0 0
        %3532 = vmatpush1.bf16.msra.mxu0 0
        %3533 = vmatprep.mubr.bf16.mxu0 0
        %3534 = vmatmul.mubr.bf16.gmra.mrb[0].mxu0 %v3475
        %v3535 = vpop.f32.mrb[0].mxu0
        %v3536 = vadd.f32 0.0, %v3535
        %v3537 = vpop.f32.mrb[0].mxu0
        %v3538 = vpop.f32.mrb[0].mxu0
        %v3539 = vadd.f32 0.0, %v3538
        %v3540 = vpop.f32.mrb[0].mxu0
        %3541 = vmatprep.mubr.bf16.mxu0 0
        %3542 = vmatmul.mubr.bf16.gmra.mrb[0].mxu0 %v3478
        %v3543 = vpop.f32.mrb[0].mxu0
        %v3544 = vadd.f32 0.0, %v3543
        %v3545 = vpop.f32.mrb[0].mxu0
        %v3546 = vpop.f32.mrb[0].mxu0
        %v3547 = vadd.f32 0.0, %v3546
        %v3548 = vpop.f32.mrb[0].mxu0
        %3549 = vmatprep.mubr.bf16.mxu0 0
        %3550 = vmatmul.mubr.bf16.gmra.mrb[0].mxu0 %v3481
        %v3551 = vpop.f32.mrb[0].mxu0
        %v3552 = vadd.f32 0.0, %v3551
        %v3553 = vpop.f32.mrb[0].mxu0
        %v3554 = vpop.f32.mrb[0].mxu0
        %v3555 = vadd.f32 0.0, %v3554
        %v3556 = vpop.f32.mrb[0].mxu0
        %3557 = vmatprep.mubr.bf16.mxu0 0
        %3558 = vmatmul.mubr.bf16.gmra.mrb[0].mxu0 %v3484
        %v3559 = vpop.f32.mrb[0].mxu0
        %v3560 = vadd.f32 0.0, %v3559
        %v3561 = vpop.f32.mrb[0].mxu0
        %v3562 = vpop.f32.mrb[0].mxu0
        %v3563 = vadd.f32 0.0, %v3562
        %v3564 = vpop.f32.mrb[0].mxu0
        %3565 = vmatprep.mubr.bf16.mxu0 0
        %3566 = vmatmul.mubr.bf16.gmra.mrb[0].mxu0 %v3487
        %v3567 = vpop.f32.mrb[0].mxu0
        %v3568 = vadd.f32 0.0, %v3567
        %v3569 = vpop.f32.mrb[0].mxu0
        %v3570 = vpop.f32.mrb[0].mxu0
        %v3571 = vadd.f32 0.0, %v3570
        %v3572 = vpop.f32.mrb[0].mxu0
        %3573 = vmatprep.mubr.bf16.mxu0 0
        %3574 = vmatmul.mubr.bf16.gmra.mrb[0].mxu0 %v3490
        %v3575 = vpop.f32.mrb[0].mxu0
        %v3576 = vadd.f32 0.0, %v3575
        %v3577 = vpop.f32.mrb[0].mxu0
        %v3578 = vpop.f32.mrb[0].mxu0
        %v3579 = vadd.f32 0.0, %v3578
        %v3580 = vpop.f32.mrb[0].mxu0
        %3581 = vmatprep.mubr.bf16.mxu0 0
        %3582 = vmatmul.mubr.bf16.gmra.mrb[0].mxu0 %v3493
        %v3583 = vpop.f32.mrb[0].mxu0
        %v3584 = vadd.f32 0.0, %v3583
        %v3585 = vpop.f32.mrb[0].mxu0
        %v3586 = vpop.f32.mrb[0].mxu0
        %v3587 = vadd.f32 0.0, %v3586
        %v3588 = vpop.f32.mrb[0].mxu0
        %3589 = vmatprep.mubr.bf16.mxu0 0
        %3590 = vmatmul.mubr.bf16.gmra.mrb[0].mxu0 %v3496
        %v3591 = vpop.f32.mrb[0].mxu0
        %v3592 = vadd.f32 0.0, %v3591
        %v3593 = vpop.f32.mrb[0].mxu0
        %v3594 = vpop.f32.mrb[0].mxu0
        %v3595 = vadd.f32 0.0, %v3594
        %v3596 = vpop.f32.mrb[0].mxu0
        %3597 = vdwg.mxu0
        %v3598 = vadd.f32 %v3344, %v3536
        %v3599 = vadd.f32 %v3345, %v3539
        %v3600 = vadd.f32 %v3346, %v3544
        %v3601 = vadd.f32 %v3347, %v3547
        %v3602 = vadd.f32 %v3348, %v3552
        %v3603 = vadd.f32 %v3349, %v3555
        %v3604 = vadd.f32 %v3350, %v3560
        %v3605 = vadd.f32 %v3351, %v3563
        %v3606 = vadd.f32 %v3352, %v3568
        %v3607 = vadd.f32 %v3353, %v3571
        %v3608 = vadd.f32 %v3354, %v3576
        %v3609 = vadd.f32 %v3355, %v3579
        %v3610 = vadd.f32 %v3356, %v3584
        %v3611 = vadd.f32 %v3357, %v3587
        %v3612 = vadd.f32 %v3358, %v3592
        %v3613 = vadd.f32 %v3359, %v3595
        %v3614 = vld [vmem:[%s6] sm:$0x1]
        %v3616 = vlaneseq
        %v3617 = vshrl.u32 %v3616, 7
        %v3618 = vsub.s32 0, %v3617
        %v3619 = vrot.slane %v3614, %v3618
        %v3621 = vadd.f32 %v3598, %v3619
        %v3622 = vadd.f32 %v3599, %v3619
        %v3623 = vadd.f32 %v3600, %v3619
        %v3624 = vadd.f32 %v3601, %v3619
        %v3625 = vadd.f32 %v3602, %v3619
        %v3626 = vadd.f32 %v3603, %v3619
        %v3627 = vadd.f32 %v3604, %v3619
        %v3628 = vadd.f32 %v3605, %v3619
        %v3629 = vadd.f32 %v3606, %v3619
        %v3630 = vadd.f32 %v3607, %v3619
        %v3631 = vadd.f32 %v3608, %v3619
        %v3632 = vadd.f32 %v3609, %v3619
        %v3633 = vadd.f32 %v3610, %v3619
        %v3634 = vadd.f32 %v3611, %v3619
        %v3635 = vadd.f32 %v3612, %v3619
        %v3636 = vadd.f32 %v3613, %v3619
        %v3637 = vmax.f32 %v3621, 0.0
        %v3638 = vmax.f32 %v3622, 0.0
        %v3639 = vmax.f32 %v3623, 0.0
        %v3640 = vmax.f32 %v3624, 0.0
        %v3641 = vmax.f32 %v3625, 0.0
        %v3642 = vmax.f32 %v3626, 0.0
        %v3643 = vmax.f32 %v3627, 0.0
        %v3644 = vmax.f32 %v3628, 0.0
        %v3645 = vmax.f32 %v3629, 0.0
        %v3646 = vmax.f32 %v3630, 0.0
        %v3647 = vmax.f32 %v3631, 0.0
        %v3648 = vmax.f32 %v3632, 0.0
        %v3649 = vmax.f32 %v3633, 0.0
        %v3650 = vmax.f32 %v3634, 0.0
        %v3651 = vmax.f32 %v3635, 0.0
        %v3652 = vmax.f32 %v3636, 0.0
        %v3653 = vpack.c.bf16 %v3638, %v3637
        %v3654 = vpack.c.bf16 %v3640, %v3639
        %v3655 = vpack.c.bf16 %v3642, %v3641
        %v3656 = vpack.c.bf16 %v3644, %v3643
        %v3657 = vpack.c.bf16 %v3646, %v3645
        %v3658 = vpack.c.bf16 %v3648, %v3647
        %v3659 = vpack.c.bf16 %v3650, %v3649
        %v3660 = vpack.c.bf16 %v3652, %v3651
        %v3661 = vld [vmem:[%s7] sm:$0x3]
        %v3662 = vld [vmem:[%s8] sm:$0x1]
        %v3664 = vlaneseq
        %v3665 = vshrl.u32 %v3664, 7
        %v3666 = vsub.s32 0, %v3665
        %v3667 = vrot.slane %v3662, %v3666
        %v3670 = vsel %vm1406, %v3653, 0
        %v3673 = vsel %vm1406, %v3654, 0
        %v3676 = vsel %vm1406, %v3655, 0
        %v3679 = vsel %vm1406, %v3656, 0
        %v3682 = vsel %vm1406, %v3657, 0
        %v3685 = vsel %vm1406, %v3658, 0
        %v3688 = vsel %vm1406, %v3659, 0
        %v3691 = vsel %vm1406, %v3660, 0
        %v3694 = vsel %vm1431, %v3661, 0
        %3696 = vmatprep.subr.bf16.mxu0 0
        %3697 = vmatpush1.bf16.msra.mxu0 %v3694
        %3698 = vmatprep.subr.bf16.mxu0 0
        %3699 = vmatpush1.bf16.msra.mxu0 0
        %3700 = vmatprep.subr.bf16.mxu0 0
        %3701 = vmatpush1.bf16.msra.mxu0 0
        %3702 = vmatprep.subr.bf16.mxu0 0
        %3703 = vmatpush1.bf16.msra.mxu0 0
        %3704 = vmatprep.subr.bf16.mxu0 0
        %3705 = vmatpush1.bf16.msra.mxu0 0
        %3706 = vmatprep.subr.bf16.mxu0 0
        %3707 = vmatpush1.bf16.msra.mxu0 0
        %3708 = vmatprep.subr.bf16.mxu0 0
        %3709 = vmatpush1.bf16.msra.mxu0 0
        %3710 = vmatprep.subr.bf16.mxu0 0
        %3711 = vmatpush1.bf16.msra.mxu0 0
        %3712 = vmatprep.subr.bf16.mxu0 0
        %3713 = vmatpush1.bf16.msra.mxu0 0
        %3714 = vmatprep.subr.bf16.mxu0 0
        %3715 = vmatpush1.bf16.msra.mxu0 0
        %3716 = vmatprep.subr.bf16.mxu0 0
        %3717 = vmatpush1.bf16.msra.mxu0 0
        %3718 = vmatprep.subr.bf16.mxu0 0
        %3719 = vmatpush1.bf16.msra.mxu0 0
        %3720 = vmatprep.subr.bf16.mxu0 0
        %3721 = vmatpush1.bf16.msra.mxu0 0
        %3722 = vmatprep.subr.bf16.mxu0 0
        %3723 = vmatpush1.bf16.msra.mxu0 0
        %3724 = vmatprep.subr.bf16.mxu0 0
        %3725 = vmatpush1.bf16.msra.mxu0 0
        %3726 = vmatprep.subr.bf16.mxu0 0
        %3727 = vmatpush1.bf16.msra.mxu0 0
        %3728 = vmatprep.mubr.bf16.mxu0 0
        %3729 = vmatmul.mubr.bf16.gmra.mrb[0].mxu0 %v3670
        %v3730 = vpop.f32.mrb[0].mxu0
        %v3731 = vadd.f32 %v3667, %v3730
        %v3732 = vpop.f32.mrb[0].mxu0
        %v3733 = vpop.f32.mrb[0].mxu0
        %v3734 = vadd.f32 %v3667, %v3733
        %v3735 = vpop.f32.mrb[0].mxu0
        %3736 = vmatprep.mubr.bf16.mxu0 0
        %3737 = vmatmul.mubr.bf16.gmra.mrb[0].mxu0 %v3673
        %v3738 = vpop.f32.mrb[0].mxu0
        %v3739 = vadd.f32 %v3667, %v3738
        %v3740 = vpop.f32.mrb[0].mxu0
        %v3741 = vpop.f32.mrb[0].mxu0
        %v3742 = vadd.f32 %v3667, %v3741
        %v3743 = vpop.f32.mrb[0].mxu0
        %3744 = vmatprep.mubr.bf16.mxu0 0
        %3745 = vmatmul.mubr.bf16.gmra.mrb[0].mxu0 %v3676
        %v3746 = vpop.f32.mrb[0].mxu0
        %v3747 = vadd.f32 %v3667, %v3746
        %v3748 = vpop.f32.mrb[0].mxu0
        %v3749 = vpop.f32.mrb[0].mxu0
        %v3750 = vadd.f32 %v3667, %v3749
        %v3751 = vpop.f32.mrb[0].mxu0
        %3752 = vmatprep.mubr.bf16.mxu0 0
        %3753 = vmatmul.mubr.bf16.gmra.mrb[0].mxu0 %v3679
        %v3754 = vpop.f32.mrb[0].mxu0
        %v3755 = vadd.f32 %v3667, %v3754
        %v3756 = vpop.f32.mrb[0].mxu0
        %v3757 = vpop.f32.mrb[0].mxu0
        %v3758 = vadd.f32 %v3667, %v3757
        %v3759 = vpop.f32.mrb[0].mxu0
        %3760 = vmatprep.mubr.bf16.mxu0 0
        %3761 = vmatmul.mubr.bf16.gmra.mrb[0].mxu0 %v3682
        %v3762 = vpop.f32.mrb[0].mxu0
        %v3763 = vadd.f32 %v3667, %v3762
        %v3764 = vpop.f32.mrb[0].mxu0
        %v3765 = vpop.f32.mrb[0].mxu0
        %v3766 = vadd.f32 %v3667, %v3765
        %v3767 = vpop.f32.mrb[0].mxu0
        %3768 = vmatprep.mubr.bf16.mxu0 0
        %3769 = vmatmul.mubr.bf16.gmra.mrb[0].mxu0 %v3685
        %v3770 = vpop.f32.mrb[0].mxu0
        %v3771 = vadd.f32 %v3667, %v3770
        %v3772 = vpop.f32.mrb[0].mxu0
        %v3773 = vpop.f32.mrb[0].mxu0
        %v3774 = vadd.f32 %v3667, %v3773
        %v3775 = vpop.f32.mrb[0].mxu0
        %3776 = vmatprep.mubr.bf16.mxu0 0
        %3777 = vmatmul.mubr.bf16.gmra.mrb[0].mxu0 %v3688
        %v3778 = vpop.f32.mrb[0].mxu0
        %v3779 = vadd.f32 %v3667, %v3778
        %v3780 = vpop.f32.mrb[0].mxu0
        %v3781 = vpop.f32.mrb[0].mxu0
        %v3782 = vadd.f32 %v3667, %v3781
        %v3783 = vpop.f32.mrb[0].mxu0
        %3784 = vmatprep.mubr.bf16.mxu0 0
        %3785 = vmatmul.mubr.bf16.gmra.mrb[0].mxu0 %v3691
        %v3786 = vpop.f32.mrb[0].mxu0
        %v3787 = vadd.f32 %v3667, %v3786
        %v3788 = vpop.f32.mrb[0].mxu0
        %v3789 = vpop.f32.mrb[0].mxu0
        %v3790 = vadd.f32 %v3667, %v3789
        %v3791 = vpop.f32.mrb[0].mxu0
        %3792 = vdwg.mxu0
        %v3793 = vpack.c.bf16 %v3734, %v3731
        %v3794 = vpack.c.bf16 %v3742, %v3739
        %v3795 = vpack.c.bf16 %v3750, %v3747
        %v3796 = vpack.c.bf16 %v3758, %v3755
        %v3797 = vpack.c.bf16 %v3766, %v3763
        %v3798 = vpack.c.bf16 %v3774, %v3771
        %v3799 = vpack.c.bf16 %v3782, %v3779
        %v3800 = vpack.c.bf16 %v3790, %v3787
        %v3809 = vunpack.c.l.b16 %v3793
        %v3810 = vunpack.c.h.b16 %v3793
        %v3811 = vunpack.c.l.b16 %v3794
        %v3812 = vunpack.c.h.b16 %v3794
        %v3813 = vunpack.c.l.b16 %v3795
        %v3814 = vunpack.c.h.b16 %v3795
        %v3815 = vunpack.c.l.b16 %v3796
        %v3816 = vunpack.c.h.b16 %v3796
        %v3817 = vunpack.c.l.b16 %v3797
        %v3818 = vunpack.c.h.b16 %v3797
        %v3819 = vunpack.c.l.b16 %v3798
        %v3820 = vunpack.c.h.b16 %v3798
        %v3821 = vunpack.c.l.b16 %v3799
        %v3822 = vunpack.c.h.b16 %v3799
        %v3823 = vunpack.c.l.b16 %v3800
        %v3824 = vunpack.c.h.b16 %v3800
        %v3825 = vpack.c.b16 %v3809, %v3809
        %v3826 = vpack.c.b16 %v3810, %v3810
        %v3827 = vpack.c.b16 %v3811, %v3811
        %v3828 = vpack.c.b16 %v3812, %v3812
        %v3829 = vpack.c.b16 %v3813, %v3813
        %v3830 = vpack.c.b16 %v3814, %v3814
        %v3831 = vpack.c.b16 %v3815, %v3815
        %v3832 = vpack.c.b16 %v3816, %v3816
        %v3833 = vpack.c.b16 %v3817, %v3817
        %v3834 = vpack.c.b16 %v3818, %v3818
        %v3835 = vpack.c.b16 %v3819, %v3819
        %v3836 = vpack.c.b16 %v3820, %v3820
        %v3837 = vpack.c.b16 %v3821, %v3821
        %v3838 = vpack.c.b16 %v3822, %v3822
        %v3839 = vpack.c.b16 %v3823, %v3823
        %v3840 = vpack.c.b16 %v3824, %v3824
        %vm3857 = vcmask 125952
        %3858 = vst.msk [vmem:[%s509] sm:$0xf] %vm3857, %v3825
        %3859 = vst.msk [vmem:[%s509 + $0x4] sm:$0xf] %vm3857, %v3826
        %3860 = vst.msk [vmem:[%s509 + $0x8] sm:$0xf] %vm3857, %v3827
        %3861 = vst.msk [vmem:[%s509 + $0xc] sm:$0xf] %vm3857, %v3828
        %3862 = vst.msk [vmem:[%s509 + $0x10] sm:$0xf] %vm3857, %v3829
        %3863 = vst.msk [vmem:[%s509 + $0x14] sm:$0xf] %vm3857, %v3830
        %3864 = vst.msk [vmem:[%s509 + $0x18] sm:$0xf] %vm3857, %v3831
        %3865 = vst.msk [vmem:[%s509 + $0x1c] sm:$0xf] %vm3857, %v3832
        %3866 = vst.msk [vmem:[%s509 + $0x20] sm:$0xf] %vm3857, %v3833
        %3867 = vst.msk [vmem:[%s509 + $0x24] sm:$0xf] %vm3857, %v3834
        %3868 = vst.msk [vmem:[%s509 + $0x28] sm:$0xf] %vm3857, %v3835
        %3869 = vst.msk [vmem:[%s509 + $0x2c] sm:$0xf] %vm3857, %v3836
        %3870 = vst.msk [vmem:[%s509 + $0x30] sm:$0xf] %vm3857, %v3837
        %3871 = vst.msk [vmem:[%s509 + $0x34] sm:$0xf] %vm3857, %v3838
        %3872 = vst.msk [vmem:[%s509 + $0x38] sm:$0xf] %vm3857, %v3839
        %3873 = vst.msk [vmem:[%s509 + $0x3c] sm:$0xf] %vm3857, %v3840
        %p3874 = scmp.eq.s32.totalorder %s39, 0
        // Predicated region
        $region69: #{tpu_custom_call.1} parent=55 // pred_check
          %p3875 = pneg %p3874
        $region70: #{tpu_custom_call.1} parent=55 // pred_check_branch
          %3877 = sbr.rel (%p3875) target = $region72
        $region71: #{tpu_custom_call.1} parent=55 // pred_region
          %vm3878 = vcmask 122880
          %3879 = vst.msk [vmem:[%s515] sm:$0x1] %vm3878, 0.0
        $region72: #{tpu_custom_call.1} parent=55 // pred_fallthru
          _
        %v3880 = vld [vmem:[%s515] sm:$0x1]
        %v3881 = vsel %vm612, %v3731, 0.0
        %v3882 = vsel %vm612, %v3734, 0.0
        %v3883 = vadd.f32 %v3881, %v3882
        %v3884 = vsel %vm612, %v3739, 0.0
        %v3885 = vadd.f32 %v3883, %v3884
        %v3886 = vsel %vm612, %v3742, 0.0
        %v3887 = vadd.f32 %v3885, %v3886
        %v3888 = vsel %vm612, %v3747, 0.0
        %v3889 = vadd.f32 %v3887, %v3888
        %v3890 = vsel %vm612, %v3750, 0.0
        %v3891 = vadd.f32 %v3889, %v3890
        %v3892 = vsel %vm612, %v3755, 0.0
        %v3893 = vadd.f32 %v3891, %v3892
        %v3894 = vsel %vm612, %v3758, 0.0
        %v3895 = vadd.f32 %v3893, %v3894
        %v3896 = vsel %vm612, %v3763, 0.0
        %v3897 = vadd.f32 %v3895, %v3896
        %v3898 = vsel %vm612, %v3766, 0.0
        %v3899 = vadd.f32 %v3897, %v3898
        %v3900 = vsel %vm612, %v3771, 0.0
        %v3901 = vadd.f32 %v3899, %v3900
        %v3902 = vsel %vm612, %v3774, 0.0
        %v3903 = vadd.f32 %v3901, %v3902
        %v3904 = vsel %vm612, %v3779, 0.0
        %v3905 = vadd.f32 %v3903, %v3904
        %v3906 = vsel %vm612, %v3782, 0.0
        %v3907 = vadd.f32 %v3905, %v3906
        %v3908 = vsel %vm612, %v3787, 0.0
        %v3909 = vadd.f32 %v3907, %v3908
        %v3910 = vsel %vm612, %v3790, 0.0
        %v3911 = vadd.f32 %v3909, %v3910
        %v3912 = vrot.slane %v3911, 4
        %v3913 = vadd.f32 %v3911, %v3912
        %v3914 = vrot.slane %v3913, 2
        %v3915 = vadd.f32 %v3913, %v3914
        %v3916 = vrot.slane %v3915, 1
        %v3917 = vadd.f32 %v3915, %v3916
        %v3918 = vadd.f32 %v3880, %v3917
        %vm3919 = vcmask 122880
        %3920 = vst.msk [vmem:[%s515] sm:$0x1] %vm3919, %v3918
        %s3921 = sand.u32 %s282, 1
        %s3922 = scalar_lea.sflag [#allocation5], %s3921
        %s3923 = sand.u32 %s282, 1
        %s3924 = smul.addr %s3923, 64
        %s3925 = scalar_lea.vmem [#allocation9], %s3924
        %s3926 = sand.u32 %s308, 1
        %s3927 = scalar_lea.sflag [#allocation11], %s3926
        %s3928 = sand.u32 %s308, 1
        %s3929 = scalar_lea.vmem [#allocation10], %s3928
        // Predicated region
        $region73: #{tpu_custom_call.1} parent=55 // pred_check
          %p3930 = pneg %p292
        $region74: #{tpu_custom_call.1} parent=55 // pred_check_branch
          %3932 = sbr.rel (%p3930) target = $region76
        $region75: #{tpu_custom_call.1} parent=55 // pred_region
          %s3933 = smul.u32 8, %s39
          %s3935 = ssub.s32 1024, 1024
          %3936 = vsyncadd %s3922, %s3935
          %s3937 = smul.addr %s3933, 2
          %s3938 = smul.addr %s38, 32
          %s3939 = sadd.s32 %s3937, %s3938
          %s3940 = smul.addr %s3939, 64
          %s3941 = scalar_lea.hbm %s9, %s3940
          %s3942 = sshll.u32 %s3925, 4
          %s3943 = int_to_ptr.vmem [resolvable:$true] %s3942
          %3948 = dma.vmem_to_hbm [thread:$0]  %s3943, 1024, %s3941, %s3922, 64, 64, 4
        $region76: #{tpu_custom_call.1} parent=55 // pred_fallthru
          _
        // Predicated region
        $region77: #{tpu_custom_call.1} parent=55 // pred_check
          %p3949 = pneg %p318
        $region78: #{tpu_custom_call.1} parent=55 // pred_check_branch
          %3951 = sbr.rel (%p3949) target = $region80
        $region79: #{tpu_custom_call.1} parent=55 // pred_region
          %s3953 = ssub.s32 16, 16
          %3954 = vsyncadd %s3927, %s3953
          %s3955 = smul.addr %s38, 16
          %s3956 = scalar_lea.hbm %s10, %s3955
          %s3958 = sshll.u32 %s3929, 4
          %s3959 = int_to_ptr.vmem [resolvable:$true] %s3958
          %3961 = dma.vmem_to_hbm [thread:$0]  %s3959, 16, %s3956, %s3927
        $region80: #{tpu_custom_call.1} parent=55 // pred_fallthru
          _
      $region56: #{tpu_custom_call.1} parent=5 // pred_fallthru
        _
      %p3962 = scmp.le.s32.totalorder 2, %s29
      // Predicated region
      $region81: #{tpu_custom_call.1} parent=5 // pred_check
        %p3963 = pneg %p3962
      $region82: #{tpu_custom_call.1} parent=5 // pred_check_branch
        %3965 = sbr.rel (%p3963) target = $region84
      $region83: #{tpu_custom_call.1} parent=5 // pred_region
        %s3966 = ssub.s32 %s29, 2
        // Predicated region
        $region85: #{tpu_custom_call.1} parent=83 // pred_check
          %p3967 = pneg %p298
        $region86: #{tpu_custom_call.1} parent=83 // pred_check_branch
          %3969 = sbr.rel (%p3967) target = $region88
        $region87: #{tpu_custom_call.1} parent=83 // pred_region
          %s3970 = sand.u32 %s283, 1
          %s3971 = scalar_lea.sflag [#allocation5], %s3970
          %s3972 = sand.u32 %s283, 1
          %s3973 = smul.addr %s3972, 64
          %s3974 = scalar_lea.vmem [#allocation9], %s3973
          %3975 = dma.done %s3971, 1024
        $region88: #{tpu_custom_call.1} parent=83 // pred_fallthru
          _
        // Predicated region
        $region89: #{tpu_custom_call.1} parent=83 // pred_check
          %p3976 = pneg %p324
        $region90: #{tpu_custom_call.1} parent=83 // pred_check_branch
          %3978 = sbr.rel (%p3976) target = $region92
        $region91: #{tpu_custom_call.1} parent=83 // pred_region
          %s3979 = sand.u32 %s309, 1
          %s3980 = scalar_lea.sflag [#allocation11], %s3979
          %s3981 = sand.u32 %s309, 1
          %s3982 = scalar_lea.vmem [#allocation10], %s3981
          %3983 = dma.done %s3980, 16
        $region92: #{tpu_custom_call.1} parent=83 // pred_fallthru
          _
      $region84: #{tpu_custom_call.1} parent=5 // pred_fallthru
        _
    $region6: #{tpu_custom_call.1} parent=1 // loop_footer
      %s33 = sadd.s32 1, %s29
    $region7: #{tpu_custom_call.1} parent=1 // loop_footer_branch
      %28 = sbr.rel target = $region3
    $region8: #{tpu_custom_call.1} parent=1 // loop_exit
      _
    %3984 = vsyncpa [#allocation4], 1
    %s3985 = scalar_lea.sflag [#allocation4], 1
    %3986 = vsyncpa %s3985, 1
    %3987 = vsyncpa [#allocation7], 1
    %s3988 = scalar_lea.sflag [#allocation7], 1
    %3989 = vsyncpa %s3988, 1
    %3990 = vsyncpa [#allocation5], 1
    %s3991 = scalar_lea.sflag [#allocation5], 1
    %3992 = vsyncpa %s3991, 1
    %3993 = vsyncpa [#allocation11], 1
    %s3994 = scalar_lea.sflag [#allocation11], 1
    %3995 = vsyncpa %s3994, 1

</llo_original>
